<compile_context>
chip_gen: v6e
topology: v6e:2x2x1
jax: 0.10.0
libtpu: 0.0.40
codegen_flags: <defaults>
</compile_context>

<pallas_src>
import functools

import numpy as np
import jax
import jax.numpy as jnp
from jax.experimental import pallas as pl
from jax.experimental.pallas import tpu as pltpu

LANE = 128
NEG_SLOPE = 0.01   # nn.LeakyReLU(inplace=True) default
BN_EPS = 1e-5


def _round_up(x, m):
    return (x + m - 1) // m * m


# ----------------------------------------------------------------------------------
# Host-side constant builders (static shapes; tiny; vectorized numpy)
# ----------------------------------------------------------------------------------
def _im2col_first(x_nhwc, kh, kw, stride, pad):
    """im2col for the first conv only (input already comes from HBM)."""
    n, h, w, c = x_nhwc.shape
    xp = jnp.pad(x_nhwc, ((0, 0), (pad, pad), (pad, pad), (0, 0)))
    oh = (h + 2 * pad - kh) // stride + 1
    ow = (w + 2 * pad - kw) // stride + 1
    pieces = []
    for i in range(kh):
        for j in range(kw):
            pieces.append(xp[:, i:i + stride * oh:stride, j:j + stride * ow:stride, :])
    p = jnp.stack(pieces, axis=3)                       # (N, OH, OW, KH*KW, Cin)
    return p.reshape(n * oh * ow, kh * kw * c), oh, ow


def _build_gather_matrix(n, h, w, kh, kw, stride, pad):
    """0/1 matrix T: (KH*KW*M_out, M_in). Row ij*M_out+m2 selects the input row
    feeding kernel offset (i,j) of output position m2 (all-zero row == padding)."""
    oh = (h + 2 * pad - kh) // stride + 1
    ow = (w + 2 * pad - kw) // stride + 1
    m_in, m_out = n * h * w, n * oh * ow
    t = np.zeros((kh * kw * m_out, m_in), np.float32)
    b = np.arange(n)[:, None, None]
    oy = np.arange(oh)[None, :, None]
    ox = np.arange(ow)[None, None, :]
    out_rows = (b * oh + oy) * ow + ox                           # (n, oh, ow)
    for i in range(kh):
        for j in range(kw):
            iy = stride * oy - pad + i                           # (1, oh, 1)
            ix = stride * ox - pad + j                           # (1, 1, ow)
            valid = np.broadcast_to(
                (iy >= 0) & (iy < h) & (ix >= 0) & (ix < w), (n, oh, ow))
            in_rows = np.broadcast_to((b * h + iy) * w + ix, (n, oh, ow))
            rr = ((i * kw + j) * m_out + out_rows)[valid]
            cc = in_rows[valid]
            t[rr, cc] = 1.0
    return t, oh, ow


def _first_layer_weight(w, kpad, cpad):
    cout, cin, kh, kw = w.shape
    w2 = np.transpose(np.asarray(w, np.float32), (2, 3, 1, 0)).reshape(kh * kw * cin, cout)
    ws = np.zeros((kpad, cpad), np.float32)
    ws[: kh * kw * cin, :cout] = w2
    return ws


def _stacked_weight(w, cpad_in, cpad_out):
    cout, cin, kh, kw = w.shape
    wa = np.asarray(w, np.float32)
    ws = np.zeros((kh * kw * cpad_in, cpad_out), np.float32)
    for i in range(kh):
        for j in range(kw):
            ij = i * kw + j
            ws[ij * cpad_in: ij * cpad_in + cin, :cout] = wa[:, :, i, j].T
    return ws


def _bn_params(gamma, beta, cpad):
    p = np.zeros((8, cpad), np.float32)
    g = np.asarray(gamma, np.float32)
    b = np.asarray(beta, np.float32)
    p[0, : g.shape[0]] = g
    p[1, : b.shape[0]] = b
    return p


# ----------------------------------------------------------------------------------
# The single fused kernel
# ----------------------------------------------------------------------------------
def _fused_netd_kernel(*refs, meta, n_layers):
    idx = 0
    x = None                                    # current activation (M, Cpad) f32
    for li in range(n_layers):
        a_ref, w_ref, bn_ref = refs[idx], refs[idx + 1], refs[idx + 2]
        idx += 3
        if li == 0:
            # first layer: plain lane-dense matmul on pre-extracted (bf16) patches
            z = jnp.dot(a_ref[...], w_ref[...], preferred_element_type=jnp.float32)
        else:
            m = meta[li]
            kk, m_out = m["kk"], m["m_out"]
            cpad_in, cpad_out = m["cpad_in"], m["cpad_out"]
            xb = x.astype(jnp.bfloat16)
            # single big in-VMEM patch gather (MXU, exact 0/1 selection) ...
            y_all = jnp.dot(a_ref[...], xb,
                            preferred_element_type=jnp.float32)      # (kk*m_out, cpad_in)
            yb = y_all.astype(jnp.bfloat16)
            # ... then per-kernel-offset contraction, f32 accumulation
            z = jnp.zeros((m_out, cpad_out), jnp.float32)
            for ij in range(kk):
                z = z + jnp.dot(yb[ij * m_out:(ij + 1) * m_out, :],
                                w_ref[ij * cpad_in:(ij + 1) * cpad_in, :],
                                preferred_element_type=jnp.float32)   # (m_out, cpad_out)

        # BatchNorm2d (training-mode batch stats over all N*H*W rows; exact: whole M
        # is in this single block) + LeakyReLU.  Conv bias omitted (cancels in BN).
        # One-pass stats + fused scale/shift to minimize VALU work on the big tile.
        gamma = bn_ref[0:1, :]
        beta = bn_ref[1:2, :]
        mean = jnp.mean(z, axis=0, keepdims=True)
        var = jnp.maximum(jnp.mean(z * z, axis=0, keepdims=True) - mean * mean, 0.0)
        scale = gamma * jax.lax.rsqrt(var + BN_EPS)
        shift = beta - mean * scale
        zn = z * scale + shift
        x = jnp.maximum(zn, NEG_SLOPE * zn)     # LeakyReLU (slope < 1)

    # classifier: full per-sample reduction (multiply + reduce), bias added at the end
    wc_ref, grp_ref, bc_ref = refs[idx], refs[idx + 1], refs[idx + 2]
    feat_ref, cls_ref = refs[idx + 3], refs[idx + 4]

    feat_ref[...] = x                                           # lane-dense feature slab
    prod = x * wc_ref[...]                                      # (M_last, Cpad)
    per_sample = jnp.dot(grp_ref[...], prod,
                         preferred_element_type=jnp.float32)    # (Npad, Cpad) row-group sums
    s = jnp.sum(per_sample, axis=1, keepdims=True)              # (Npad, 1)
    cls_ref[...] = s + bc_ref[...]                              # broadcast to (Npad, 128)


# ----------------------------------------------------------------------------------
# Parameters (mirrors the PyTorch Discriminator structure)
# ----------------------------------------------------------------------------------
def make_netd_params(key, input_size, channel, ndf, n_extra_layers=0):
    assert input_size % 16 == 0, "input_size has to be a multiple of 16"
    keys = jax.random.split(key, 64)
    ki = 0

    def conv_param(cout, cin, kh, kw):
        nonlocal ki
        w = 0.05 * jax.random.normal(keys[ki], (cout, cin, kh, kw), jnp.float32)
        b = 0.01 * jax.random.normal(keys[ki + 1], (cout,), jnp.float32)
        ki += 2
        return w, b

    feature = []
    # first conv: channel -> ndf, k4 s2 p1, BN, LeakyReLU
    w, b = conv_param(ndf, channel, 4, 4)
    feature.append(dict(w=w, b=b, gamma=jnp.ones((ndf,)), beta=jnp.zeros((ndf,)),
                        k=4, stride=2, pad=1))
    csize, cndf = input_size // 2, ndf
    # extra layers: cndf -> cndf, k3 s1 p1
    for _ in range(n_extra_layers):
        w, b = conv_param(cndf, cndf, 3, 3)
        feature.append(dict(w=w, b=b, gamma=jnp.ones((cndf,)), beta=jnp.zeros((cndf,)),
                            k=3, stride=1, pad=1))
    # pyramid layers
    while csize > 4:
        in_f, out_f = cndf, cndf * 2
        w, b = conv_param(out_f, in_f, 4, 4)
        feature.append(dict(w=w, b=b, gamma=jnp.ones((out_f,)), beta=jnp.zeros((out_f,)),
                            k=4, stride=2, pad=1))
        cndf, csize = cndf * 2, csize // 2
    # final classifier conv: cndf -> 1, k4 s1 p0 (bias used; no BN / activation)
    w, b = conv_param(1, cndf, 4, 4)
    classifier = dict(w=w, b=b, k=4, stride=1, pad=0)
    return feature, classifier


# ----------------------------------------------------------------------------------
# Forward: builds all operands and launches ONE fused pallas_call
# ----------------------------------------------------------------------------------
def netd_forward(x_nchw, feature_params, classifier_params):
    n, c_in, h, w = (int(d) for d in x_nchw.shape)
    x_nhwc = jnp.transpose(x_nchw, (0, 2, 3, 1))

    operands, meta = [], []

    # ---- layer 0: wrapper im2col (bf16, K padded to a multiple of 128) ----
    L0 = feature_params[0]
    kh = kw = L0["k"]
    cout0 = int(L0["w"].shape[0])
    patches, oh, ow = _im2col_first(x_nhwc, kh, kw, L0["stride"], L0["pad"])
    k1 = kh * kw * c_in
    kpad = _round_up(max(k1, LANE), LANE)
    cpad = _round_up(max(cout0, LANE), LANE)
    patches = jnp.pad(patches, ((0, 0), (0, kpad - k1))).astype(jnp.bfloat16)
    operands += [patches,
                 jnp.asarray(_first_layer_weight(L0["w"], kpad, cpad), jnp.bfloat16),
                 jnp.asarray(_bn_params(L0["gamma"], L0["beta"], cpad), jnp.float32)]
    meta.append(dict(kind="matmul"))
    cur_h, cur_w, cur_c, cur_cpad = oh, ow, cout0, cpad

    # ---- remaining feature layers: in-kernel gather-matrix convs ----
    for L in feature_params[1:]:
        kh = kw = L["k"]
        cout = int(L["w"].shape[0])
        t_np, oh, ow = _build_gather_matrix(n, cur_h, cur_w, kh, kw, L["stride"], L["pad"])
        cpad_out = _round_up(max(cout, LANE), LANE)
        operands += [jnp.asarray(t_np, jnp.bfloat16),
                     jnp.asarray(_stacked_weight(L["w"], cur_cpad, cpad_out), jnp.bfloat16),
                     jnp.asarray(_bn_params(L["gamma"], L["beta"], cpad_out), jnp.float32)]
        meta.append(dict(kk=kh * kw, m_out=n * oh * ow,
                         cpad_in=cur_cpad, cpad_out=cpad_out))
        cur_h, cur_w, cur_c, cur_cpad = oh, ow, cout, cpad_out

    # ---- classifier constants (full per-sample reduction) ----
    C = classifier_params
    wc = np.asarray(C["w"], np.float32)                     # (1, cndf, KH, KW)
    assert C["stride"] == 1 and C["pad"] == 0
    assert wc.shape[2] == cur_h and wc.shape[3] == cur_w
    m_last = n * cur_h * cur_w
    npad = _round_up(max(n, 8), 8)
    wlay = np.transpose(wc[0], (1, 2, 0)).reshape(cur_h * cur_w, cur_c)   # (oy*ox, c)
    wc_arr = np.zeros((m_last, cur_cpad), np.float32)
    wc_arr[:, :cur_c] = np.tile(wlay, (n, 1))
    grp = np.zeros((npad, m_last), np.float32)
    grp[np.repeat(np.arange(n), cur_h * cur_w), np.arange(m_last)] = 1.0
    bc = np.full((npad, LANE), float(np.asarray(C["b"])[0]), np.float32)
    operands += [jnp.asarray(wc_arr), jnp.asarray(grp), jnp.asarray(bc)]

    # ---- single fused pallas_call ----
    kernel = functools.partial(_fused_netd_kernel, meta=tuple(meta),
                               n_layers=len(feature_params))
    in_specs = [pl.BlockSpec(op.shape, lambda i: (0, 0)) for op in operands]
    out_shapes = (jax.ShapeDtypeStruct((m_last, cur_cpad), jnp.float32),   # feature slab
                  jax.ShapeDtypeStruct((npad, LANE), jnp.float32))         # classifier slab
    out_specs = (pl.BlockSpec((m_last, cur_cpad), lambda i: (0, 0)),
                 pl.BlockSpec((npad, LANE), lambda i: (0, 0)))

    feat2d, cls2d = pl.pallas_call(
        kernel,
        out_shape=out_shapes,
        grid=(1,),
        in_specs=in_specs,
        out_specs=out_specs,
        compiler_params=pltpu.CompilerParams(dimension_semantics=("arbitrary",)),
    )(*operands)

    # layout plumbing back to PyTorch conventions
    feature = feat2d.reshape(n, cur_h, cur_w, cur_cpad)[..., :cur_c]
    feature = jnp.transpose(feature, (0, 3, 1, 2))          # NCHW, like PyTorch
    classifier = cls2d[:n, 0]                               # .view(-1) -> (N,)
    return classifier, feature


if __name__ == "__main__":
    # CONFIG: input_size=16, channel=4, ndf=8, extralayer=0 (z_dim unused by NetD)
    INPUT_SIZE, CHANNEL, NDF, EXTRA = 16, 4, 8, 0
    BATCH = 2

    key = jax.random.PRNGKey(0)
    k_param, k_x = jax.random.split(key)
    feat_params, cls_params = make_netd_params(k_param, INPUT_SIZE, CHANNEL, NDF, EXTRA)

    x = jax.random.normal(k_x, (BATCH, CHANNEL, INPUT_SIZE, INPUT_SIZE), jnp.float32)

    classifier, feature = netd_forward(x, feat_params, cls_params)
    jax.block_until_ready((classifier, feature))

    assert classifier.shape == (BATCH,), classifier.shape
    assert feature.shape == (BATCH, NDF * 2, 4, 4), feature.shape
    assert bool(jnp.all(jnp.isfinite(feature))) and bool(jnp.all(jnp.isfinite(classifier)))
    print("KERNEL_OK")
</pallas_src>

<mosaic_0001>
module attributes {stable_mosaic.version = 11 : i64} {
  func.func @_fused_netd_kernel(%arg0: i32, %arg1: memref<128x128xbf16, #tpu.memory_space<vmem>>, %arg2: memref<128x128xbf16, #tpu.memory_space<vmem>>, %arg3: memref<8x128xf32, #tpu.memory_space<vmem>>, %arg4: memref<512x128xbf16, #tpu.memory_space<vmem>>, %arg5: memref<2048x128xbf16, #tpu.memory_space<vmem>>, %arg6: memref<8x128xf32, #tpu.memory_space<vmem>>, %arg7: memref<32x128xf32, #tpu.memory_space<vmem>>, %arg8: memref<8x32xf32, #tpu.memory_space<vmem>>, %arg9: memref<8x128xf32, #tpu.memory_space<vmem>>, %arg10: memref<32x128xf32, #tpu.memory_space<vmem>>, %arg11: memref<8x128xf32, #tpu.memory_space<vmem>>) attributes {dimension_semantics = [#tpu.dimension_semantics<arbitrary>], iteration_bounds = array<i64: 1>, scalar_prefetch = 0 : i64, scratch_operands = 0 : i64, tpu.core_type = #tpu.core_type<tc>, window_params = [{pipeline_mode = #tpu.pipeline_mode<synchronous>, transform_indices = @transform_0, window_bounds = array<i64: 128, 128>}, {pipeline_mode = #tpu.pipeline_mode<synchronous>, transform_indices = @transform_1, window_bounds = array<i64: 128, 128>}, {pipeline_mode = #tpu.pipeline_mode<synchronous>, transform_indices = @transform_2, window_bounds = array<i64: 8, 128>}, {pipeline_mode = #tpu.pipeline_mode<synchronous>, transform_indices = @transform_3, window_bounds = array<i64: 512, 128>}, {pipeline_mode = #tpu.pipeline_mode<synchronous>, transform_indices = @transform_4, window_bounds = array<i64: 2048, 128>}, {pipeline_mode = #tpu.pipeline_mode<synchronous>, transform_indices = @transform_5, window_bounds = array<i64: 8, 128>}, {pipeline_mode = #tpu.pipeline_mode<synchronous>, transform_indices = @transform_6, window_bounds = array<i64: 32, 128>}, {pipeline_mode = #tpu.pipeline_mode<synchronous>, transform_indices = @transform_7, window_bounds = array<i64: 8, 32>}, {pipeline_mode = #tpu.pipeline_mode<synchronous>, transform_indices = @transform_8, window_bounds = array<i64: 8, 128>}, {pipeline_mode = #tpu.pipeline_mode<synchronous>, transform_indices = @transform_9, window_bounds = array<i64: 32, 128>}, {pipeline_mode = #tpu.pipeline_mode<synchronous>, transform_indices = @transform_10, window_bounds = array<i64: 8, 128>}]} {
    %c0 = arith.constant 0 : index
    %c0_0 = arith.constant 0 : index
    %0 = vector.load %arg1[%c0, %c0_0] : memref<128x128xbf16, #tpu.memory_space<vmem>>, vector<128x128xbf16>
    %c0_1 = arith.constant 0 : index
    %c0_2 = arith.constant 0 : index
    %1 = vector.load %arg2[%c0_1, %c0_2] : memref<128x128xbf16, #tpu.memory_space<vmem>>, vector<128x128xbf16>
    %cst = arith.constant dense<0.000000e+00> : vector<128x128xf32>
    %2 = tpu.matmul %0, %1, %cst {dimension_numbers = #tpu.dot_dimension_numbers<[1], [0], [0], [1], [0, 0, 1, 1], [], []>} : vector<128x128xbf16>, vector<128x128xbf16>, vector<128x128xf32> -> vector<128x128xf32>
    %c0_3 = arith.constant 0 : index
    %c0_4 = arith.constant 0 : index
    %3 = vector.load %arg3[%c0_3, %c0_4] : memref<8x128xf32, #tpu.memory_space<vmem>>, vector<1x128xf32>
    %c1 = arith.constant 1 : index
    %c0_5 = arith.constant 0 : index
    %4 = vector.load %arg3[%c1, %c0_5] : memref<8x128xf32, #tpu.memory_space<vmem>>, vector<1x128xf32>
    %cst_6 = arith.constant dense<0.000000e+00> : vector<128xf32>
    %5 = vector.multi_reduction <add>, %2, %cst_6 [0] : vector<128x128xf32> to vector<128xf32>
    %6 = vector.shape_cast %5 : vector<128xf32> to vector<1x128xf32>
    %cst_7 = arith.constant 1.280000e+02 : f32
    %7 = vector.broadcast %cst_7 : f32 to vector<1x128xf32>
    %8 = arith.divf %6, %7 : vector<1x128xf32>
    %9 = arith.mulf %2, %2 : vector<128x128xf32>
    %cst_8 = arith.constant dense<0.000000e+00> : vector<128xf32>
    %10 = vector.multi_reduction <add>, %9, %cst_8 [0] : vector<128x128xf32> to vector<128xf32>
    %11 = vector.shape_cast %10 : vector<128xf32> to vector<1x128xf32>
    %cst_9 = arith.constant 1.280000e+02 : f32
    %12 = vector.broadcast %cst_9 : f32 to vector<1x128xf32>
    %13 = arith.divf %11, %12 : vector<1x128xf32>
    %14 = arith.mulf %8, %8 : vector<1x128xf32>
    %15 = arith.subf %13, %14 : vector<1x128xf32>
    %cst_10 = arith.constant 0.000000e+00 : f32
    %16 = vector.broadcast %cst_10 : f32 to vector<1x128xf32>
    %17 = arith.maximumf %15, %16 : vector<1x128xf32>
    %cst_11 = arith.constant 9.99999974E-6 : f32
    %18 = vector.broadcast %cst_11 : f32 to vector<1x128xf32>
    %19 = arith.addf %17, %18 : vector<1x128xf32>
    %20 = math.rsqrt %19 : vector<1x128xf32>
    %21 = arith.mulf %3, %20 : vector<1x128xf32>
    %22 = arith.mulf %8, %21 : vector<1x128xf32>
    %23 = arith.subf %4, %22 : vector<1x128xf32>
    %24 = vector.broadcast %21 : vector<1x128xf32> to vector<128x128xf32>
    %25 = arith.mulf %2, %24 : vector<128x128xf32>
    %26 = vector.broadcast %23 : vector<1x128xf32> to vector<128x128xf32>
    %27 = arith.addf %25, %26 : vector<128x128xf32>
    %cst_12 = arith.constant 0.00999999977 : f32
    %28 = vector.broadcast %cst_12 : f32 to vector<128x128xf32>
    %29 = arith.mulf %28, %27 : vector<128x128xf32>
    %30 = arith.maximumf %27, %29 : vector<128x128xf32>
    %31 = arith.truncf %30 : vector<128x128xf32> to vector<128x128xbf16>
    %c0_13 = arith.constant 0 : index
    %c0_14 = arith.constant 0 : index
    %32 = vector.load %arg4[%c0_13, %c0_14] : memref<512x128xbf16, #tpu.memory_space<vmem>>, vector<512x128xbf16>
    %cst_15 = arith.constant dense<0.000000e+00> : vector<512x128xf32>
    %33 = tpu.matmul %32, %31, %cst_15 {dimension_numbers = #tpu.dot_dimension_numbers<[1], [0], [0], [1], [0, 0, 1, 1], [], []>} : vector<512x128xbf16>, vector<128x128xbf16>, vector<512x128xf32> -> vector<512x128xf32>
    %34 = arith.truncf %33 : vector<512x128xf32> to vector<512x128xbf16>
    %cst_16 = arith.constant 0.000000e+00 : f32
    %35 = vector.broadcast %cst_16 : f32 to vector<32x128xf32>
    %36 = vector.extract_strided_slice %34 {offsets = [0, 0], sizes = [32, 128], strides = [1, 1]} : vector<512x128xbf16> to vector<32x128xbf16>
    %c0_17 = arith.constant 0 : index
    %c0_18 = arith.constant 0 : index
    %37 = vector.load %arg5[%c0_17, %c0_18] : memref<2048x128xbf16, #tpu.memory_space<vmem>>, vector<128x128xbf16>
    %cst_19 = arith.constant dense<0.000000e+00> : vector<32x128xf32>
    %38 = tpu.matmul %36, %37, %cst_19 {dimension_numbers = #tpu.dot_dimension_numbers<[1], [0], [0], [1], [0, 0, 1, 1], [], []>} : vector<32x128xbf16>, vector<128x128xbf16>, vector<32x128xf32> -> vector<32x128xf32>
    %39 = arith.addf %35, %38 : vector<32x128xf32>
    %40 = vector.extract_strided_slice %34 {offsets = [32, 0], sizes = [32, 128], strides = [1, 1]} : vector<512x128xbf16> to vector<32x128xbf16>
    %c128 = arith.constant 128 : index
    %c0_20 = arith.constant 0 : index
    %41 = vector.load %arg5[%c128, %c0_20] : memref<2048x128xbf16, #tpu.memory_space<vmem>>, vector<128x128xbf16>
    %cst_21 = arith.constant dense<0.000000e+00> : vector<32x128xf32>
    %42 = tpu.matmul %40, %41, %cst_21 {dimension_numbers = #tpu.dot_dimension_numbers<[1], [0], [0], [1], [0, 0, 1, 1], [], []>} : vector<32x128xbf16>, vector<128x128xbf16>, vector<32x128xf32> -> vector<32x128xf32>
    %43 = arith.addf %39, %42 : vector<32x128xf32>
    %44 = vector.extract_strided_slice %34 {offsets = [64, 0], sizes = [32, 128], strides = [1, 1]} : vector<512x128xbf16> to vector<32x128xbf16>
    %c256 = arith.constant 256 : index
    %c0_22 = arith.constant 0 : index
    %45 = vector.load %arg5[%c256, %c0_22] : memref<2048x128xbf16, #tpu.memory_space<vmem>>, vector<128x128xbf16>
    %cst_23 = arith.constant dense<0.000000e+00> : vector<32x128xf32>
    %46 = tpu.matmul %44, %45, %cst_23 {dimension_numbers = #tpu.dot_dimension_numbers<[1], [0], [0], [1], [0, 0, 1, 1], [], []>} : vector<32x128xbf16>, vector<128x128xbf16>, vector<32x128xf32> -> vector<32x128xf32>
    %47 = arith.addf %43, %46 : vector<32x128xf32>
    %48 = vector.extract_strided_slice %34 {offsets = [96, 0], sizes = [32, 128], strides = [1, 1]} : vector<512x128xbf16> to vector<32x128xbf16>
    %c384 = arith.constant 384 : index
    %c0_24 = arith.constant 0 : index
    %49 = vector.load %arg5[%c384, %c0_24] : memref<2048x128xbf16, #tpu.memory_space<vmem>>, vector<128x128xbf16>
    %cst_25 = arith.constant dense<0.000000e+00> : vector<32x128xf32>
    %50 = tpu.matmul %48, %49, %cst_25 {dimension_numbers = #tpu.dot_dimension_numbers<[1], [0], [0], [1], [0, 0, 1, 1], [], []>} : vector<32x128xbf16>, vector<128x128xbf16>, vector<32x128xf32> -> vector<32x128xf32>
    %51 = arith.addf %47, %50 : vector<32x128xf32>
    %52 = vector.extract_strided_slice %34 {offsets = [128, 0], sizes = [32, 128], strides = [1, 1]} : vector<512x128xbf16> to vector<32x128xbf16>
    %c512 = arith.constant 512 : index
    %c0_26 = arith.constant 0 : index
    %53 = vector.load %arg5[%c512, %c0_26] : memref<2048x128xbf16, #tpu.memory_space<vmem>>, vector<128x128xbf16>
    %cst_27 = arith.constant dense<0.000000e+00> : vector<32x128xf32>
    %54 = tpu.matmul %52, %53, %cst_27 {dimension_numbers = #tpu.dot_dimension_numbers<[1], [0], [0], [1], [0, 0, 1, 1], [], []>} : vector<32x128xbf16>, vector<128x128xbf16>, vector<32x128xf32> -> vector<32x128xf32>
    %55 = arith.addf %51, %54 : vector<32x128xf32>
    %56 = vector.extract_strided_slice %34 {offsets = [160, 0], sizes = [32, 128], strides = [1, 1]} : vector<512x128xbf16> to vector<32x128xbf16>
    %c640 = arith.constant 640 : index
    %c0_28 = arith.constant 0 : index
    %57 = vector.load %arg5[%c640, %c0_28] : memref<2048x128xbf16, #tpu.memory_space<vmem>>, vector<128x128xbf16>
    %cst_29 = arith.constant dense<0.000000e+00> : vector<32x128xf32>
    %58 = tpu.matmul %56, %57, %cst_29 {dimension_numbers = #tpu.dot_dimension_numbers<[1], [0], [0], [1], [0, 0, 1, 1], [], []>} : vector<32x128xbf16>, vector<128x128xbf16>, vector<32x128xf32> -> vector<32x128xf32>
    %59 = arith.addf %55, %58 : vector<32x128xf32>
    %60 = vector.extract_strided_slice %34 {offsets = [192, 0], sizes = [32, 128], strides = [1, 1]} : vector<512x128xbf16> to vector<32x128xbf16>
    %c768 = arith.constant 768 : index
    %c0_30 = arith.constant 0 : index
    %61 = vector.load %arg5[%c768, %c0_30] : memref<2048x128xbf16, #tpu.memory_space<vmem>>, vector<128x128xbf16>
    %cst_31 = arith.constant dense<0.000000e+00> : vector<32x128xf32>
    %62 = tpu.matmul %60, %61, %cst_31 {dimension_numbers = #tpu.dot_dimension_numbers<[1], [0], [0], [1], [0, 0, 1, 1], [], []>} : vector<32x128xbf16>, vector<128x128xbf16>, vector<32x128xf32> -> vector<32x128xf32>
    %63 = arith.addf %59, %62 : vector<32x128xf32>
    %64 = vector.extract_strided_slice %34 {offsets = [224, 0], sizes = [32, 128], strides = [1, 1]} : vector<512x128xbf16> to vector<32x128xbf16>
    %c896 = arith.constant 896 : index
    %c0_32 = arith.constant 0 : index
    %65 = vector.load %arg5[%c896, %c0_32] : memref<2048x128xbf16, #tpu.memory_space<vmem>>, vector<128x128xbf16>
    %cst_33 = arith.constant dense<0.000000e+00> : vector<32x128xf32>
    %66 = tpu.matmul %64, %65, %cst_33 {dimension_numbers = #tpu.dot_dimension_numbers<[1], [0], [0], [1], [0, 0, 1, 1], [], []>} : vector<32x128xbf16>, vector<128x128xbf16>, vector<32x128xf32> -> vector<32x128xf32>
    %67 = arith.addf %63, %66 : vector<32x128xf32>
    %68 = vector.extract_strided_slice %34 {offsets = [256, 0], sizes = [32, 128], strides = [1, 1]} : vector<512x128xbf16> to vector<32x128xbf16>
    %c1024 = arith.constant 1024 : index
    %c0_34 = arith.constant 0 : index
    %69 = vector.load %arg5[%c1024, %c0_34] : memref<2048x128xbf16, #tpu.memory_space<vmem>>, vector<128x128xbf16>
    %cst_35 = arith.constant dense<0.000000e+00> : vector<32x128xf32>
    %70 = tpu.matmul %68, %69, %cst_35 {dimension_numbers = #tpu.dot_dimension_numbers<[1], [0], [0], [1], [0, 0, 1, 1], [], []>} : vector<32x128xbf16>, vector<128x128xbf16>, vector<32x128xf32> -> vector<32x128xf32>
    %71 = arith.addf %67, %70 : vector<32x128xf32>
    %72 = vector.extract_strided_slice %34 {offsets = [288, 0], sizes = [32, 128], strides = [1, 1]} : vector<512x128xbf16> to vector<32x128xbf16>
    %c1152 = arith.constant 1152 : index
    %c0_36 = arith.constant 0 : index
    %73 = vector.load %arg5[%c1152, %c0_36] : memref<2048x128xbf16, #tpu.memory_space<vmem>>, vector<128x128xbf16>
    %cst_37 = arith.constant dense<0.000000e+00> : vector<32x128xf32>
    %74 = tpu.matmul %72, %73, %cst_37 {dimension_numbers = #tpu.dot_dimension_numbers<[1], [0], [0], [1], [0, 0, 1, 1], [], []>} : vector<32x128xbf16>, vector<128x128xbf16>, vector<32x128xf32> -> vector<32x128xf32>
    %75 = arith.addf %71, %74 : vector<32x128xf32>
    %76 = vector.extract_strided_slice %34 {offsets = [320, 0], sizes = [32, 128], strides = [1, 1]} : vector<512x128xbf16> to vector<32x128xbf16>
    %c1280 = arith.constant 1280 : index
    %c0_38 = arith.constant 0 : index
    %77 = vector.load %arg5[%c1280, %c0_38] : memref<2048x128xbf16, #tpu.memory_space<vmem>>, vector<128x128xbf16>
    %cst_39 = arith.constant dense<0.000000e+00> : vector<32x128xf32>
    %78 = tpu.matmul %76, %77, %cst_39 {dimension_numbers = #tpu.dot_dimension_numbers<[1], [0], [0], [1], [0, 0, 1, 1], [], []>} : vector<32x128xbf16>, vector<128x128xbf16>, vector<32x128xf32> -> vector<32x128xf32>
    %79 = arith.addf %75, %78 : vector<32x128xf32>
    %80 = vector.extract_strided_slice %34 {offsets = [352, 0], sizes = [32, 128], strides = [1, 1]} : vector<512x128xbf16> to vector<32x128xbf16>
    %c1408 = arith.constant 1408 : index
    %c0_40 = arith.constant 0 : index
    %81 = vector.load %arg5[%c1408, %c0_40] : memref<2048x128xbf16, #tpu.memory_space<vmem>>, vector<128x128xbf16>
    %cst_41 = arith.constant dense<0.000000e+00> : vector<32x128xf32>
    %82 = tpu.matmul %80, %81, %cst_41 {dimension_numbers = #tpu.dot_dimension_numbers<[1], [0], [0], [1], [0, 0, 1, 1], [], []>} : vector<32x128xbf16>, vector<128x128xbf16>, vector<32x128xf32> -> vector<32x128xf32>
    %83 = arith.addf %79, %82 : vector<32x128xf32>
    %84 = vector.extract_strided_slice %34 {offsets = [384, 0], sizes = [32, 128], strides = [1, 1]} : vector<512x128xbf16> to vector<32x128xbf16>
    %c1536 = arith.constant 1536 : index
    %c0_42 = arith.constant 0 : index
    %85 = vector.load %arg5[%c1536, %c0_42] : memref<2048x128xbf16, #tpu.memory_space<vmem>>, vector<128x128xbf16>
    %cst_43 = arith.constant dense<0.000000e+00> : vector<32x128xf32>
    %86 = tpu.matmul %84, %85, %cst_43 {dimension_numbers = #tpu.dot_dimension_numbers<[1], [0], [0], [1], [0, 0, 1, 1], [], []>} : vector<32x128xbf16>, vector<128x128xbf16>, vector<32x128xf32> -> vector<32x128xf32>
    %87 = arith.addf %83, %86 : vector<32x128xf32>
    %88 = vector.extract_strided_slice %34 {offsets = [416, 0], sizes = [32, 128], strides = [1, 1]} : vector<512x128xbf16> to vector<32x128xbf16>
    %c1664 = arith.constant 1664 : index
    %c0_44 = arith.constant 0 : index
    %89 = vector.load %arg5[%c1664, %c0_44] : memref<2048x128xbf16, #tpu.memory_space<vmem>>, vector<128x128xbf16>
    %cst_45 = arith.constant dense<0.000000e+00> : vector<32x128xf32>
    %90 = tpu.matmul %88, %89, %cst_45 {dimension_numbers = #tpu.dot_dimension_numbers<[1], [0], [0], [1], [0, 0, 1, 1], [], []>} : vector<32x128xbf16>, vector<128x128xbf16>, vector<32x128xf32> -> vector<32x128xf32>
    %91 = arith.addf %87, %90 : vector<32x128xf32>
    %92 = vector.extract_strided_slice %34 {offsets = [448, 0], sizes = [32, 128], strides = [1, 1]} : vector<512x128xbf16> to vector<32x128xbf16>
    %c1792 = arith.constant 1792 : index
    %c0_46 = arith.constant 0 : index
    %93 = vector.load %arg5[%c1792, %c0_46] : memref<2048x128xbf16, #tpu.memory_space<vmem>>, vector<128x128xbf16>
    %cst_47 = arith.constant dense<0.000000e+00> : vector<32x128xf32>
    %94 = tpu.matmul %92, %93, %cst_47 {dimension_numbers = #tpu.dot_dimension_numbers<[1], [0], [0], [1], [0, 0, 1, 1], [], []>} : vector<32x128xbf16>, vector<128x128xbf16>, vector<32x128xf32> -> vector<32x128xf32>
    %95 = arith.addf %91, %94 : vector<32x128xf32>
    %96 = vector.extract_strided_slice %34 {offsets = [480, 0], sizes = [32, 128], strides = [1, 1]} : vector<512x128xbf16> to vector<32x128xbf16>
    %c1920 = arith.constant 1920 : index
    %c0_48 = arith.constant 0 : index
    %97 = vector.load %arg5[%c1920, %c0_48] : memref<2048x128xbf16, #tpu.memory_space<vmem>>, vector<128x128xbf16>
    %cst_49 = arith.constant dense<0.000000e+00> : vector<32x128xf32>
    %98 = tpu.matmul %96, %97, %cst_49 {dimension_numbers = #tpu.dot_dimension_numbers<[1], [0], [0], [1], [0, 0, 1, 1], [], []>} : vector<32x128xbf16>, vector<128x128xbf16>, vector<32x128xf32> -> vector<32x128xf32>
    %99 = arith.addf %95, %98 : vector<32x128xf32>
    %c0_50 = arith.constant 0 : index
    %c0_51 = arith.constant 0 : index
    %100 = vector.load %arg6[%c0_50, %c0_51] : memref<8x128xf32, #tpu.memory_space<vmem>>, vector<1x128xf32>
    %c1_52 = arith.constant 1 : index
    %c0_53 = arith.constant 0 : index
    %101 = vector.load %arg6[%c1_52, %c0_53] : memref<8x128xf32, #tpu.memory_space<vmem>>, vector<1x128xf32>
    %cst_54 = arith.constant dense<0.000000e+00> : vector<128xf32>
    %102 = vector.multi_reduction <add>, %99, %cst_54 [0] : vector<32x128xf32> to vector<128xf32>
    %103 = vector.shape_cast %102 : vector<128xf32> to vector<1x128xf32>
    %cst_55 = arith.constant 3.200000e+01 : f32
    %104 = vector.broadcast %cst_55 : f32 to vector<1x128xf32>
    %105 = arith.divf %103, %104 : vector<1x128xf32>
    %106 = arith.mulf %99, %99 : vector<32x128xf32>
    %cst_56 = arith.constant dense<0.000000e+00> : vector<128xf32>
    %107 = vector.multi_reduction <add>, %106, %cst_56 [0] : vector<32x128xf32> to vector<128xf32>
    %108 = vector.shape_cast %107 : vector<128xf32> to vector<1x128xf32>
    %cst_57 = arith.constant 3.200000e+01 : f32
    %109 = vector.broadcast %cst_57 : f32 to vector<1x128xf32>
    %110 = arith.divf %108, %109 : vector<1x128xf32>
    %111 = arith.mulf %105, %105 : vector<1x128xf32>
    %112 = arith.subf %110, %111 : vector<1x128xf32>
    %cst_58 = arith.constant 0.000000e+00 : f32
    %113 = vector.broadcast %cst_58 : f32 to vector<1x128xf32>
    %114 = arith.maximumf %112, %113 : vector<1x128xf32>
    %cst_59 = arith.constant 9.99999974E-6 : f32
    %115 = vector.broadcast %cst_59 : f32 to vector<1x128xf32>
    %116 = arith.addf %114, %115 : vector<1x128xf32>
    %117 = math.rsqrt %116 : vector<1x128xf32>
    %118 = arith.mulf %100, %117 : vector<1x128xf32>
    %119 = arith.mulf %105, %118 : vector<1x128xf32>
    %120 = arith.subf %101, %119 : vector<1x128xf32>
    %121 = vector.broadcast %118 : vector<1x128xf32> to vector<32x128xf32>
    %122 = arith.mulf %99, %121 : vector<32x128xf32>
    %123 = vector.broadcast %120 : vector<1x128xf32> to vector<32x128xf32>
    %124 = arith.addf %122, %123 : vector<32x128xf32>
    %cst_60 = arith.constant 0.00999999977 : f32
    %125 = vector.broadcast %cst_60 : f32 to vector<32x128xf32>
    %126 = arith.mulf %125, %124 : vector<32x128xf32>
    %127 = arith.maximumf %124, %126 : vector<32x128xf32>
    %c0_61 = arith.constant 0 : index
    %c0_62 = arith.constant 0 : index
    %128 = vector.load %arg10[%c0_61, %c0_62] : memref<32x128xf32, #tpu.memory_space<vmem>>, vector<32x128xf32>
    tpu.vector_store %arg10[%c0_61, %c0_62], %127 {strides = array<i32>} : memref<32x128xf32, #tpu.memory_space<vmem>>, vector<32x128xf32>,
    %c0_63 = arith.constant 0 : index
    %c0_64 = arith.constant 0 : index
    %129 = vector.load %arg7[%c0_63, %c0_64] : memref<32x128xf32, #tpu.memory_space<vmem>>, vector<32x128xf32>
    %130 = arith.mulf %127, %129 : vector<32x128xf32>
    %c0_65 = arith.constant 0 : index
    %c0_66 = arith.constant 0 : index
    %131 = vector.load %arg8[%c0_65, %c0_66] : memref<8x32xf32, #tpu.memory_space<vmem>>, vector<8x32xf32>
    %cst_67 = arith.constant dense<0.000000e+00> : vector<8x128xf32>
    %132 = tpu.matmul %131, %130, %cst_67 {dimension_numbers = #tpu.dot_dimension_numbers<[1], [0], [0], [1], [0, 0, 1, 1], [], []>} : vector<8x32xf32>, vector<32x128xf32>, vector<8x128xf32> -> vector<8x128xf32>
    %cst_68 = arith.constant dense<0.000000e+00> : vector<8xf32>
    %133 = vector.multi_reduction <add>, %132, %cst_68 [1] : vector<8x128xf32> to vector<8xf32>
    %134 = vector.shape_cast %133 : vector<8xf32> to vector<8x1xf32>
    %c0_69 = arith.constant 0 : index
    %c0_70 = arith.constant 0 : index
    %135 = vector.load %arg9[%c0_69, %c0_70] : memref<8x128xf32, #tpu.memory_space<vmem>>, vector<8x128xf32>
    %136 = vector.broadcast %134 : vector<8x1xf32> to vector<8x128xf32>
    %137 = arith.addf %136, %135 : vector<8x128xf32>
    %c0_71 = arith.constant 0 : index
    %c0_72 = arith.constant 0 : index
    %138 = vector.load %arg11[%c0_71, %c0_72] : memref<8x128xf32, #tpu.memory_space<vmem>>, vector<8x128xf32>
    tpu.vector_store %arg11[%c0_71, %c0_72], %137 {strides = array<i32>} : memref<8x128xf32, #tpu.memory_space<vmem>>, vector<8x128xf32>,
    return
  }
  func.func @transform_0(%arg0: i32) -> (i32, i32) {
    %c0_i32 = arith.constant 0 : i32
    %c0_i32_0 = arith.constant 0 : i32
    %c0_i32_1 = arith.constant 0 : i32
    return %c0_i32, %c0_i32_0 : i32, i32
  }
  func.func @transform_1(%arg0: i32) -> (i32, i32) {
    %c0_i32 = arith.constant 0 : i32
    %c0_i32_0 = arith.constant 0 : i32
    %c0_i32_1 = arith.constant 0 : i32
    return %c0_i32, %c0_i32_0 : i32, i32
  }
  func.func @transform_2(%arg0: i32) -> (i32, i32) {
    %c0_i32 = arith.constant 0 : i32
    %c0_i32_0 = arith.constant 0 : i32
    %c0_i32_1 = arith.constant 0 : i32
    return %c0_i32, %c0_i32_0 : i32, i32
  }
  func.func @transform_3(%arg0: i32) -> (i32, i32) {
    %c0_i32 = arith.constant 0 : i32
    %c0_i32_0 = arith.constant 0 : i32
    %c0_i32_1 = arith.constant 0 : i32
    return %c0_i32, %c0_i32_0 : i32, i32
  }
  func.func @transform_4(%arg0: i32) -> (i32, i32) {
    %c0_i32 = arith.constant 0 : i32
    %c0_i32_0 = arith.constant 0 : i32
    %c0_i32_1 = arith.constant 0 : i32
    return %c0_i32, %c0_i32_0 : i32, i32
  }
  func.func @transform_5(%arg0: i32) -> (i32, i32) {
    %c0_i32 = arith.constant 0 : i32
    %c0_i32_0 = arith.constant 0 : i32
    %c0_i32_1 = arith.constant 0 : i32
    return %c0_i32, %c0_i32_0 : i32, i32
  }
  func.func @transform_6(%arg0: i32) -> (i32, i32) {
    %c0_i32 = arith.constant 0 : i32
    %c0_i32_0 = arith.constant 0 : i32
    %c0_i32_1 = arith.constant 0 : i32
    return %c0_i32, %c0_i32_0 : i32, i32
  }
  func.func @transform_7(%arg0: i32) -> (i32, i32) {
    %c0_i32 = arith.constant 0 : i32
    %c0_i32_0 = arith.constant 0 : i32
    %c0_i32_1 = arith.constant 0 : i32
    return %c0_i32, %c0_i32_0 : i32, i32
  }
  func.func @transform_8(%arg0: i32) -> (i32, i32) {
    %c0_i32 = arith.constant 0 : i32
    %c0_i32_0 = arith.constant 0 : i32
    %c0_i32_1 = arith.constant 0 : i32
    return %c0_i32, %c0_i32_0 : i32, i32
  }
  func.func @transform_9(%arg0: i32) -> (i32, i32) {
    %c0_i32 = arith.constant 0 : i32
    %c0_i32_0 = arith.constant 0 : i32
    %c0_i32_1 = arith.constant 0 : i32
    return %c0_i32, %c0_i32_0 : i32, i32
  }
  func.func @transform_10(%arg0: i32) -> (i32, i32) {
    %c0_i32 = arith.constant 0 : i32
    %c0_i32_0 = arith.constant 0 : i32
    %c0_i32_1 = arith.constant 0 : i32
    return %c0_i32, %c0_i32_0 : i32, i32
  }
}

</mosaic_0001>

<llo_original>
// kernel: tpu_custom_call.1
$region0: #{tpu_custom_call.1}
  #allocation0 [shape = 'u32[]', space=smem, size = 0x4, offset = 0x4, fixed_abs, tag = 'smem constant byte address 0x4 - core index']
  #allocation1 [shape = 'u32[144,128]{1,0:T(1,128)}', space=vmem, size = 0x12000, scoped, tag = 'internal scratch']
  %s0 = inlined_call_operand.hbm [shape: bf16[128,128], index: 0, kind: input, shape index: {}]
  %s1 = inlined_call_operand.hbm [shape: bf16[128,128], index: 1, kind: input, shape index: {}]
  %s2 = inlined_call_operand.hbm [shape: f32[8,128], index: 2, kind: input, shape index: {}]
  %s3 = inlined_call_operand.hbm [shape: bf16[512,128], index: 3, kind: input, shape index: {}]
  %s4 = inlined_call_operand.hbm [shape: bf16[2048,128], index: 4, kind: input, shape index: {}]
  %s5 = inlined_call_operand.vmem [shape: f32[8,128], index: 5, kind: input, shape index: {}]
  %s6 = inlined_call_operand.hbm [shape: f32[32,128], index: 6, kind: input, shape index: {}]
  %s7 = inlined_call_operand.hbm [shape: f32[8,32], index: 7, kind: input, shape index: {}]
  %s8 = inlined_call_operand.hbm [shape: f32[8,128], index: 8, kind: input, shape index: {}]
  %s9 = inlined_call_operand.hbm [shape: f32[32,128], index: 9, kind: output, shape index: {0}]
  %s10 = inlined_call_operand.hbm [shape: f32[8,128], index: 10, kind: output, shape index: {1}]
  %11 = xla_tuple %s9, %s10
  %s12 = sld [smem:[#allocation0]]
  $region86: #{tpu_custom_call.1} parent=0
    _
  %s14 = ssub.s32 1, %s12
  %s15 = scalar_select 0, %s14, %s12
  $region1: #{tpu_custom_call.1} parent=0
    #allocation2 [shape = 'u8[32768]{0}', space=vmem, size = 0x8000, scoped, tag = 'input window, operand 0, single buffered']
    #allocation3 [shape = 's32[1]{0}', space=sflag, size = 0x4, scoped, tag = 'scoped memory for tpu_custom_call.1']
    #allocation4 [shape = 's32[1]{0}', space=sflag, size = 0x4, scoped, tag = 'scoped memory for tpu_custom_call.1']
    #allocation5 [shape = 'u8[32768]{0}', space=vmem, size = 0x8000, scoped, tag = 'input window, operand 1, single buffered']
    #allocation6 [shape = 's32[1]{0}', space=sflag, size = 0x4, scoped, tag = 'scoped memory for tpu_custom_call.1']
    #allocation7 [shape = 'u8[4096]{0}', space=vmem, size = 0x1000, scoped, tag = 'input window, operand 2, single buffered']
    #allocation8 [shape = 'u8[131072]{0}', space=vmem, size = 0x20000, scoped, tag = 'input window, operand 3, single buffered']
    #allocation9 [shape = 's32[1]{0}', space=sflag, size = 0x4, scoped, tag = 'scoped memory for tpu_custom_call.1']
    #allocation10 [shape = 'u8[524288]{0}', space=vmem, size = 0x80000, scoped, tag = 'input window, operand 4, single buffered']
    #allocation11 [shape = 'u8[16384]{0}', space=vmem, size = 0x4000, scoped, tag = 'input window, operand 6, single buffered']
    #allocation12 [shape = 's32[1]{0}', space=sflag, size = 0x4, scoped, tag = 'scoped memory for tpu_custom_call.1']
    #allocation13 [shape = 'u8[4096]{0}', space=vmem, size = 0x1000, scoped, tag = 'input window, operand 7, single buffered']
    #allocation14 [shape = 'u8[4096]{0}', space=vmem, size = 0x1000, scoped, tag = 'input window, operand 8, single buffered']
    #allocation15 [shape = 's32[1]{0}', space=sflag, size = 0x4, scoped, tag = 'scoped memory for tpu_custom_call.1']
    #allocation16 [shape = 'u8[16384]{0}', space=vmem, size = 0x4000, scoped, tag = 'output window, operand 0, single buffered']
    #allocation17 [shape = 'u8[4096]{0}', space=vmem, size = 0x1000, scoped, tag = 'output window, operand 1, single buffered']
    #allocation18 [shape = 's32[1]{0}', space=sflag, size = 0x4, scoped, tag = 'scoped memory for tpu_custom_call.1']
    %16 = vsyncpa [#allocation3], 0
    %17 = vsyncpa [#allocation6], 0
    %18 = vsyncpa [#allocation9], 0
    %19 = vsyncpa [#allocation12], 0
    %20 = vsyncpa [#allocation15], 0
    %21 = vsyncpa [#allocation4], 0
    %22 = vsyncpa [#allocation18], 0
    // Predicated region
    $region2: #{tpu_custom_call.1} parent=1 // pred_check
      _
    $region3: #{tpu_custom_call.1} parent=1 // pred_check_branch
      %24 = sbr.rel (0) target = $region5
    $region4: #{tpu_custom_call.1} parent=1 // pred_region
      %s26 = ssub.s32 1024, 1024
      %27 = vsyncadd [#allocation3], %s26
      %s28 = sshll.u32 [#allocation2], 4
      %s29 = int_to_ptr.vmem [resolvable:$true] %s28
      %34 = dma.hbm_to_vmem [thread:$0]  %s0, 1024, %s29, [#allocation3], 64, 64, 4
    $region5: #{tpu_custom_call.1} parent=1 // pred_fallthru
      _
    // Predicated region
    $region6: #{tpu_custom_call.1} parent=1 // pred_check
      _
    $region7: #{tpu_custom_call.1} parent=1 // pred_check_branch
      %36 = sbr.rel (0) target = $region9
    $region8: #{tpu_custom_call.1} parent=1 // pred_region
      %s38 = ssub.s32 1024, 1024
      %39 = vsyncadd [#allocation6], %s38
      %s40 = sshll.u32 [#allocation5], 4
      %s41 = int_to_ptr.vmem [resolvable:$true] %s40
      %46 = dma.hbm_to_vmem [thread:$0]  %s1, 1024, %s41, [#allocation6], 64, 64, 4
    $region9: #{tpu_custom_call.1} parent=1 // pred_fallthru
      _
    // Predicated region
    $region10: #{tpu_custom_call.1} parent=1 // pred_check
      _
    $region11: #{tpu_custom_call.1} parent=1 // pred_check_branch
      %48 = sbr.rel (0) target = $region13
    $region12: #{tpu_custom_call.1} parent=1 // pred_region
      %s50 = ssub.s32 128, 128
      %51 = vsyncadd [#allocation6], %s50
      %s53 = sshll.u32 [#allocation7], 4
      %s54 = int_to_ptr.vmem [resolvable:$true] %s53
      %56 = dma.hbm_to_vmem [thread:$0]  %s2, 128, %s54, [#allocation6]
    $region13: #{tpu_custom_call.1} parent=1 // pred_fallthru
      _
    // Predicated region
    $region14: #{tpu_custom_call.1} parent=1 // pred_check
      _
    $region15: #{tpu_custom_call.1} parent=1 // pred_check_branch
      %58 = sbr.rel (0) target = $region17
    $region16: #{tpu_custom_call.1} parent=1 // pred_region
      %s60 = ssub.s32 4096, 4096
      %61 = vsyncadd [#allocation9], %s60
      %s62 = sshll.u32 [#allocation8], 4
      %s63 = int_to_ptr.vmem [resolvable:$true] %s62
      %68 = dma.hbm_to_vmem [thread:$0]  %s3, 4096, %s63, [#allocation9], 64, 64, 4
    $region17: #{tpu_custom_call.1} parent=1 // pred_fallthru
      _
    // Predicated region
    $region18: #{tpu_custom_call.1} parent=1 // pred_check
      _
    $region19: #{tpu_custom_call.1} parent=1 // pred_check_branch
      %70 = sbr.rel (0) target = $region21
    $region20: #{tpu_custom_call.1} parent=1 // pred_region
      %s72 = ssub.s32 16384, 16384
      %73 = vsyncadd [#allocation9], %s72
      %s74 = sshll.u32 [#allocation10], 4
      %s75 = int_to_ptr.vmem [resolvable:$true] %s74
      %80 = dma.hbm_to_vmem [thread:$0]  %s4, 16384, %s75, [#allocation9], 64, 64, 4
    $region21: #{tpu_custom_call.1} parent=1 // pred_fallthru
      _
    // Predicated region
    $region22: #{tpu_custom_call.1} parent=1 // pred_check
      _
    $region23: #{tpu_custom_call.1} parent=1 // pred_check_branch
      %82 = sbr.rel (0) target = $region25
    $region24: #{tpu_custom_call.1} parent=1 // pred_region
      _
    $region25: #{tpu_custom_call.1} parent=1 // pred_fallthru
      _
    // Predicated region
    $region26: #{tpu_custom_call.1} parent=1 // pred_check
      _
    $region27: #{tpu_custom_call.1} parent=1 // pred_check_branch
      %84 = sbr.rel (0) target = $region29
    $region28: #{tpu_custom_call.1} parent=1 // pred_region
      %s86 = ssub.s32 512, 512
      %87 = vsyncadd [#allocation12], %s86
      %s88 = sshll.u32 [#allocation11], 4
      %s89 = int_to_ptr.vmem [resolvable:$true] %s88
      %94 = dma.hbm_to_vmem [thread:$0]  %s6, 512, %s89, [#allocation12], 128, 128, 8
    $region29: #{tpu_custom_call.1} parent=1 // pred_fallthru
      _
    // Predicated region
    $region30: #{tpu_custom_call.1} parent=1 // pred_check
      _
    $region31: #{tpu_custom_call.1} parent=1 // pred_check_branch
      %96 = sbr.rel (0) target = $region33
    $region32: #{tpu_custom_call.1} parent=1 // pred_region
      %s98 = ssub.s32 128, 128
      %99 = vsyncadd [#allocation12], %s98
      %s101 = sshll.u32 [#allocation13], 4
      %s102 = int_to_ptr.vmem [resolvable:$true] %s101
      %104 = dma.hbm_to_vmem [thread:$0]  %s7, 128, %s102, [#allocation12]
    $region33: #{tpu_custom_call.1} parent=1 // pred_fallthru
      _
    // Predicated region
    $region34: #{tpu_custom_call.1} parent=1 // pred_check
      _
    $region35: #{tpu_custom_call.1} parent=1 // pred_check_branch
      %106 = sbr.rel (0) target = $region37
    $region36: #{tpu_custom_call.1} parent=1 // pred_region
      %s108 = ssub.s32 128, 128
      %109 = vsyncadd [#allocation15], %s108
      %s111 = sshll.u32 [#allocation14], 4
      %s112 = int_to_ptr.vmem [resolvable:$true] %s111
      %114 = dma.hbm_to_vmem [thread:$0]  %s8, 128, %s112, [#allocation15]
    $region37: #{tpu_custom_call.1} parent=1 // pred_fallthru
      _
    // Predicated region
    $region38: #{tpu_custom_call.1} parent=1 // pred_check
      _
    $region39: #{tpu_custom_call.1} parent=1 // pred_check_branch
      %116 = sbr.rel (0) target = $region41
    $region40: #{tpu_custom_call.1} parent=1 // pred_region
      %117 = dma.done [#allocation3], 1024
    $region41: #{tpu_custom_call.1} parent=1 // pred_fallthru
      _
    // Predicated region
    $region42: #{tpu_custom_call.1} parent=1 // pred_check
      _
    $region43: #{tpu_custom_call.1} parent=1 // pred_check_branch
      %119 = sbr.rel (0) target = $region45
    $region44: #{tpu_custom_call.1} parent=1 // pred_region
      %120 = dma.done [#allocation6], 1024
    $region45: #{tpu_custom_call.1} parent=1 // pred_fallthru
      _
    // Predicated region
    $region46: #{tpu_custom_call.1} parent=1 // pred_check
      _
    $region47: #{tpu_custom_call.1} parent=1 // pred_check_branch
      %122 = sbr.rel (0) target = $region49
    $region48: #{tpu_custom_call.1} parent=1 // pred_region
      %123 = dma.done [#allocation6], 128
    $region49: #{tpu_custom_call.1} parent=1 // pred_fallthru
      _
    // Predicated region
    $region50: #{tpu_custom_call.1} parent=1 // pred_check
      _
    $region51: #{tpu_custom_call.1} parent=1 // pred_check_branch
      %125 = sbr.rel (0) target = $region53
    $region52: #{tpu_custom_call.1} parent=1 // pred_region
      %126 = dma.done [#allocation9], 4096
    $region53: #{tpu_custom_call.1} parent=1 // pred_fallthru
      _
    // Predicated region
    $region54: #{tpu_custom_call.1} parent=1 // pred_check
      _
    $region55: #{tpu_custom_call.1} parent=1 // pred_check_branch
      %128 = sbr.rel (0) target = $region57
    $region56: #{tpu_custom_call.1} parent=1 // pred_region
      %129 = dma.done [#allocation9], 16384
    $region57: #{tpu_custom_call.1} parent=1 // pred_fallthru
      _
    // Predicated region
    $region58: #{tpu_custom_call.1} parent=1 // pred_check
      _
    $region59: #{tpu_custom_call.1} parent=1 // pred_check_branch
      %131 = sbr.rel (0) target = $region61
    $region60: #{tpu_custom_call.1} parent=1 // pred_region
      %132 = dma.done [#allocation12], 512
    $region61: #{tpu_custom_call.1} parent=1 // pred_fallthru
      _
    // Predicated region
    $region62: #{tpu_custom_call.1} parent=1 // pred_check
      _
    $region63: #{tpu_custom_call.1} parent=1 // pred_check_branch
      %134 = sbr.rel (0) target = $region65
    $region64: #{tpu_custom_call.1} parent=1 // pred_region
      %135 = dma.done [#allocation12], 128
    $region65: #{tpu_custom_call.1} parent=1 // pred_fallthru
      _
    // Predicated region
    $region66: #{tpu_custom_call.1} parent=1 // pred_check
      _
    $region67: #{tpu_custom_call.1} parent=1 // pred_check_branch
      %137 = sbr.rel (0) target = $region69
    $region68: #{tpu_custom_call.1} parent=1 // pred_region
      %138 = dma.done [#allocation15], 128
    $region69: #{tpu_custom_call.1} parent=1 // pred_fallthru
      _
    %v140 = vld [vmem:[#allocation2] sm:$0xf]
    %v141 = vld [vmem:[#allocation2 + $0x4] sm:$0xf]
    %v142 = vld [vmem:[#allocation2 + $0x8] sm:$0xf]
    %v143 = vld [vmem:[#allocation2 + $0xc] sm:$0xf]
    %v144 = vld [vmem:[#allocation2 + $0x10] sm:$0xf]
    %v145 = vld [vmem:[#allocation2 + $0x14] sm:$0xf]
    %v146 = vld [vmem:[#allocation2 + $0x18] sm:$0xf]
    %v147 = vld [vmem:[#allocation2 + $0x1c] sm:$0xf]
    %v148 = vld [vmem:[#allocation2 + $0x20] sm:$0xf]
    %v149 = vld [vmem:[#allocation2 + $0x24] sm:$0xf]
    %v150 = vld [vmem:[#allocation2 + $0x28] sm:$0xf]
    %v151 = vld [vmem:[#allocation2 + $0x2c] sm:$0xf]
    %v152 = vld [vmem:[#allocation2 + $0x30] sm:$0xf]
    %v153 = vld [vmem:[#allocation2 + $0x34] sm:$0xf]
    %v154 = vld [vmem:[#allocation2 + $0x38] sm:$0xf]
    %v155 = vld [vmem:[#allocation2 + $0x3c] sm:$0xf]
    %v156 = vld [vmem:[#allocation5] sm:$0xf]
    %v157 = vld [vmem:[#allocation5 + $0x4] sm:$0xf]
    %v158 = vld [vmem:[#allocation5 + $0x8] sm:$0xf]
    %v159 = vld [vmem:[#allocation5 + $0xc] sm:$0xf]
    %v160 = vld [vmem:[#allocation5 + $0x10] sm:$0xf]
    %v161 = vld [vmem:[#allocation5 + $0x14] sm:$0xf]
    %v162 = vld [vmem:[#allocation5 + $0x18] sm:$0xf]
    %v163 = vld [vmem:[#allocation5 + $0x1c] sm:$0xf]
    %v164 = vld [vmem:[#allocation5 + $0x20] sm:$0xf]
    %v165 = vld [vmem:[#allocation5 + $0x24] sm:$0xf]
    %v166 = vld [vmem:[#allocation5 + $0x28] sm:$0xf]
    %v167 = vld [vmem:[#allocation5 + $0x2c] sm:$0xf]
    %v168 = vld [vmem:[#allocation5 + $0x30] sm:$0xf]
    %v169 = vld [vmem:[#allocation5 + $0x34] sm:$0xf]
    %v170 = vld [vmem:[#allocation5 + $0x38] sm:$0xf]
    %v171 = vld [vmem:[#allocation5 + $0x3c] sm:$0xf]
    %v188 = vunpack.c.l.b16 %v140
    %v189 = vunpack.c.l.b16 %v141
    %v190 = vunpack.c.l.b16 %v142
    %v191 = vunpack.c.l.b16 %v143
    %v192 = vunpack.c.l.b16 %v144
    %v193 = vunpack.c.l.b16 %v145
    %v194 = vunpack.c.l.b16 %v146
    %v195 = vunpack.c.l.b16 %v147
    %v196 = vunpack.c.l.b16 %v148
    %v197 = vunpack.c.l.b16 %v149
    %v198 = vunpack.c.l.b16 %v150
    %v199 = vunpack.c.l.b16 %v151
    %v200 = vunpack.c.l.b16 %v152
    %v201 = vunpack.c.l.b16 %v153
    %v202 = vunpack.c.l.b16 %v154
    %v203 = vunpack.c.l.b16 %v155
    %v204 = vpack.c.b16 %v189, %v188
    %v205 = vpack.c.b16 %v191, %v190
    %v206 = vpack.c.b16 %v193, %v192
    %v207 = vpack.c.b16 %v195, %v194
    %v208 = vpack.c.b16 %v197, %v196
    %v209 = vpack.c.b16 %v199, %v198
    %v210 = vpack.c.b16 %v201, %v200
    %v211 = vpack.c.b16 %v203, %v202
    %v236 = vunpack.c.l.b16 %v156
    %v237 = vunpack.c.l.b16 %v157
    %v238 = vunpack.c.l.b16 %v158
    %v239 = vunpack.c.l.b16 %v159
    %v240 = vunpack.c.l.b16 %v160
    %v241 = vunpack.c.l.b16 %v161
    %v242 = vunpack.c.l.b16 %v162
    %v243 = vunpack.c.l.b16 %v163
    %v244 = vunpack.c.l.b16 %v164
    %v245 = vunpack.c.l.b16 %v165
    %v246 = vunpack.c.l.b16 %v166
    %v247 = vunpack.c.l.b16 %v167
    %v248 = vunpack.c.l.b16 %v168
    %v249 = vunpack.c.l.b16 %v169
    %v250 = vunpack.c.l.b16 %v170
    %v251 = vunpack.c.l.b16 %v171
    %v252 = vpack.c.b16 %v237, %v236
    %v253 = vpack.c.b16 %v239, %v238
    %v254 = vpack.c.b16 %v241, %v240
    %v255 = vpack.c.b16 %v243, %v242
    %v256 = vpack.c.b16 %v245, %v244
    %v257 = vpack.c.b16 %v247, %v246
    %v258 = vpack.c.b16 %v249, %v248
    %v259 = vpack.c.b16 %v251, %v250
    %268 = vmatprep.subr.bf16.mxu0 0
    %269 = vmatpush1.bf16.msra.mxu0 %v259
    %270 = vmatprep.subr.bf16.mxu0 0
    %271 = vmatpush1.bf16.msra.mxu0 %v258
    %272 = vmatprep.subr.bf16.mxu0 0
    %273 = vmatpush1.bf16.msra.mxu0 %v257
    %274 = vmatprep.subr.bf16.mxu0 0
    %275 = vmatpush1.bf16.msra.mxu0 %v256
    %276 = vmatprep.subr.bf16.mxu0 0
    %277 = vmatpush1.bf16.msra.mxu0 %v255
    %278 = vmatprep.subr.bf16.mxu0 0
    %279 = vmatpush1.bf16.msra.mxu0 %v254
    %280 = vmatprep.subr.bf16.mxu0 0
    %281 = vmatpush1.bf16.msra.mxu0 %v253
    %282 = vmatprep.subr.bf16.mxu0 0
    %283 = vmatpush1.bf16.msra.mxu0 %v252
    %284 = vmatprep.subr.bf16.mxu0 0
    %285 = vmatpush2.bf16.msra.mxu0 0
    %286 = vmatprep.subr.bf16.mxu0 0
    %287 = vmatpush2.bf16.msra.mxu0 0
    %288 = vmatprep.subr.bf16.mxu0 0
    %289 = vmatpush2.bf16.msra.mxu0 0
    %290 = vmatprep.subr.bf16.mxu0 0
    %291 = vmatpush2.bf16.msra.mxu0 0
    %292 = vmatprep.subr.bf16.mxu0 0
    %293 = vmatpush2.bf16.msra.mxu0 0
    %294 = vmatprep.subr.bf16.mxu0 0
    %295 = vmatpush2.bf16.msra.mxu0 0
    %296 = vmatprep.subr.bf16.mxu0 0
    %297 = vmatpush2.bf16.msra.mxu0 0
    %298 = vmatprep.subr.bf16.mxu0 0
    %299 = vmatpush2.bf16.msra.mxu0 0
    %300 = vmatprep.mubr.bf16.mxu0 0
    %301 = vmatmul.mubr.bf16.gmra.mxu0 %v204
    %v302 = vpop.f32.mrf.mxu0
    %v303 = vadd.f32 0.0, %v302
    %v304 = vpop.f32.mrf.mxu0
    %v305 = vpop.f32.mrf.mxu0
    %v306 = vadd.f32 0.0, %v305
    %v307 = vpop.f32.mrf.mxu0
    %308 = vmatprep.mubr.bf16.mxu0 0
    %309 = vmatmul.mubr.bf16.gmra.mxu0 %v205
    %v310 = vpop.f32.mrf.mxu0
    %v311 = vadd.f32 0.0, %v310
    %v312 = vpop.f32.mrf.mxu0
    %v313 = vpop.f32.mrf.mxu0
    %v314 = vadd.f32 0.0, %v313
    %v315 = vpop.f32.mrf.mxu0
    %316 = vmatprep.mubr.bf16.mxu0 0
    %317 = vmatmul.mubr.bf16.gmra.mxu0 %v206
    %v318 = vpop.f32.mrf.mxu0
    %v319 = vadd.f32 0.0, %v318
    %v320 = vpop.f32.mrf.mxu0
    %v321 = vpop.f32.mrf.mxu0
    %v322 = vadd.f32 0.0, %v321
    %v323 = vpop.f32.mrf.mxu0
    %324 = vmatprep.mubr.bf16.mxu0 0
    %325 = vmatmul.mubr.bf16.gmra.mxu0 %v207
    %v326 = vpop.f32.mrf.mxu0
    %v327 = vadd.f32 0.0, %v326
    %v328 = vpop.f32.mrf.mxu0
    %v329 = vpop.f32.mrf.mxu0
    %v330 = vadd.f32 0.0, %v329
    %v331 = vpop.f32.mrf.mxu0
    %332 = vmatprep.mubr.bf16.mxu0 0
    %333 = vmatmul.mubr.bf16.gmra.mxu0 %v208
    %v334 = vpop.f32.mrf.mxu0
    %v335 = vadd.f32 0.0, %v334
    %v336 = vpop.f32.mrf.mxu0
    %v337 = vpop.f32.mrf.mxu0
    %v338 = vadd.f32 0.0, %v337
    %v339 = vpop.f32.mrf.mxu0
    %340 = vmatprep.mubr.bf16.mxu0 0
    %341 = vmatmul.mubr.bf16.gmra.mxu0 %v209
    %v342 = vpop.f32.mrf.mxu0
    %v343 = vadd.f32 0.0, %v342
    %v344 = vpop.f32.mrf.mxu0
    %v345 = vpop.f32.mrf.mxu0
    %v346 = vadd.f32 0.0, %v345
    %v347 = vpop.f32.mrf.mxu0
    %348 = vmatprep.mubr.bf16.mxu0 0
    %349 = vmatmul.mubr.bf16.gmra.mxu0 %v210
    %v350 = vpop.f32.mrf.mxu0
    %v351 = vadd.f32 0.0, %v350
    %v352 = vpop.f32.mrf.mxu0
    %v353 = vpop.f32.mrf.mxu0
    %v354 = vadd.f32 0.0, %v353
    %v355 = vpop.f32.mrf.mxu0
    %356 = vmatprep.mubr.bf16.mxu0 0
    %357 = vmatmul.mubr.bf16.gmra.mxu0 %v211
    %v358 = vpop.f32.mrf.mxu0
    %v359 = vadd.f32 0.0, %v358
    %v360 = vpop.f32.mrf.mxu0
    %v361 = vpop.f32.mrf.mxu0
    %v362 = vadd.f32 0.0, %v361
    %v363 = vpop.f32.mrf.mxu0
    %364 = vdwg.mxu0
    %v365 = vld [vmem:[#allocation7] sm:$0x1]
    %v366 = vld [vmem:[#allocation7 + $0x1] sm:$0x1]
    %v367 = vadd.f32 %v303, %v306
    %v368 = vadd.f32 %v367, %v311
    %v369 = vadd.f32 %v368, %v314
    %v370 = vadd.f32 %v369, %v319
    %v371 = vadd.f32 %v370, %v322
    %v372 = vadd.f32 %v371, %v327
    %v373 = vadd.f32 %v372, %v330
    %v374 = vadd.f32 %v373, %v335
    %v375 = vadd.f32 %v374, %v338
    %v376 = vadd.f32 %v375, %v343
    %v377 = vadd.f32 %v376, %v346
    %v378 = vadd.f32 %v377, %v351
    %v379 = vadd.f32 %v378, %v354
    %v380 = vadd.f32 %v379, %v359
    %v381 = vadd.f32 %v380, %v362
    %v382 = vrot.slane %v381, 4
    %v383 = vadd.f32 %v381, %v382
    %v384 = vrot.slane %v383, 2
    %v385 = vadd.f32 %v383, %v384
    %v386 = vrot.slane %v385, 1
    %v387 = vadd.f32 %v385, %v386
    %v388 = vrcp.pop 128.0
    %v389 = vmul.f32 %v387, %v388
    %v390 = vmul.f32 %v303, %v303
    %v391 = vmul.f32 %v306, %v306
    %v392 = vmul.f32 %v311, %v311
    %v393 = vmul.f32 %v314, %v314
    %v394 = vmul.f32 %v319, %v319
    %v395 = vmul.f32 %v322, %v322
    %v396 = vmul.f32 %v327, %v327
    %v397 = vmul.f32 %v330, %v330
    %v398 = vmul.f32 %v335, %v335
    %v399 = vmul.f32 %v338, %v338
    %v400 = vmul.f32 %v343, %v343
    %v401 = vmul.f32 %v346, %v346
    %v402 = vmul.f32 %v351, %v351
    %v403 = vmul.f32 %v354, %v354
    %v404 = vmul.f32 %v359, %v359
    %v405 = vmul.f32 %v362, %v362
    %v406 = vadd.f32 %v390, %v391
    %v407 = vadd.f32 %v406, %v392
    %v408 = vadd.f32 %v407, %v393
    %v409 = vadd.f32 %v408, %v394
    %v410 = vadd.f32 %v409, %v395
    %v411 = vadd.f32 %v410, %v396
    %v412 = vadd.f32 %v411, %v397
    %v413 = vadd.f32 %v412, %v398
    %v414 = vadd.f32 %v413, %v399
    %v415 = vadd.f32 %v414, %v400
    %v416 = vadd.f32 %v415, %v401
    %v417 = vadd.f32 %v416, %v402
    %v418 = vadd.f32 %v417, %v403
    %v419 = vadd.f32 %v418, %v404
    %v420 = vadd.f32 %v419, %v405
    %v421 = vrot.slane %v420, 4
    %v422 = vadd.f32 %v420, %v421
    %v423 = vrot.slane %v422, 2
    %v424 = vadd.f32 %v422, %v423
    %v425 = vrot.slane %v424, 1
    %v426 = vadd.f32 %v424, %v425
    %v427 = vmul.f32 %v426, %v388
    %v428 = vmul.f32 %v389, %v389
    %v429 = vsub.f32 %v427, %v428
    %v430 = vmax.f32 %v429, 0.0
    %v431 = vadd.f32 %v430, 1e-05
    %v432 = vrsqrt.pop %v431
    %v433 = vmul.f32 %v365, %v432
    %v434 = vmul.f32 %v389, %v433
    %v435 = vsub.f32 %v366, %v434
    %v436 = vlaneseq
    %v437 = vshrl.u32 %v436, 7
    %v438 = vsub.s32 0, %v437
    %v439 = vrot.slane %v433, %v438
    %v440 = vmul.f32 %v303, %v439
    %v441 = vmul.f32 %v306, %v439
    %v442 = vmul.f32 %v311, %v439
    %v443 = vmul.f32 %v314, %v439
    %v444 = vmul.f32 %v319, %v439
    %v445 = vmul.f32 %v322, %v439
    %v446 = vmul.f32 %v327, %v439
    %v447 = vmul.f32 %v330, %v439
    %v448 = vmul.f32 %v335, %v439
    %v449 = vmul.f32 %v338, %v439
    %v450 = vmul.f32 %v343, %v439
    %v451 = vmul.f32 %v346, %v439
    %v452 = vmul.f32 %v351, %v439
    %v453 = vmul.f32 %v354, %v439
    %v454 = vmul.f32 %v359, %v439
    %v455 = vmul.f32 %v362, %v439
    %v456 = vlaneseq
    %v457 = vshrl.u32 %v456, 7
    %v458 = vsub.s32 0, %v457
    %v459 = vrot.slane %v435, %v458
    %v460 = vadd.f32 %v440, %v459
    %v461 = vadd.f32 %v441, %v459
    %v462 = vadd.f32 %v442, %v459
    %v463 = vadd.f32 %v443, %v459
    %v464 = vadd.f32 %v444, %v459
    %v465 = vadd.f32 %v445, %v459
    %v466 = vadd.f32 %v446, %v459
    %v467 = vadd.f32 %v447, %v459
    %v468 = vadd.f32 %v448, %v459
    %v469 = vadd.f32 %v449, %v459
    %v470 = vadd.f32 %v450, %v459
    %v471 = vadd.f32 %v451, %v459
    %v472 = vadd.f32 %v452, %v459
    %v473 = vadd.f32 %v453, %v459
    %v474 = vadd.f32 %v454, %v459
    %v475 = vadd.f32 %v455, %v459
    %v476 = vmul.f32 %v460, 0.01
    %v477 = vmul.f32 %v461, 0.01
    %v478 = vmul.f32 %v462, 0.01
    %v479 = vmul.f32 %v463, 0.01
    %v480 = vmul.f32 %v464, 0.01
    %v481 = vmul.f32 %v465, 0.01
    %v482 = vmul.f32 %v466, 0.01
    %v483 = vmul.f32 %v467, 0.01
    %v484 = vmul.f32 %v468, 0.01
    %v485 = vmul.f32 %v469, 0.01
    %v486 = vmul.f32 %v470, 0.01
    %v487 = vmul.f32 %v471, 0.01
    %v488 = vmul.f32 %v472, 0.01
    %v489 = vmul.f32 %v473, 0.01
    %v490 = vmul.f32 %v474, 0.01
    %v491 = vmul.f32 %v475, 0.01
    %v492 = vmax.f32 %v460, %v476
    %v493 = vmax.f32 %v461, %v477
    %v494 = vmax.f32 %v462, %v478
    %v495 = vmax.f32 %v463, %v479
    %v496 = vmax.f32 %v464, %v480
    %v497 = vmax.f32 %v465, %v481
    %v498 = vmax.f32 %v466, %v482
    %v499 = vmax.f32 %v467, %v483
    %v500 = vmax.f32 %v468, %v484
    %v501 = vmax.f32 %v469, %v485
    %v502 = vmax.f32 %v470, %v486
    %v503 = vmax.f32 %v471, %v487
    %v504 = vmax.f32 %v472, %v488
    %v505 = vmax.f32 %v473, %v489
    %v506 = vmax.f32 %v474, %v490
    %v507 = vmax.f32 %v475, %v491
    %v508 = vpack.c.bf16 %v493, %v492
    %v509 = vpack.c.bf16 %v495, %v494
    %v510 = vpack.c.bf16 %v497, %v496
    %v511 = vpack.c.bf16 %v499, %v498
    %v512 = vpack.c.bf16 %v501, %v500
    %v513 = vpack.c.bf16 %v503, %v502
    %v514 = vpack.c.bf16 %v505, %v504
    %v515 = vpack.c.bf16 %v507, %v506
    %v516 = vld [vmem:[#allocation8] sm:$0xf]
    %v517 = vld [vmem:[#allocation8 + $0x4] sm:$0xf]
    %v518 = vld [vmem:[#allocation8 + $0x8] sm:$0xf]
    %v519 = vld [vmem:[#allocation8 + $0xc] sm:$0xf]
    %v520 = vld [vmem:[#allocation8 + $0x10] sm:$0xf]
    %v521 = vld [vmem:[#allocation8 + $0x14] sm:$0xf]
    %v522 = vld [vmem:[#allocation8 + $0x18] sm:$0xf]
    %v523 = vld [vmem:[#allocation8 + $0x1c] sm:$0xf]
    %v524 = vld [vmem:[#allocation8 + $0x20] sm:$0xf]
    %v525 = vld [vmem:[#allocation8 + $0x24] sm:$0xf]
    %v526 = vld [vmem:[#allocation8 + $0x28] sm:$0xf]
    %v527 = vld [vmem:[#allocation8 + $0x2c] sm:$0xf]
    %v528 = vld [vmem:[#allocation8 + $0x30] sm:$0xf]
    %v529 = vld [vmem:[#allocation8 + $0x34] sm:$0xf]
    %v530 = vld [vmem:[#allocation8 + $0x38] sm:$0xf]
    %v531 = vld [vmem:[#allocation8 + $0x3c] sm:$0xf]
    %v532 = vld [vmem:[#allocation8 + $0x40] sm:$0xf]
    %v533 = vld [vmem:[#allocation8 + $0x44] sm:$0xf]
    %v534 = vld [vmem:[#allocation8 + $0x48] sm:$0xf]
    %v535 = vld [vmem:[#allocation8 + $0x4c] sm:$0xf]
    %v536 = vld [vmem:[#allocation8 + $0x50] sm:$0xf]
    %v537 = vld [vmem:[#allocation8 + $0x54] sm:$0xf]
    %v538 = vld [vmem:[#allocation8 + $0x58] sm:$0xf]
    %v539 = vld [vmem:[#allocation8 + $0x5c] sm:$0xf]
    %v540 = vld [vmem:[#allocation8 + $0x60] sm:$0xf]
    %v541 = vld [vmem:[#allocation8 + $0x64] sm:$0xf]
    %v542 = vld [vmem:[#allocation8 + $0x68] sm:$0xf]
    %v543 = vld [vmem:[#allocation8 + $0x6c] sm:$0xf]
    %v544 = vld [vmem:[#allocation8 + $0x70] sm:$0xf]
    %v545 = vld [vmem:[#allocation8 + $0x74] sm:$0xf]
    %v546 = vld [vmem:[#allocation8 + $0x78] sm:$0xf]
    %v547 = vld [vmem:[#allocation8 + $0x7c] sm:$0xf]
    %v548 = vld [vmem:[#allocation8 + $0x80] sm:$0xf]
    %v549 = vld [vmem:[#allocation8 + $0x84] sm:$0xf]
    %v550 = vld [vmem:[#allocation8 + $0x88] sm:$0xf]
    %v551 = vld [vmem:[#allocation8 + $0x8c] sm:$0xf]
    %v552 = vld [vmem:[#allocation8 + $0x90] sm:$0xf]
    %v553 = vld [vmem:[#allocation8 + $0x94] sm:$0xf]
    %v554 = vld [vmem:[#allocation8 + $0x98] sm:$0xf]
    %v555 = vld [vmem:[#allocation8 + $0x9c] sm:$0xf]
    %v556 = vld [vmem:[#allocation8 + $0xa0] sm:$0xf]
    %v557 = vld [vmem:[#allocation8 + $0xa4] sm:$0xf]
    %v558 = vld [vmem:[#allocation8 + $0xa8] sm:$0xf]
    %v559 = vld [vmem:[#allocation8 + $0xac] sm:$0xf]
    %v560 = vld [vmem:[#allocation8 + $0xb0] sm:$0xf]
    %v561 = vld [vmem:[#allocation8 + $0xb4] sm:$0xf]
    %v562 = vld [vmem:[#allocation8 + $0xb8] sm:$0xf]
    %v563 = vld [vmem:[#allocation8 + $0xbc] sm:$0xf]
    %v564 = vld [vmem:[#allocation8 + $0xc0] sm:$0xf]
    %v565 = vld [vmem:[#allocation8 + $0xc4] sm:$0xf]
    %v566 = vld [vmem:[#allocation8 + $0xc8] sm:$0xf]
    %v567 = vld [vmem:[#allocation8 + $0xcc] sm:$0xf]
    %v568 = vld [vmem:[#allocation8 + $0xd0] sm:$0xf]
    %v569 = vld [vmem:[#allocation8 + $0xd4] sm:$0xf]
    %v570 = vld [vmem:[#allocation8 + $0xd8] sm:$0xf]
    %v571 = vld [vmem:[#allocation8 + $0xdc] sm:$0xf]
    %v572 = vld [vmem:[#allocation8 + $0xe0] sm:$0xf]
    %v573 = vld [vmem:[#allocation8 + $0xe4] sm:$0xf]
    %v574 = vld [vmem:[#allocation8 + $0xe8] sm:$0xf]
    %v575 = vld [vmem:[#allocation8 + $0xec] sm:$0xf]
    %v576 = vld [vmem:[#allocation8 + $0xf0] sm:$0xf]
    %v577 = vld [vmem:[#allocation8 + $0xf4] sm:$0xf]
    %v578 = vld [vmem:[#allocation8 + $0xf8] sm:$0xf]
    %v579 = vld [vmem:[#allocation8 + $0xfc] sm:$0xf]
    %v644 = vunpack.c.l.b16 %v516
    %v645 = vunpack.c.l.b16 %v517
    %v646 = vunpack.c.l.b16 %v518
    %v647 = vunpack.c.l.b16 %v519
    %v648 = vunpack.c.l.b16 %v520
    %v649 = vunpack.c.l.b16 %v521
    %v650 = vunpack.c.l.b16 %v522
    %v651 = vunpack.c.l.b16 %v523
    %v652 = vunpack.c.l.b16 %v524
    %v653 = vunpack.c.l.b16 %v525
    %v654 = vunpack.c.l.b16 %v526
    %v655 = vunpack.c.l.b16 %v527
    %v656 = vunpack.c.l.b16 %v528
    %v657 = vunpack.c.l.b16 %v529
    %v658 = vunpack.c.l.b16 %v530
    %v659 = vunpack.c.l.b16 %v531
    %v660 = vunpack.c.l.b16 %v532
    %v661 = vunpack.c.l.b16 %v533
    %v662 = vunpack.c.l.b16 %v534
    %v663 = vunpack.c.l.b16 %v535
    %v664 = vunpack.c.l.b16 %v536
    %v665 = vunpack.c.l.b16 %v537
    %v666 = vunpack.c.l.b16 %v538
    %v667 = vunpack.c.l.b16 %v539
    %v668 = vunpack.c.l.b16 %v540
    %v669 = vunpack.c.l.b16 %v541
    %v670 = vunpack.c.l.b16 %v542
    %v671 = vunpack.c.l.b16 %v543
    %v672 = vunpack.c.l.b16 %v544
    %v673 = vunpack.c.l.b16 %v545
    %v674 = vunpack.c.l.b16 %v546
    %v675 = vunpack.c.l.b16 %v547
    %v676 = vunpack.c.l.b16 %v548
    %v677 = vunpack.c.l.b16 %v549
    %v678 = vunpack.c.l.b16 %v550
    %v679 = vunpack.c.l.b16 %v551
    %v680 = vunpack.c.l.b16 %v552
    %v681 = vunpack.c.l.b16 %v553
    %v682 = vunpack.c.l.b16 %v554
    %v683 = vunpack.c.l.b16 %v555
    %v684 = vunpack.c.l.b16 %v556
    %v685 = vunpack.c.l.b16 %v557
    %v686 = vunpack.c.l.b16 %v558
    %v687 = vunpack.c.l.b16 %v559
    %v688 = vunpack.c.l.b16 %v560
    %v689 = vunpack.c.l.b16 %v561
    %v690 = vunpack.c.l.b16 %v562
    %v691 = vunpack.c.l.b16 %v563
    %v692 = vunpack.c.l.b16 %v564
    %v693 = vunpack.c.l.b16 %v565
    %v694 = vunpack.c.l.b16 %v566
    %v695 = vunpack.c.l.b16 %v567
    %v696 = vunpack.c.l.b16 %v568
    %v697 = vunpack.c.l.b16 %v569
    %v698 = vunpack.c.l.b16 %v570
    %v699 = vunpack.c.l.b16 %v571
    %v700 = vunpack.c.l.b16 %v572
    %v701 = vunpack.c.l.b16 %v573
    %v702 = vunpack.c.l.b16 %v574
    %v703 = vunpack.c.l.b16 %v575
    %v704 = vunpack.c.l.b16 %v576
    %v705 = vunpack.c.l.b16 %v577
    %v706 = vunpack.c.l.b16 %v578
    %v707 = vunpack.c.l.b16 %v579
    %v708 = vpack.c.b16 %v645, %v644
    %v709 = vpack.c.b16 %v647, %v646
    %v710 = vpack.c.b16 %v649, %v648
    %v711 = vpack.c.b16 %v651, %v650
    %v712 = vpack.c.b16 %v653, %v652
    %v713 = vpack.c.b16 %v655, %v654
    %v714 = vpack.c.b16 %v657, %v656
    %v715 = vpack.c.b16 %v659, %v658
    %v716 = vpack.c.b16 %v661, %v660
    %v717 = vpack.c.b16 %v663, %v662
    %v718 = vpack.c.b16 %v665, %v664
    %v719 = vpack.c.b16 %v667, %v666
    %v720 = vpack.c.b16 %v669, %v668
    %v721 = vpack.c.b16 %v671, %v670
    %v722 = vpack.c.b16 %v673, %v672
    %v723 = vpack.c.b16 %v675, %v674
    %v724 = vpack.c.b16 %v677, %v676
    %v725 = vpack.c.b16 %v679, %v678
    %v726 = vpack.c.b16 %v681, %v680
    %v727 = vpack.c.b16 %v683, %v682
    %v728 = vpack.c.b16 %v685, %v684
    %v729 = vpack.c.b16 %v687, %v686
    %v730 = vpack.c.b16 %v689, %v688
    %v731 = vpack.c.b16 %v691, %v690
    %v732 = vpack.c.b16 %v693, %v692
    %v733 = vpack.c.b16 %v695, %v694
    %v734 = vpack.c.b16 %v697, %v696
    %v735 = vpack.c.b16 %v699, %v698
    %v736 = vpack.c.b16 %v701, %v700
    %v737 = vpack.c.b16 %v703, %v702
    %v738 = vpack.c.b16 %v705, %v704
    %v739 = vpack.c.b16 %v707, %v706
    %772 = vmatprep.subr.bf16.mxu0 0
    %773 = vmatpush1.bf16.msra.mxu0 %v515
    %774 = vmatprep.subr.bf16.mxu0 0
    %775 = vmatpush1.bf16.msra.mxu0 %v514
    %776 = vmatprep.subr.bf16.mxu0 0
    %777 = vmatpush1.bf16.msra.mxu0 %v513
    %778 = vmatprep.subr.bf16.mxu0 0
    %779 = vmatpush1.bf16.msra.mxu0 %v512
    %780 = vmatprep.subr.bf16.mxu0 0
    %781 = vmatpush1.bf16.msra.mxu0 %v511
    %782 = vmatprep.subr.bf16.mxu0 0
    %783 = vmatpush1.bf16.msra.mxu0 %v510
    %784 = vmatprep.subr.bf16.mxu0 0
    %785 = vmatpush1.bf16.msra.mxu0 %v509
    %786 = vmatprep.subr.bf16.mxu0 0
    %787 = vmatpush1.bf16.msra.mxu0 %v508
    %788 = vmatprep.subr.bf16.mxu0 0
    %789 = vmatpush2.bf16.msra.mxu0 0
    %790 = vmatprep.subr.bf16.mxu0 0
    %791 = vmatpush2.bf16.msra.mxu0 0
    %792 = vmatprep.subr.bf16.mxu0 0
    %793 = vmatpush2.bf16.msra.mxu0 0
    %794 = vmatprep.subr.bf16.mxu0 0
    %795 = vmatpush2.bf16.msra.mxu0 0
    %796 = vmatprep.subr.bf16.mxu0 0
    %797 = vmatpush2.bf16.msra.mxu0 0
    %798 = vmatprep.subr.bf16.mxu0 0
    %799 = vmatpush2.bf16.msra.mxu0 0
    %800 = vmatprep.subr.bf16.mxu0 0
    %801 = vmatpush2.bf16.msra.mxu0 0
    %802 = vmatprep.subr.bf16.mxu0 0
    %803 = vmatpush2.bf16.msra.mxu0 0
    %804 = vmatprep.mubr.bf16.mxu0 0
    %805 = vmatmul.mubr.bf16.gmra.mxu0 %v708
    %v806 = vpop.f32.mrf.mxu0
    %v807 = vadd.f32 0.0, %v806
    %v808 = vpop.f32.mrf.mxu0
    %v809 = vpop.f32.mrf.mxu0
    %v810 = vadd.f32 0.0, %v809
    %v811 = vpop.f32.mrf.mxu0
    %812 = vmatprep.mubr.bf16.mxu0 0
    %813 = vmatmul.mubr.bf16.gmra.mxu0 %v709
    %v814 = vpop.f32.mrf.mxu0
    %v815 = vadd.f32 0.0, %v814
    %v816 = vpop.f32.mrf.mxu0
    %v817 = vpop.f32.mrf.mxu0
    %v818 = vadd.f32 0.0, %v817
    %v819 = vpop.f32.mrf.mxu0
    %820 = vmatprep.mubr.bf16.mxu0 0
    %821 = vmatmul.mubr.bf16.gmra.mxu0 %v710
    %v822 = vpop.f32.mrf.mxu0
    %v823 = vadd.f32 0.0, %v822
    %v824 = vpop.f32.mrf.mxu0
    %v825 = vpop.f32.mrf.mxu0
    %v826 = vadd.f32 0.0, %v825
    %v827 = vpop.f32.mrf.mxu0
    %828 = vmatprep.mubr.bf16.mxu0 0
    %829 = vmatmul.mubr.bf16.gmra.mxu0 %v711
    %v830 = vpop.f32.mrf.mxu0
    %v831 = vadd.f32 0.0, %v830
    %v832 = vpop.f32.mrf.mxu0
    %v833 = vpop.f32.mrf.mxu0
    %v834 = vadd.f32 0.0, %v833
    %v835 = vpop.f32.mrf.mxu0
    %836 = vmatprep.mubr.bf16.mxu0 0
    %837 = vmatmul.mubr.bf16.gmra.mxu0 %v712
    %v838 = vpop.f32.mrf.mxu0
    %v839 = vadd.f32 0.0, %v838
    %v840 = vpop.f32.mrf.mxu0
    %v841 = vpop.f32.mrf.mxu0
    %v842 = vadd.f32 0.0, %v841
    %v843 = vpop.f32.mrf.mxu0
    %844 = vmatprep.mubr.bf16.mxu0 0
    %845 = vmatmul.mubr.bf16.gmra.mxu0 %v713
    %v846 = vpop.f32.mrf.mxu0
    %v847 = vadd.f32 0.0, %v846
    %v848 = vpop.f32.mrf.mxu0
    %v849 = vpop.f32.mrf.mxu0
    %v850 = vadd.f32 0.0, %v849
    %v851 = vpop.f32.mrf.mxu0
    %852 = vmatprep.mubr.bf16.mxu0 0
    %853 = vmatmul.mubr.bf16.gmra.mxu0 %v714
    %v854 = vpop.f32.mrf.mxu0
    %v855 = vadd.f32 0.0, %v854
    %v856 = vpop.f32.mrf.mxu0
    %v857 = vpop.f32.mrf.mxu0
    %v858 = vadd.f32 0.0, %v857
    %v859 = vpop.f32.mrf.mxu0
    %860 = vmatprep.mubr.bf16.mxu0 0
    %861 = vmatmul.mubr.bf16.gmra.mxu0 %v715
    %v862 = vpop.f32.mrf.mxu0
    %v863 = vadd.f32 0.0, %v862
    %v864 = vpop.f32.mrf.mxu0
    %v865 = vpop.f32.mrf.mxu0
    %v866 = vadd.f32 0.0, %v865
    %v867 = vpop.f32.mrf.mxu0
    %868 = vmatprep.mubr.bf16.mxu0 0
    %869 = vmatmul.mubr.bf16.gmra.mxu0 %v716
    %v870 = vpop.f32.mrf.mxu0
    %v871 = vadd.f32 0.0, %v870
    %v872 = vpop.f32.mrf.mxu0
    %v873 = vpop.f32.mrf.mxu0
    %v874 = vadd.f32 0.0, %v873
    %v875 = vpop.f32.mrf.mxu0
    %876 = vmatprep.mubr.bf16.mxu0 0
    %877 = vmatmul.mubr.bf16.gmra.mxu0 %v717
    %v878 = vpop.f32.mrf.mxu0
    %v879 = vadd.f32 0.0, %v878
    %v880 = vpop.f32.mrf.mxu0
    %v881 = vpop.f32.mrf.mxu0
    %v882 = vadd.f32 0.0, %v881
    %v883 = vpop.f32.mrf.mxu0
    %884 = vmatprep.mubr.bf16.mxu0 0
    %885 = vmatmul.mubr.bf16.gmra.mxu0 %v718
    %v886 = vpop.f32.mrf.mxu0
    %v887 = vadd.f32 0.0, %v886
    %v888 = vpop.f32.mrf.mxu0
    %v889 = vpop.f32.mrf.mxu0
    %v890 = vadd.f32 0.0, %v889
    %v891 = vpop.f32.mrf.mxu0
    %892 = vmatprep.mubr.bf16.mxu0 0
    %893 = vmatmul.mubr.bf16.gmra.mxu0 %v719
    %v894 = vpop.f32.mrf.mxu0
    %v895 = vadd.f32 0.0, %v894
    %v896 = vpop.f32.mrf.mxu0
    %v897 = vpop.f32.mrf.mxu0
    %v898 = vadd.f32 0.0, %v897
    %v899 = vpop.f32.mrf.mxu0
    %900 = vmatprep.mubr.bf16.mxu0 0
    %901 = vmatmul.mubr.bf16.gmra.mxu0 %v720
    %v902 = vpop.f32.mrf.mxu0
    %v903 = vadd.f32 0.0, %v902
    %v904 = vpop.f32.mrf.mxu0
    %v905 = vpop.f32.mrf.mxu0
    %v906 = vadd.f32 0.0, %v905
    %v907 = vpop.f32.mrf.mxu0
    %908 = vmatprep.mubr.bf16.mxu0 0
    %909 = vmatmul.mubr.bf16.gmra.mxu0 %v721
    %v910 = vpop.f32.mrf.mxu0
    %v911 = vadd.f32 0.0, %v910
    %v912 = vpop.f32.mrf.mxu0
    %v913 = vpop.f32.mrf.mxu0
    %v914 = vadd.f32 0.0, %v913
    %v915 = vpop.f32.mrf.mxu0
    %916 = vmatprep.mubr.bf16.mxu0 0
    %917 = vmatmul.mubr.bf16.gmra.mxu0 %v722
    %v918 = vpop.f32.mrf.mxu0
    %v919 = vadd.f32 0.0, %v918
    %v920 = vpop.f32.mrf.mxu0
    %v921 = vpop.f32.mrf.mxu0
    %v922 = vadd.f32 0.0, %v921
    %v923 = vpop.f32.mrf.mxu0
    %924 = vmatprep.mubr.bf16.mxu0 0
    %925 = vmatmul.mubr.bf16.gmra.mxu0 %v723
    %v926 = vpop.f32.mrf.mxu0
    %v927 = vadd.f32 0.0, %v926
    %v928 = vpop.f32.mrf.mxu0
    %v929 = vpop.f32.mrf.mxu0
    %v930 = vadd.f32 0.0, %v929
    %v931 = vpop.f32.mrf.mxu0
    %932 = vmatprep.mubr.bf16.mxu0 0
    %933 = vmatmul.mubr.bf16.gmra.mxu0 %v724
    %v934 = vpop.f32.mrf.mxu0
    %v935 = vadd.f32 0.0, %v934
    %v936 = vpop.f32.mrf.mxu0
    %v937 = vpop.f32.mrf.mxu0
    %v938 = vadd.f32 0.0, %v937
    %v939 = vpop.f32.mrf.mxu0
    %940 = vmatprep.mubr.bf16.mxu0 0
    %941 = vmatmul.mubr.bf16.gmra.mxu0 %v725
    %v942 = vpop.f32.mrf.mxu0
    %v943 = vadd.f32 0.0, %v942
    %v944 = vpop.f32.mrf.mxu0
    %v945 = vpop.f32.mrf.mxu0
    %v946 = vadd.f32 0.0, %v945
    %v947 = vpop.f32.mrf.mxu0
    %948 = vmatprep.mubr.bf16.mxu0 0
    %949 = vmatmul.mubr.bf16.gmra.mxu0 %v726
    %v950 = vpop.f32.mrf.mxu0
    %v951 = vadd.f32 0.0, %v950
    %v952 = vpop.f32.mrf.mxu0
    %v953 = vpop.f32.mrf.mxu0
    %v954 = vadd.f32 0.0, %v953
    %v955 = vpop.f32.mrf.mxu0
    %956 = vmatprep.mubr.bf16.mxu0 0
    %957 = vmatmul.mubr.bf16.gmra.mxu0 %v727
    %v958 = vpop.f32.mrf.mxu0
    %v959 = vadd.f32 0.0, %v958
    %v960 = vpop.f32.mrf.mxu0
    %v961 = vpop.f32.mrf.mxu0
    %v962 = vadd.f32 0.0, %v961
    %v963 = vpop.f32.mrf.mxu0
    %964 = vmatprep.mubr.bf16.mxu0 0
    %965 = vmatmul.mubr.bf16.gmra.mxu0 %v728
    %v966 = vpop.f32.mrf.mxu0
    %v967 = vadd.f32 0.0, %v966
    %v968 = vpop.f32.mrf.mxu0
    %v969 = vpop.f32.mrf.mxu0
    %v970 = vadd.f32 0.0, %v969
    %v971 = vpop.f32.mrf.mxu0
    %972 = vmatprep.mubr.bf16.mxu0 0
    %973 = vmatmul.mubr.bf16.gmra.mxu0 %v729
    %v974 = vpop.f32.mrf.mxu0
    %v975 = vadd.f32 0.0, %v974
    %v976 = vpop.f32.mrf.mxu0
    %v977 = vpop.f32.mrf.mxu0
    %v978 = vadd.f32 0.0, %v977
    %v979 = vpop.f32.mrf.mxu0
    %980 = vmatprep.mubr.bf16.mxu0 0
    %981 = vmatmul.mubr.bf16.gmra.mxu0 %v730
    %v982 = vpop.f32.mrf.mxu0
    %v983 = vadd.f32 0.0, %v982
    %v984 = vpop.f32.mrf.mxu0
    %v985 = vpop.f32.mrf.mxu0
    %v986 = vadd.f32 0.0, %v985
    %v987 = vpop.f32.mrf.mxu0
    %988 = vmatprep.mubr.bf16.mxu0 0
    %989 = vmatmul.mubr.bf16.gmra.mxu0 %v731
    %v990 = vpop.f32.mrf.mxu0
    %v991 = vadd.f32 0.0, %v990
    %v992 = vpop.f32.mrf.mxu0
    %v993 = vpop.f32.mrf.mxu0
    %v994 = vadd.f32 0.0, %v993
    %v995 = vpop.f32.mrf.mxu0
    %996 = vmatprep.mubr.bf16.mxu0 0
    %997 = vmatmul.mubr.bf16.gmra.mxu0 %v732
    %v998 = vpop.f32.mrf.mxu0
    %v999 = vadd.f32 0.0, %v998
    %v1000 = vpop.f32.mrf.mxu0
    %v1001 = vpop.f32.mrf.mxu0
    %v1002 = vadd.f32 0.0, %v1001
    %v1003 = vpop.f32.mrf.mxu0
    %1004 = vmatprep.mubr.bf16.mxu0 0
    %1005 = vmatmul.mubr.bf16.gmra.mxu0 %v733
    %v1006 = vpop.f32.mrf.mxu0
    %v1007 = vadd.f32 0.0, %v1006
    %v1008 = vpop.f32.mrf.mxu0
    %v1009 = vpop.f32.mrf.mxu0
    %v1010 = vadd.f32 0.0, %v1009
    %v1011 = vpop.f32.mrf.mxu0
    %1012 = vmatprep.mubr.bf16.mxu0 0
    %1013 = vmatmul.mubr.bf16.gmra.mxu0 %v734
    %v1014 = vpop.f32.mrf.mxu0
    %v1015 = vadd.f32 0.0, %v1014
    %v1016 = vpop.f32.mrf.mxu0
    %v1017 = vpop.f32.mrf.mxu0
    %v1018 = vadd.f32 0.0, %v1017
    %v1019 = vpop.f32.mrf.mxu0
    %1020 = vmatprep.mubr.bf16.mxu0 0
    %1021 = vmatmul.mubr.bf16.gmra.mxu0 %v735
    %v1022 = vpop.f32.mrf.mxu0
    %v1023 = vadd.f32 0.0, %v1022
    %v1024 = vpop.f32.mrf.mxu0
    %v1025 = vpop.f32.mrf.mxu0
    %v1026 = vadd.f32 0.0, %v1025
    %v1027 = vpop.f32.mrf.mxu0
    %1028 = vmatprep.mubr.bf16.mxu0 0
    %1029 = vmatmul.mubr.bf16.gmra.mxu0 %v736
    %v1030 = vpop.f32.mrf.mxu0
    %v1031 = vadd.f32 0.0, %v1030
    %v1032 = vpop.f32.mrf.mxu0
    %v1033 = vpop.f32.mrf.mxu0
    %v1034 = vadd.f32 0.0, %v1033
    %v1035 = vpop.f32.mrf.mxu0
    %1036 = vmatprep.mubr.bf16.mxu0 0
    %1037 = vmatmul.mubr.bf16.gmra.mxu0 %v737
    %v1038 = vpop.f32.mrf.mxu0
    %v1039 = vadd.f32 0.0, %v1038
    %v1040 = vpop.f32.mrf.mxu0
    %v1041 = vpop.f32.mrf.mxu0
    %v1042 = vadd.f32 0.0, %v1041
    %v1043 = vpop.f32.mrf.mxu0
    %1044 = vmatprep.mubr.bf16.mxu0 0
    %1045 = vmatmul.mubr.bf16.gmra.mxu0 %v738
    %v1046 = vpop.f32.mrf.mxu0
    %v1047 = vadd.f32 0.0, %v1046
    %v1048 = vpop.f32.mrf.mxu0
    %v1049 = vpop.f32.mrf.mxu0
    %v1050 = vadd.f32 0.0, %v1049
    %v1051 = vpop.f32.mrf.mxu0
    %1052 = vmatprep.mubr.bf16.mxu0 0
    %1053 = vmatmul.mubr.bf16.gmra.mxu0 %v739
    %v1054 = vpop.f32.mrf.mxu0
    %v1055 = vadd.f32 0.0, %v1054
    %v1056 = vpop.f32.mrf.mxu0
    %v1057 = vpop.f32.mrf.mxu0
    %v1058 = vadd.f32 0.0, %v1057
    %v1059 = vpop.f32.mrf.mxu0
    %1060 = vdwg.mxu0
    %v1061 = vpack.c.bf16 %v810, %v807
    %v1062 = vpack.c.bf16 %v818, %v815
    %v1063 = vpack.c.bf16 %v826, %v823
    %v1064 = vpack.c.bf16 %v834, %v831
    %v1065 = vpack.c.bf16 %v842, %v839
    %v1066 = vpack.c.bf16 %v850, %v847
    %v1067 = vpack.c.bf16 %v858, %v855
    %v1068 = vpack.c.bf16 %v866, %v863
    %v1069 = vpack.c.bf16 %v874, %v871
    %v1070 = vpack.c.bf16 %v882, %v879
    %v1071 = vpack.c.bf16 %v890, %v887
    %v1072 = vpack.c.bf16 %v898, %v895
    %v1073 = vpack.c.bf16 %v906, %v903
    %v1074 = vpack.c.bf16 %v914, %v911
    %v1075 = vpack.c.bf16 %v922, %v919
    %v1076 = vpack.c.bf16 %v930, %v927
    %v1077 = vpack.c.bf16 %v938, %v935
    %v1078 = vpack.c.bf16 %v946, %v943
    %v1079 = vpack.c.bf16 %v954, %v951
    %v1080 = vpack.c.bf16 %v962, %v959
    %v1081 = vpack.c.bf16 %v970, %v967
    %v1082 = vpack.c.bf16 %v978, %v975
    %v1083 = vpack.c.bf16 %v986, %v983
    %v1084 = vpack.c.bf16 %v994, %v991
    %v1085 = vpack.c.bf16 %v1002, %v999
    %v1086 = vpack.c.bf16 %v1010, %v1007
    %v1087 = vpack.c.bf16 %v1018, %v1015
    %v1088 = vpack.c.bf16 %v1026, %v1023
    %v1089 = vpack.c.bf16 %v1034, %v1031
    %v1090 = vpack.c.bf16 %v1042, %v1039
    %v1091 = vpack.c.bf16 %v1050, %v1047
    %v1092 = vpack.c.bf16 %v1058, %v1055
    %v1093 = vld [vmem:[#allocation10] sm:$0xf]
    %v1094 = vld [vmem:[#allocation10 + $0x4] sm:$0xf]
    %v1095 = vld [vmem:[#allocation10 + $0x8] sm:$0xf]
    %v1096 = vld [vmem:[#allocation10 + $0xc] sm:$0xf]
    %v1097 = vld [vmem:[#allocation10 + $0x10] sm:$0xf]
    %v1098 = vld [vmem:[#allocation10 + $0x14] sm:$0xf]
    %v1099 = vld [vmem:[#allocation10 + $0x18] sm:$0xf]
    %v1100 = vld [vmem:[#allocation10 + $0x1c] sm:$0xf]
    %v1101 = vld [vmem:[#allocation10 + $0x20] sm:$0xf]
    %v1102 = vld [vmem:[#allocation10 + $0x24] sm:$0xf]
    %v1103 = vld [vmem:[#allocation10 + $0x28] sm:$0xf]
    %v1104 = vld [vmem:[#allocation10 + $0x2c] sm:$0xf]
    %v1105 = vld [vmem:[#allocation10 + $0x30] sm:$0xf]
    %v1106 = vld [vmem:[#allocation10 + $0x34] sm:$0xf]
    %v1107 = vld [vmem:[#allocation10 + $0x38] sm:$0xf]
    %v1108 = vld [vmem:[#allocation10 + $0x3c] sm:$0xf]
    %v1109 = vld [vmem:[#allocation10 + $0x40] sm:$0xf]
    %v1110 = vld [vmem:[#allocation10 + $0x44] sm:$0xf]
    %v1111 = vld [vmem:[#allocation10 + $0x48] sm:$0xf]
    %v1112 = vld [vmem:[#allocation10 + $0x4c] sm:$0xf]
    %v1113 = vld [vmem:[#allocation10 + $0x50] sm:$0xf]
    %v1114 = vld [vmem:[#allocation10 + $0x54] sm:$0xf]
    %v1115 = vld [vmem:[#allocation10 + $0x58] sm:$0xf]
    %v1116 = vld [vmem:[#allocation10 + $0x5c] sm:$0xf]
    %v1117 = vld [vmem:[#allocation10 + $0x60] sm:$0xf]
    %v1118 = vld [vmem:[#allocation10 + $0x64] sm:$0xf]
    %v1119 = vld [vmem:[#allocation10 + $0x68] sm:$0xf]
    %v1120 = vld [vmem:[#allocation10 + $0x6c] sm:$0xf]
    %v1121 = vld [vmem:[#allocation10 + $0x70] sm:$0xf]
    %v1122 = vld [vmem:[#allocation10 + $0x74] sm:$0xf]
    %v1123 = vld [vmem:[#allocation10 + $0x78] sm:$0xf]
    %v1124 = vld [vmem:[#allocation10 + $0x7c] sm:$0xf]
    %v1141 = vunpack.c.l.b16 %v1109
    %v1142 = vunpack.c.l.b16 %v1110
    %v1143 = vunpack.c.l.b16 %v1111
    %v1144 = vunpack.c.l.b16 %v1112
    %v1145 = vunpack.c.l.b16 %v1113
    %v1146 = vunpack.c.l.b16 %v1114
    %v1147 = vunpack.c.l.b16 %v1115
    %v1148 = vunpack.c.l.b16 %v1116
    %v1149 = vunpack.c.l.b16 %v1117
    %v1150 = vunpack.c.l.b16 %v1118
    %v1151 = vunpack.c.l.b16 %v1119
    %v1152 = vunpack.c.l.b16 %v1120
    %v1153 = vunpack.c.l.b16 %v1121
    %v1154 = vunpack.c.l.b16 %v1122
    %v1155 = vunpack.c.l.b16 %v1123
    %v1156 = vunpack.c.l.b16 %v1124
    %v1157 = vpack.c.b16 %v1142, %v1141
    %v1158 = vpack.c.b16 %v1144, %v1143
    %v1159 = vpack.c.b16 %v1146, %v1145
    %v1160 = vpack.c.b16 %v1148, %v1147
    %v1161 = vpack.c.b16 %v1150, %v1149
    %v1162 = vpack.c.b16 %v1152, %v1151
    %v1163 = vpack.c.b16 %v1154, %v1153
    %v1164 = vpack.c.b16 %v1156, %v1155
    %1173 = vmatprep.subr.bf16.mxu0 0
    %1174 = vmatpush1.bf16.msra.mxu0 %v1164
    %1175 = vmatprep.subr.bf16.mxu0 0
    %1176 = vmatpush1.bf16.msra.mxu0 %v1163
    %1177 = vmatprep.subr.bf16.mxu0 0
    %1178 = vmatpush1.bf16.msra.mxu0 %v1162
    %1179 = vmatprep.subr.bf16.mxu0 0
    %1180 = vmatpush1.bf16.msra.mxu0 %v1161
    %1181 = vmatprep.subr.bf16.mxu0 0
    %1182 = vmatpush1.bf16.msra.mxu0 %v1160
    %1183 = vmatprep.subr.bf16.mxu0 0
    %1184 = vmatpush1.bf16.msra.mxu0 %v1159
    %1185 = vmatprep.subr.bf16.mxu0 0
    %1186 = vmatpush1.bf16.msra.mxu0 %v1158
    %1187 = vmatprep.subr.bf16.mxu0 0
    %1188 = vmatpush1.bf16.msra.mxu0 %v1157
    %1189 = vmatprep.subr.bf16.mxu0 0
    %1190 = vmatpush2.bf16.msra.mxu0 0
    %1191 = vmatprep.subr.bf16.mxu0 0
    %1192 = vmatpush2.bf16.msra.mxu0 0
    %1193 = vmatprep.subr.bf16.mxu0 0
    %1194 = vmatpush2.bf16.msra.mxu0 0
    %1195 = vmatprep.subr.bf16.mxu0 0
    %1196 = vmatpush2.bf16.msra.mxu0 0
    %1197 = vmatprep.subr.bf16.mxu0 0
    %1198 = vmatpush2.bf16.msra.mxu0 0
    %1199 = vmatprep.subr.bf16.mxu0 0
    %1200 = vmatpush2.bf16.msra.mxu0 0
    %1201 = vmatprep.subr.bf16.mxu0 0
    %1202 = vmatpush2.bf16.msra.mxu0 0
    %1203 = vmatprep.subr.bf16.mxu0 0
    %1204 = vmatpush2.bf16.msra.mxu0 0
    %1205 = vmatprep.mubr.bf16.mxu0 0
    %1206 = vmatmul.mubr.bf16.gmra.mxu0 %v1063
    %v1207 = vpop.f32.mrf.mxu0
    %v1208 = vadd.f32 0.0, %v1207
    %v1209 = vpop.f32.mrf.mxu0
    %v1210 = vpop.f32.mrf.mxu0
    %v1211 = vadd.f32 0.0, %v1210
    %v1212 = vpop.f32.mrf.mxu0
    %1213 = vmatprep.mubr.bf16.mxu0 0
    %1214 = vmatmul.mubr.bf16.gmra.mxu0 %v1064
    %v1215 = vpop.f32.mrf.mxu0
    %v1216 = vadd.f32 0.0, %v1215
    %v1217 = vpop.f32.mrf.mxu0
    %v1218 = vpop.f32.mrf.mxu0
    %v1219 = vadd.f32 0.0, %v1218
    %v1220 = vpop.f32.mrf.mxu0
    %1221 = vdwg.mxu0
    %v1238 = vunpack.c.l.b16 %v1093
    %v1239 = vunpack.c.l.b16 %v1094
    %v1240 = vunpack.c.l.b16 %v1095
    %v1241 = vunpack.c.l.b16 %v1096
    %v1242 = vunpack.c.l.b16 %v1097
    %v1243 = vunpack.c.l.b16 %v1098
    %v1244 = vunpack.c.l.b16 %v1099
    %v1245 = vunpack.c.l.b16 %v1100
    %v1246 = vunpack.c.l.b16 %v1101
    %v1247 = vunpack.c.l.b16 %v1102
    %v1248 = vunpack.c.l.b16 %v1103
    %v1249 = vunpack.c.l.b16 %v1104
    %v1250 = vunpack.c.l.b16 %v1105
    %v1251 = vunpack.c.l.b16 %v1106
    %v1252 = vunpack.c.l.b16 %v1107
    %v1253 = vunpack.c.l.b16 %v1108
    %v1254 = vpack.c.b16 %v1239, %v1238
    %v1255 = vpack.c.b16 %v1241, %v1240
    %v1256 = vpack.c.b16 %v1243, %v1242
    %v1257 = vpack.c.b16 %v1245, %v1244
    %v1258 = vpack.c.b16 %v1247, %v1246
    %v1259 = vpack.c.b16 %v1249, %v1248
    %v1260 = vpack.c.b16 %v1251, %v1250
    %v1261 = vpack.c.b16 %v1253, %v1252
    %1270 = vmatprep.subr.bf16.mxu0 0
    %1271 = vmatpush1.bf16.msra.mxu0 %v1261
    %1272 = vmatprep.subr.bf16.mxu0 0
    %1273 = vmatpush1.bf16.msra.mxu0 %v1260
    %1274 = vmatprep.subr.bf16.mxu0 0
    %1275 = vmatpush1.bf16.msra.mxu0 %v1259
    %1276 = vmatprep.subr.bf16.mxu0 0
    %1277 = vmatpush1.bf16.msra.mxu0 %v1258
    %1278 = vmatprep.subr.bf16.mxu0 0
    %1279 = vmatpush1.bf16.msra.mxu0 %v1257
    %1280 = vmatprep.subr.bf16.mxu0 0
    %1281 = vmatpush1.bf16.msra.mxu0 %v1256
    %1282 = vmatprep.subr.bf16.mxu0 0
    %1283 = vmatpush1.bf16.msra.mxu0 %v1255
    %1284 = vmatprep.subr.bf16.mxu0 0
    %1285 = vmatpush1.bf16.msra.mxu0 %v1254
    %1286 = vmatprep.subr.bf16.mxu0 0
    %1287 = vmatpush2.bf16.msra.mxu0 0
    %1288 = vmatprep.subr.bf16.mxu0 0
    %1289 = vmatpush2.bf16.msra.mxu0 0
    %1290 = vmatprep.subr.bf16.mxu0 0
    %1291 = vmatpush2.bf16.msra.mxu0 0
    %1292 = vmatprep.subr.bf16.mxu0 0
    %1293 = vmatpush2.bf16.msra.mxu0 0
    %1294 = vmatprep.subr.bf16.mxu0 0
    %1295 = vmatpush2.bf16.msra.mxu0 0
    %1296 = vmatprep.subr.bf16.mxu0 0
    %1297 = vmatpush2.bf16.msra.mxu0 0
    %1298 = vmatprep.subr.bf16.mxu0 0
    %1299 = vmatpush2.bf16.msra.mxu0 0
    %1300 = vmatprep.subr.bf16.mxu0 0
    %1301 = vmatpush2.bf16.msra.mxu0 0
    %1302 = vmatprep.mubr.bf16.mxu0 0
    %1303 = vmatmul.mubr.bf16.gmra.mxu0 %v1061
    %v1304 = vpop.f32.mrf.mxu0
    %v1305 = vadd.f32 %v1208, %v1304
    %v1306 = vpop.f32.mrf.mxu0
    %v1307 = vpop.f32.mrf.mxu0
    %v1308 = vadd.f32 %v1211, %v1307
    %v1309 = vpop.f32.mrf.mxu0
    %1310 = vmatprep.mubr.bf16.mxu0 0
    %1311 = vmatmul.mubr.bf16.gmra.mxu0 %v1062
    %v1312 = vpop.f32.mrf.mxu0
    %v1313 = vadd.f32 %v1216, %v1312
    %v1314 = vpop.f32.mrf.mxu0
    %v1315 = vpop.f32.mrf.mxu0
    %v1316 = vadd.f32 %v1219, %v1315
    %v1317 = vpop.f32.mrf.mxu0
    %1318 = vdwg.mxu0
    %v1319 = vld [vmem:[#allocation10 + $0x80] sm:$0xf]
    %v1320 = vld [vmem:[#allocation10 + $0x84] sm:$0xf]
    %v1321 = vld [vmem:[#allocation10 + $0x88] sm:$0xf]
    %v1322 = vld [vmem:[#allocation10 + $0x8c] sm:$0xf]
    %v1323 = vld [vmem:[#allocation10 + $0x90] sm:$0xf]
    %v1324 = vld [vmem:[#allocation10 + $0x94] sm:$0xf]
    %v1325 = vld [vmem:[#allocation10 + $0x98] sm:$0xf]
    %v1326 = vld [vmem:[#allocation10 + $0x9c] sm:$0xf]
    %v1327 = vld [vmem:[#allocation10 + $0xa0] sm:$0xf]
    %v1328 = vld [vmem:[#allocation10 + $0xa4] sm:$0xf]
    %v1329 = vld [vmem:[#allocation10 + $0xa8] sm:$0xf]
    %v1330 = vld [vmem:[#allocation10 + $0xac] sm:$0xf]
    %v1331 = vld [vmem:[#allocation10 + $0xb0] sm:$0xf]
    %v1332 = vld [vmem:[#allocation10 + $0xb4] sm:$0xf]
    %v1333 = vld [vmem:[#allocation10 + $0xb8] sm:$0xf]
    %v1334 = vld [vmem:[#allocation10 + $0xbc] sm:$0xf]
    %v1351 = vunpack.c.l.b16 %v1319
    %v1352 = vunpack.c.l.b16 %v1320
    %v1353 = vunpack.c.l.b16 %v1321
    %v1354 = vunpack.c.l.b16 %v1322
    %v1355 = vunpack.c.l.b16 %v1323
    %v1356 = vunpack.c.l.b16 %v1324
    %v1357 = vunpack.c.l.b16 %v1325
    %v1358 = vunpack.c.l.b16 %v1326
    %v1359 = vunpack.c.l.b16 %v1327
    %v1360 = vunpack.c.l.b16 %v1328
    %v1361 = vunpack.c.l.b16 %v1329
    %v1362 = vunpack.c.l.b16 %v1330
    %v1363 = vunpack.c.l.b16 %v1331
    %v1364 = vunpack.c.l.b16 %v1332
    %v1365 = vunpack.c.l.b16 %v1333
    %v1366 = vunpack.c.l.b16 %v1334
    %v1367 = vpack.c.b16 %v1352, %v1351
    %v1368 = vpack.c.b16 %v1354, %v1353
    %v1369 = vpack.c.b16 %v1356, %v1355
    %v1370 = vpack.c.b16 %v1358, %v1357
    %v1371 = vpack.c.b16 %v1360, %v1359
    %v1372 = vpack.c.b16 %v1362, %v1361
    %v1373 = vpack.c.b16 %v1364, %v1363
    %v1374 = vpack.c.b16 %v1366, %v1365
    %1383 = vmatprep.subr.bf16.mxu0 0
    %1384 = vmatpush1.bf16.msra.mxu0 %v1374
    %1385 = vmatprep.subr.bf16.mxu0 0
    %1386 = vmatpush1.bf16.msra.mxu0 %v1373
    %1387 = vmatprep.subr.bf16.mxu0 0
    %1388 = vmatpush1.bf16.msra.mxu0 %v1372
    %1389 = vmatprep.subr.bf16.mxu0 0
    %1390 = vmatpush1.bf16.msra.mxu0 %v1371
    %1391 = vmatprep.subr.bf16.mxu0 0
    %1392 = vmatpush1.bf16.msra.mxu0 %v1370
    %1393 = vmatprep.subr.bf16.mxu0 0
    %1394 = vmatpush1.bf16.msra.mxu0 %v1369
    %1395 = vmatprep.subr.bf16.mxu0 0
    %1396 = vmatpush1.bf16.msra.mxu0 %v1368
    %1397 = vmatprep.subr.bf16.mxu0 0
    %1398 = vmatpush1.bf16.msra.mxu0 %v1367
    %1399 = vmatprep.subr.bf16.mxu0 0
    %1400 = vmatpush2.bf16.msra.mxu0 0
    %1401 = vmatprep.subr.bf16.mxu0 0
    %1402 = vmatpush2.bf16.msra.mxu0 0
    %1403 = vmatprep.subr.bf16.mxu0 0
    %1404 = vmatpush2.bf16.msra.mxu0 0
    %1405 = vmatprep.subr.bf16.mxu0 0
    %1406 = vmatpush2.bf16.msra.mxu0 0
    %1407 = vmatprep.subr.bf16.mxu0 0
    %1408 = vmatpush2.bf16.msra.mxu0 0
    %1409 = vmatprep.subr.bf16.mxu0 0
    %1410 = vmatpush2.bf16.msra.mxu0 0
    %1411 = vmatprep.subr.bf16.mxu0 0
    %1412 = vmatpush2.bf16.msra.mxu0 0
    %1413 = vmatprep.subr.bf16.mxu0 0
    %1414 = vmatpush2.bf16.msra.mxu0 0
    %1415 = vmatprep.mubr.bf16.mxu0 0
    %1416 = vmatmul.mubr.bf16.gmra.mxu0 %v1065
    %v1417 = vpop.f32.mrf.mxu0
    %v1418 = vadd.f32 0.0, %v1417
    %v1419 = vpop.f32.mrf.mxu0
    %v1420 = vpop.f32.mrf.mxu0
    %v1421 = vadd.f32 0.0, %v1420
    %v1422 = vpop.f32.mrf.mxu0
    %1423 = vmatprep.mubr.bf16.mxu0 0
    %1424 = vmatmul.mubr.bf16.gmra.mxu0 %v1066
    %v1425 = vpop.f32.mrf.mxu0
    %v1426 = vadd.f32 0.0, %v1425
    %v1427 = vpop.f32.mrf.mxu0
    %v1428 = vpop.f32.mrf.mxu0
    %v1429 = vadd.f32 0.0, %v1428
    %v1430 = vpop.f32.mrf.mxu0
    %1431 = vdwg.mxu0
    %v1432 = vadd.f32 %v1305, %v1418
    %v1433 = vadd.f32 %v1308, %v1421
    %v1434 = vadd.f32 %v1313, %v1426
    %v1435 = vadd.f32 %v1316, %v1429
    %v1436 = vld [vmem:[#allocation10 + $0xc0] sm:$0xf]
    %v1437 = vld [vmem:[#allocation10 + $0xc4] sm:$0xf]
    %v1438 = vld [vmem:[#allocation10 + $0xc8] sm:$0xf]
    %v1439 = vld [vmem:[#allocation10 + $0xcc] sm:$0xf]
    %v1440 = vld [vmem:[#allocation10 + $0xd0] sm:$0xf]
    %v1441 = vld [vmem:[#allocation10 + $0xd4] sm:$0xf]
    %v1442 = vld [vmem:[#allocation10 + $0xd8] sm:$0xf]
    %v1443 = vld [vmem:[#allocation10 + $0xdc] sm:$0xf]
    %v1444 = vld [vmem:[#allocation10 + $0xe0] sm:$0xf]
    %v1445 = vld [vmem:[#allocation10 + $0xe4] sm:$0xf]
    %v1446 = vld [vmem:[#allocation10 + $0xe8] sm:$0xf]
    %v1447 = vld [vmem:[#allocation10 + $0xec] sm:$0xf]
    %v1448 = vld [vmem:[#allocation10 + $0xf0] sm:$0xf]
    %v1449 = vld [vmem:[#allocation10 + $0xf4] sm:$0xf]
    %v1450 = vld [vmem:[#allocation10 + $0xf8] sm:$0xf]
    %v1451 = vld [vmem:[#allocation10 + $0xfc] sm:$0xf]
    %v1468 = vunpack.c.l.b16 %v1436
    %v1469 = vunpack.c.l.b16 %v1437
    %v1470 = vunpack.c.l.b16 %v1438
    %v1471 = vunpack.c.l.b16 %v1439
    %v1472 = vunpack.c.l.b16 %v1440
    %v1473 = vunpack.c.l.b16 %v1441
    %v1474 = vunpack.c.l.b16 %v1442
    %v1475 = vunpack.c.l.b16 %v1443
    %v1476 = vunpack.c.l.b16 %v1444
    %v1477 = vunpack.c.l.b16 %v1445
    %v1478 = vunpack.c.l.b16 %v1446
    %v1479 = vunpack.c.l.b16 %v1447
    %v1480 = vunpack.c.l.b16 %v1448
    %v1481 = vunpack.c.l.b16 %v1449
    %v1482 = vunpack.c.l.b16 %v1450
    %v1483 = vunpack.c.l.b16 %v1451
    %v1484 = vpack.c.b16 %v1469, %v1468
    %v1485 = vpack.c.b16 %v1471, %v1470
    %v1486 = vpack.c.b16 %v1473, %v1472
    %v1487 = vpack.c.b16 %v1475, %v1474
    %v1488 = vpack.c.b16 %v1477, %v1476
    %v1489 = vpack.c.b16 %v1479, %v1478
    %v1490 = vpack.c.b16 %v1481, %v1480
    %v1491 = vpack.c.b16 %v1483, %v1482
    %1500 = vmatprep.subr.bf16.mxu0 0
    %1501 = vmatpush1.bf16.msra.mxu0 %v1491
    %1502 = vmatprep.subr.bf16.mxu0 0
    %1503 = vmatpush1.bf16.msra.mxu0 %v1490
    %1504 = vmatprep.subr.bf16.mxu0 0
    %1505 = vmatpush1.bf16.msra.mxu0 %v1489
    %1506 = vmatprep.subr.bf16.mxu0 0
    %1507 = vmatpush1.bf16.msra.mxu0 %v1488
    %1508 = vmatprep.subr.bf16.mxu0 0
    %1509 = vmatpush1.bf16.msra.mxu0 %v1487
    %1510 = vmatprep.subr.bf16.mxu0 0
    %1511 = vmatpush1.bf16.msra.mxu0 %v1486
    %1512 = vmatprep.subr.bf16.mxu0 0
    %1513 = vmatpush1.bf16.msra.mxu0 %v1485
    %1514 = vmatprep.subr.bf16.mxu0 0
    %1515 = vmatpush1.bf16.msra.mxu0 %v1484
    %1516 = vmatprep.subr.bf16.mxu0 0
    %1517 = vmatpush2.bf16.msra.mxu0 0
    %1518 = vmatprep.subr.bf16.mxu0 0
    %1519 = vmatpush2.bf16.msra.mxu0 0
    %1520 = vmatprep.subr.bf16.mxu0 0
    %1521 = vmatpush2.bf16.msra.mxu0 0
    %1522 = vmatprep.subr.bf16.mxu0 0
    %1523 = vmatpush2.bf16.msra.mxu0 0
    %1524 = vmatprep.subr.bf16.mxu0 0
    %1525 = vmatpush2.bf16.msra.mxu0 0
    %1526 = vmatprep.subr.bf16.mxu0 0
    %1527 = vmatpush2.bf16.msra.mxu0 0
    %1528 = vmatprep.subr.bf16.mxu0 0
    %1529 = vmatpush2.bf16.msra.mxu0 0
    %1530 = vmatprep.subr.bf16.mxu0 0
    %1531 = vmatpush2.bf16.msra.mxu0 0
    %1532 = vmatprep.mubr.bf16.mxu0 0
    %1533 = vmatmul.mubr.bf16.gmra.mxu0 %v1067
    %v1534 = vpop.f32.mrf.mxu0
    %v1535 = vadd.f32 0.0, %v1534
    %v1536 = vpop.f32.mrf.mxu0
    %v1537 = vpop.f32.mrf.mxu0
    %v1538 = vadd.f32 0.0, %v1537
    %v1539 = vpop.f32.mrf.mxu0
    %1540 = vmatprep.mubr.bf16.mxu0 0
    %1541 = vmatmul.mubr.bf16.gmra.mxu0 %v1068
    %v1542 = vpop.f32.mrf.mxu0
    %v1543 = vadd.f32 0.0, %v1542
    %v1544 = vpop.f32.mrf.mxu0
    %v1545 = vpop.f32.mrf.mxu0
    %v1546 = vadd.f32 0.0, %v1545
    %v1547 = vpop.f32.mrf.mxu0
    %1548 = vdwg.mxu0
    %v1549 = vadd.f32 %v1432, %v1535
    %v1550 = vadd.f32 %v1433, %v1538
    %v1551 = vadd.f32 %v1434, %v1543
    %v1552 = vadd.f32 %v1435, %v1546
    %v1553 = vld [vmem:[#allocation10 + $0x100] sm:$0xf]
    %v1554 = vld [vmem:[#allocation10 + $0x104] sm:$0xf]
    %v1555 = vld [vmem:[#allocation10 + $0x108] sm:$0xf]
    %v1556 = vld [vmem:[#allocation10 + $0x10c] sm:$0xf]
    %v1557 = vld [vmem:[#allocation10 + $0x110] sm:$0xf]
    %v1558 = vld [vmem:[#allocation10 + $0x114] sm:$0xf]
    %v1559 = vld [vmem:[#allocation10 + $0x118] sm:$0xf]
    %v1560 = vld [vmem:[#allocation10 + $0x11c] sm:$0xf]
    %v1561 = vld [vmem:[#allocation10 + $0x120] sm:$0xf]
    %v1562 = vld [vmem:[#allocation10 + $0x124] sm:$0xf]
    %v1563 = vld [vmem:[#allocation10 + $0x128] sm:$0xf]
    %v1564 = vld [vmem:[#allocation10 + $0x12c] sm:$0xf]
    %v1565 = vld [vmem:[#allocation10 + $0x130] sm:$0xf]
    %v1566 = vld [vmem:[#allocation10 + $0x134] sm:$0xf]
    %v1567 = vld [vmem:[#allocation10 + $0x138] sm:$0xf]
    %v1568 = vld [vmem:[#allocation10 + $0x13c] sm:$0xf]
    %v1585 = vunpack.c.l.b16 %v1553
    %v1586 = vunpack.c.l.b16 %v1554
    %v1587 = vunpack.c.l.b16 %v1555
    %v1588 = vunpack.c.l.b16 %v1556
    %v1589 = vunpack.c.l.b16 %v1557
    %v1590 = vunpack.c.l.b16 %v1558
    %v1591 = vunpack.c.l.b16 %v1559
    %v1592 = vunpack.c.l.b16 %v1560
    %v1593 = vunpack.c.l.b16 %v1561
    %v1594 = vunpack.c.l.b16 %v1562
    %v1595 = vunpack.c.l.b16 %v1563
    %v1596 = vunpack.c.l.b16 %v1564
    %v1597 = vunpack.c.l.b16 %v1565
    %v1598 = vunpack.c.l.b16 %v1566
    %v1599 = vunpack.c.l.b16 %v1567
    %v1600 = vunpack.c.l.b16 %v1568
    %v1601 = vpack.c.b16 %v1586, %v1585
    %v1602 = vpack.c.b16 %v1588, %v1587
    %v1603 = vpack.c.b16 %v1590, %v1589
    %v1604 = vpack.c.b16 %v1592, %v1591
    %v1605 = vpack.c.b16 %v1594, %v1593
    %v1606 = vpack.c.b16 %v1596, %v1595
    %v1607 = vpack.c.b16 %v1598, %v1597
    %v1608 = vpack.c.b16 %v1600, %v1599
    %1617 = vmatprep.subr.bf16.mxu0 0
    %1618 = vmatpush1.bf16.msra.mxu0 %v1608
    %1619 = vmatprep.subr.bf16.mxu0 0
    %1620 = vmatpush1.bf16.msra.mxu0 %v1607
    %1621 = vmatprep.subr.bf16.mxu0 0
    %1622 = vmatpush1.bf16.msra.mxu0 %v1606
    %1623 = vmatprep.subr.bf16.mxu0 0
    %1624 = vmatpush1.bf16.msra.mxu0 %v1605
    %1625 = vmatprep.subr.bf16.mxu0 0
    %1626 = vmatpush1.bf16.msra.mxu0 %v1604
    %1627 = vmatprep.subr.bf16.mxu0 0
    %1628 = vmatpush1.bf16.msra.mxu0 %v1603
    %1629 = vmatprep.subr.bf16.mxu0 0
    %1630 = vmatpush1.bf16.msra.mxu0 %v1602
    %1631 = vmatprep.subr.bf16.mxu0 0
    %1632 = vmatpush1.bf16.msra.mxu0 %v1601
    %1633 = vmatprep.subr.bf16.mxu0 0
    %1634 = vmatpush2.bf16.msra.mxu0 0
    %1635 = vmatprep.subr.bf16.mxu0 0
    %1636 = vmatpush2.bf16.msra.mxu0 0
    %1637 = vmatprep.subr.bf16.mxu0 0
    %1638 = vmatpush2.bf16.msra.mxu0 0
    %1639 = vmatprep.subr.bf16.mxu0 0
    %1640 = vmatpush2.bf16.msra.mxu0 0
    %1641 = vmatprep.subr.bf16.mxu0 0
    %1642 = vmatpush2.bf16.msra.mxu0 0
    %1643 = vmatprep.subr.bf16.mxu0 0
    %1644 = vmatpush2.bf16.msra.mxu0 0
    %1645 = vmatprep.subr.bf16.mxu0 0
    %1646 = vmatpush2.bf16.msra.mxu0 0
    %1647 = vmatprep.subr.bf16.mxu0 0
    %1648 = vmatpush2.bf16.msra.mxu0 0
    %1649 = vmatprep.mubr.bf16.mxu0 0
    %1650 = vmatmul.mubr.bf16.gmra.mxu0 %v1069
    %v1651 = vpop.f32.mrf.mxu0
    %v1652 = vadd.f32 0.0, %v1651
    %v1653 = vpop.f32.mrf.mxu0
    %v1654 = vpop.f32.mrf.mxu0
    %v1655 = vadd.f32 0.0, %v1654
    %v1656 = vpop.f32.mrf.mxu0
    %1657 = vmatprep.mubr.bf16.mxu0 0
    %1658 = vmatmul.mubr.bf16.gmra.mxu0 %v1070
    %v1659 = vpop.f32.mrf.mxu0
    %v1660 = vadd.f32 0.0, %v1659
    %v1661 = vpop.f32.mrf.mxu0
    %v1662 = vpop.f32.mrf.mxu0
    %v1663 = vadd.f32 0.0, %v1662
    %v1664 = vpop.f32.mrf.mxu0
    %1665 = vdwg.mxu0
    %v1666 = vadd.f32 %v1549, %v1652
    %v1667 = vadd.f32 %v1550, %v1655
    %v1668 = vadd.f32 %v1551, %v1660
    %v1669 = vadd.f32 %v1552, %v1663
    %v1670 = vld [vmem:[#allocation10 + $0x140] sm:$0xf]
    %v1671 = vld [vmem:[#allocation10 + $0x144] sm:$0xf]
    %v1672 = vld [vmem:[#allocation10 + $0x148] sm:$0xf]
    %v1673 = vld [vmem:[#allocation10 + $0x14c] sm:$0xf]
    %v1674 = vld [vmem:[#allocation10 + $0x150] sm:$0xf]
    %v1675 = vld [vmem:[#allocation10 + $0x154] sm:$0xf]
    %v1676 = vld [vmem:[#allocation10 + $0x158] sm:$0xf]
    %v1677 = vld [vmem:[#allocation10 + $0x15c] sm:$0xf]
    %v1678 = vld [vmem:[#allocation10 + $0x160] sm:$0xf]
    %v1679 = vld [vmem:[#allocation10 + $0x164] sm:$0xf]
    %v1680 = vld [vmem:[#allocation10 + $0x168] sm:$0xf]
    %v1681 = vld [vmem:[#allocation10 + $0x16c] sm:$0xf]
    %v1682 = vld [vmem:[#allocation10 + $0x170] sm:$0xf]
    %v1683 = vld [vmem:[#allocation10 + $0x174] sm:$0xf]
    %v1684 = vld [vmem:[#allocation10 + $0x178] sm:$0xf]
    %v1685 = vld [vmem:[#allocation10 + $0x17c] sm:$0xf]
    %v1702 = vunpack.c.l.b16 %v1670
    %v1703 = vunpack.c.l.b16 %v1671
    %v1704 = vunpack.c.l.b16 %v1672
    %v1705 = vunpack.c.l.b16 %v1673
    %v1706 = vunpack.c.l.b16 %v1674
    %v1707 = vunpack.c.l.b16 %v1675
    %v1708 = vunpack.c.l.b16 %v1676
    %v1709 = vunpack.c.l.b16 %v1677
    %v1710 = vunpack.c.l.b16 %v1678
    %v1711 = vunpack.c.l.b16 %v1679
    %v1712 = vunpack.c.l.b16 %v1680
    %v1713 = vunpack.c.l.b16 %v1681
    %v1714 = vunpack.c.l.b16 %v1682
    %v1715 = vunpack.c.l.b16 %v1683
    %v1716 = vunpack.c.l.b16 %v1684
    %v1717 = vunpack.c.l.b16 %v1685
    %v1718 = vpack.c.b16 %v1703, %v1702
    %v1719 = vpack.c.b16 %v1705, %v1704
    %v1720 = vpack.c.b16 %v1707, %v1706
    %v1721 = vpack.c.b16 %v1709, %v1708
    %v1722 = vpack.c.b16 %v1711, %v1710
    %v1723 = vpack.c.b16 %v1713, %v1712
    %v1724 = vpack.c.b16 %v1715, %v1714
    %v1725 = vpack.c.b16 %v1717, %v1716
    %1734 = vmatprep.subr.bf16.mxu0 0
    %1735 = vmatpush1.bf16.msra.mxu0 %v1725
    %1736 = vmatprep.subr.bf16.mxu0 0
    %1737 = vmatpush1.bf16.msra.mxu0 %v1724
    %1738 = vmatprep.subr.bf16.mxu0 0
    %1739 = vmatpush1.bf16.msra.mxu0 %v1723
    %1740 = vmatprep.subr.bf16.mxu0 0
    %1741 = vmatpush1.bf16.msra.mxu0 %v1722
    %1742 = vmatprep.subr.bf16.mxu0 0
    %1743 = vmatpush1.bf16.msra.mxu0 %v1721
    %1744 = vmatprep.subr.bf16.mxu0 0
    %1745 = vmatpush1.bf16.msra.mxu0 %v1720
    %1746 = vmatprep.subr.bf16.mxu0 0
    %1747 = vmatpush1.bf16.msra.mxu0 %v1719
    %1748 = vmatprep.subr.bf16.mxu0 0
    %1749 = vmatpush1.bf16.msra.mxu0 %v1718
    %1750 = vmatprep.subr.bf16.mxu0 0
    %1751 = vmatpush2.bf16.msra.mxu0 0
    %1752 = vmatprep.subr.bf16.mxu0 0
    %1753 = vmatpush2.bf16.msra.mxu0 0
    %1754 = vmatprep.subr.bf16.mxu0 0
    %1755 = vmatpush2.bf16.msra.mxu0 0
    %1756 = vmatprep.subr.bf16.mxu0 0
    %1757 = vmatpush2.bf16.msra.mxu0 0
    %1758 = vmatprep.subr.bf16.mxu0 0
    %1759 = vmatpush2.bf16.msra.mxu0 0
    %1760 = vmatprep.subr.bf16.mxu0 0
    %1761 = vmatpush2.bf16.msra.mxu0 0
    %1762 = vmatprep.subr.bf16.mxu0 0
    %1763 = vmatpush2.bf16.msra.mxu0 0
    %1764 = vmatprep.subr.bf16.mxu0 0
    %1765 = vmatpush2.bf16.msra.mxu0 0
    %1766 = vmatprep.mubr.bf16.mxu0 0
    %1767 = vmatmul.mubr.bf16.gmra.mxu0 %v1071
    %v1768 = vpop.f32.mrf.mxu0
    %v1769 = vadd.f32 0.0, %v1768
    %v1770 = vpop.f32.mrf.mxu0
    %v1771 = vpop.f32.mrf.mxu0
    %v1772 = vadd.f32 0.0, %v1771
    %v1773 = vpop.f32.mrf.mxu0
    %1774 = vmatprep.mubr.bf16.mxu0 0
    %1775 = vmatmul.mubr.bf16.gmra.mxu0 %v1072
    %v1776 = vpop.f32.mrf.mxu0
    %v1777 = vadd.f32 0.0, %v1776
    %v1778 = vpop.f32.mrf.mxu0
    %v1779 = vpop.f32.mrf.mxu0
    %v1780 = vadd.f32 0.0, %v1779
    %v1781 = vpop.f32.mrf.mxu0
    %1782 = vdwg.mxu0
    %v1783 = vadd.f32 %v1666, %v1769
    %v1784 = vadd.f32 %v1667, %v1772
    %v1785 = vadd.f32 %v1668, %v1777
    %v1786 = vadd.f32 %v1669, %v1780
    %v1787 = vld [vmem:[#allocation10 + $0x180] sm:$0xf]
    %v1788 = vld [vmem:[#allocation10 + $0x184] sm:$0xf]
    %v1789 = vld [vmem:[#allocation10 + $0x188] sm:$0xf]
    %v1790 = vld [vmem:[#allocation10 + $0x18c] sm:$0xf]
    %v1791 = vld [vmem:[#allocation10 + $0x190] sm:$0xf]
    %v1792 = vld [vmem:[#allocation10 + $0x194] sm:$0xf]
    %v1793 = vld [vmem:[#allocation10 + $0x198] sm:$0xf]
    %v1794 = vld [vmem:[#allocation10 + $0x19c] sm:$0xf]
    %v1795 = vld [vmem:[#allocation10 + $0x1a0] sm:$0xf]
    %v1796 = vld [vmem:[#allocation10 + $0x1a4] sm:$0xf]
    %v1797 = vld [vmem:[#allocation10 + $0x1a8] sm:$0xf]
    %v1798 = vld [vmem:[#allocation10 + $0x1ac] sm:$0xf]
    %v1799 = vld [vmem:[#allocation10 + $0x1b0] sm:$0xf]
    %v1800 = vld [vmem:[#allocation10 + $0x1b4] sm:$0xf]
    %v1801 = vld [vmem:[#allocation10 + $0x1b8] sm:$0xf]
    %v1802 = vld [vmem:[#allocation10 + $0x1bc] sm:$0xf]
    %v1819 = vunpack.c.l.b16 %v1787
    %v1820 = vunpack.c.l.b16 %v1788
    %v1821 = vunpack.c.l.b16 %v1789
    %v1822 = vunpack.c.l.b16 %v1790
    %v1823 = vunpack.c.l.b16 %v1791
    %v1824 = vunpack.c.l.b16 %v1792
    %v1825 = vunpack.c.l.b16 %v1793
    %v1826 = vunpack.c.l.b16 %v1794
    %v1827 = vunpack.c.l.b16 %v1795
    %v1828 = vunpack.c.l.b16 %v1796
    %v1829 = vunpack.c.l.b16 %v1797
    %v1830 = vunpack.c.l.b16 %v1798
    %v1831 = vunpack.c.l.b16 %v1799
    %v1832 = vunpack.c.l.b16 %v1800
    %v1833 = vunpack.c.l.b16 %v1801
    %v1834 = vunpack.c.l.b16 %v1802
    %v1835 = vpack.c.b16 %v1820, %v1819
    %v1836 = vpack.c.b16 %v1822, %v1821
    %v1837 = vpack.c.b16 %v1824, %v1823
    %v1838 = vpack.c.b16 %v1826, %v1825
    %v1839 = vpack.c.b16 %v1828, %v1827
    %v1840 = vpack.c.b16 %v1830, %v1829
    %v1841 = vpack.c.b16 %v1832, %v1831
    %v1842 = vpack.c.b16 %v1834, %v1833
    %1851 = vmatprep.subr.bf16.mxu0 0
    %1852 = vmatpush1.bf16.msra.mxu0 %v1842
    %1853 = vmatprep.subr.bf16.mxu0 0
    %1854 = vmatpush1.bf16.msra.mxu0 %v1841
    %1855 = vmatprep.subr.bf16.mxu0 0
    %1856 = vmatpush1.bf16.msra.mxu0 %v1840
    %1857 = vmatprep.subr.bf16.mxu0 0
    %1858 = vmatpush1.bf16.msra.mxu0 %v1839
    %1859 = vmatprep.subr.bf16.mxu0 0
    %1860 = vmatpush1.bf16.msra.mxu0 %v1838
    %1861 = vmatprep.subr.bf16.mxu0 0
    %1862 = vmatpush1.bf16.msra.mxu0 %v1837
    %1863 = vmatprep.subr.bf16.mxu0 0
    %1864 = vmatpush1.bf16.msra.mxu0 %v1836
    %1865 = vmatprep.subr.bf16.mxu0 0
    %1866 = vmatpush1.bf16.msra.mxu0 %v1835
    %1867 = vmatprep.subr.bf16.mxu0 0
    %1868 = vmatpush2.bf16.msra.mxu0 0
    %1869 = vmatprep.subr.bf16.mxu0 0
    %1870 = vmatpush2.bf16.msra.mxu0 0
    %1871 = vmatprep.subr.bf16.mxu0 0
    %1872 = vmatpush2.bf16.msra.mxu0 0
    %1873 = vmatprep.subr.bf16.mxu0 0
    %1874 = vmatpush2.bf16.msra.mxu0 0
    %1875 = vmatprep.subr.bf16.mxu0 0
    %1876 = vmatpush2.bf16.msra.mxu0 0
    %1877 = vmatprep.subr.bf16.mxu0 0
    %1878 = vmatpush2.bf16.msra.mxu0 0
    %1879 = vmatprep.subr.bf16.mxu0 0
    %1880 = vmatpush2.bf16.msra.mxu0 0
    %1881 = vmatprep.subr.bf16.mxu0 0
    %1882 = vmatpush2.bf16.msra.mxu0 0
    %1883 = vmatprep.mubr.bf16.mxu0 0
    %1884 = vmatmul.mubr.bf16.gmra.mxu0 %v1073
    %v1885 = vpop.f32.mrf.mxu0
    %v1886 = vadd.f32 0.0, %v1885
    %v1887 = vpop.f32.mrf.mxu0
    %v1888 = vpop.f32.mrf.mxu0
    %v1889 = vadd.f32 0.0, %v1888
    %v1890 = vpop.f32.mrf.mxu0
    %1891 = vmatprep.mubr.bf16.mxu0 0
    %1892 = vmatmul.mubr.bf16.gmra.mxu0 %v1074
    %v1893 = vpop.f32.mrf.mxu0
    %v1894 = vadd.f32 0.0, %v1893
    %v1895 = vpop.f32.mrf.mxu0
    %v1896 = vpop.f32.mrf.mxu0
    %v1897 = vadd.f32 0.0, %v1896
    %v1898 = vpop.f32.mrf.mxu0
    %1899 = vdwg.mxu0
    %v1900 = vadd.f32 %v1783, %v1886
    %v1901 = vadd.f32 %v1784, %v1889
    %v1902 = vadd.f32 %v1785, %v1894
    %v1903 = vadd.f32 %v1786, %v1897
    %v1904 = vld [vmem:[#allocation10 + $0x1c0] sm:$0xf]
    %v1905 = vld [vmem:[#allocation10 + $0x1c4] sm:$0xf]
    %v1906 = vld [vmem:[#allocation10 + $0x1c8] sm:$0xf]
    %v1907 = vld [vmem:[#allocation10 + $0x1cc] sm:$0xf]
    %v1908 = vld [vmem:[#allocation10 + $0x1d0] sm:$0xf]
    %v1909 = vld [vmem:[#allocation10 + $0x1d4] sm:$0xf]
    %v1910 = vld [vmem:[#allocation10 + $0x1d8] sm:$0xf]
    %v1911 = vld [vmem:[#allocation10 + $0x1dc] sm:$0xf]
    %v1912 = vld [vmem:[#allocation10 + $0x1e0] sm:$0xf]
    %v1913 = vld [vmem:[#allocation10 + $0x1e4] sm:$0xf]
    %v1914 = vld [vmem:[#allocation10 + $0x1e8] sm:$0xf]
    %v1915 = vld [vmem:[#allocation10 + $0x1ec] sm:$0xf]
    %v1916 = vld [vmem:[#allocation10 + $0x1f0] sm:$0xf]
    %v1917 = vld [vmem:[#allocation10 + $0x1f4] sm:$0xf]
    %v1918 = vld [vmem:[#allocation10 + $0x1f8] sm:$0xf]
    %v1919 = vld [vmem:[#allocation10 + $0x1fc] sm:$0xf]
    %v1936 = vunpack.c.l.b16 %v1904
    %v1937 = vunpack.c.l.b16 %v1905
    %v1938 = vunpack.c.l.b16 %v1906
    %v1939 = vunpack.c.l.b16 %v1907
    %v1940 = vunpack.c.l.b16 %v1908
    %v1941 = vunpack.c.l.b16 %v1909
    %v1942 = vunpack.c.l.b16 %v1910
    %v1943 = vunpack.c.l.b16 %v1911
    %v1944 = vunpack.c.l.b16 %v1912
    %v1945 = vunpack.c.l.b16 %v1913
    %v1946 = vunpack.c.l.b16 %v1914
    %v1947 = vunpack.c.l.b16 %v1915
    %v1948 = vunpack.c.l.b16 %v1916
    %v1949 = vunpack.c.l.b16 %v1917
    %v1950 = vunpack.c.l.b16 %v1918
    %v1951 = vunpack.c.l.b16 %v1919
    %v1952 = vpack.c.b16 %v1937, %v1936
    %v1953 = vpack.c.b16 %v1939, %v1938
    %v1954 = vpack.c.b16 %v1941, %v1940
    %v1955 = vpack.c.b16 %v1943, %v1942
    %v1956 = vpack.c.b16 %v1945, %v1944
    %v1957 = vpack.c.b16 %v1947, %v1946
    %v1958 = vpack.c.b16 %v1949, %v1948
    %v1959 = vpack.c.b16 %v1951, %v1950
    %1968 = vmatprep.subr.bf16.mxu0 0
    %1969 = vmatpush1.bf16.msra.mxu0 %v1959
    %1970 = vmatprep.subr.bf16.mxu0 0
    %1971 = vmatpush1.bf16.msra.mxu0 %v1958
    %1972 = vmatprep.subr.bf16.mxu0 0
    %1973 = vmatpush1.bf16.msra.mxu0 %v1957
    %1974 = vmatprep.subr.bf16.mxu0 0
    %1975 = vmatpush1.bf16.msra.mxu0 %v1956
    %1976 = vmatprep.subr.bf16.mxu0 0
    %1977 = vmatpush1.bf16.msra.mxu0 %v1955
    %1978 = vmatprep.subr.bf16.mxu0 0
    %1979 = vmatpush1.bf16.msra.mxu0 %v1954
    %1980 = vmatprep.subr.bf16.mxu0 0
    %1981 = vmatpush1.bf16.msra.mxu0 %v1953
    %1982 = vmatprep.subr.bf16.mxu0 0
    %1983 = vmatpush1.bf16.msra.mxu0 %v1952
    %1984 = vmatprep.subr.bf16.mxu0 0
    %1985 = vmatpush2.bf16.msra.mxu0 0
    %1986 = vmatprep.subr.bf16.mxu0 0
    %1987 = vmatpush2.bf16.msra.mxu0 0
    %1988 = vmatprep.subr.bf16.mxu0 0
    %1989 = vmatpush2.bf16.msra.mxu0 0
    %1990 = vmatprep.subr.bf16.mxu0 0
    %1991 = vmatpush2.bf16.msra.mxu0 0
    %1992 = vmatprep.subr.bf16.mxu0 0
    %1993 = vmatpush2.bf16.msra.mxu0 0
    %1994 = vmatprep.subr.bf16.mxu0 0
    %1995 = vmatpush2.bf16.msra.mxu0 0
    %1996 = vmatprep.subr.bf16.mxu0 0
    %1997 = vmatpush2.bf16.msra.mxu0 0
    %1998 = vmatprep.subr.bf16.mxu0 0
    %1999 = vmatpush2.bf16.msra.mxu0 0
    %2000 = vmatprep.mubr.bf16.mxu0 0
    %2001 = vmatmul.mubr.bf16.gmra.mxu0 %v1075
    %v2002 = vpop.f32.mrf.mxu0
    %v2003 = vadd.f32 0.0, %v2002
    %v2004 = vpop.f32.mrf.mxu0
    %v2005 = vpop.f32.mrf.mxu0
    %v2006 = vadd.f32 0.0, %v2005
    %v2007 = vpop.f32.mrf.mxu0
    %2008 = vmatprep.mubr.bf16.mxu0 0
    %2009 = vmatmul.mubr.bf16.gmra.mxu0 %v1076
    %v2010 = vpop.f32.mrf.mxu0
    %v2011 = vadd.f32 0.0, %v2010
    %v2012 = vpop.f32.mrf.mxu0
    %v2013 = vpop.f32.mrf.mxu0
    %v2014 = vadd.f32 0.0, %v2013
    %v2015 = vpop.f32.mrf.mxu0
    %2016 = vdwg.mxu0
    %v2017 = vadd.f32 %v1900, %v2003
    %v2018 = vadd.f32 %v1901, %v2006
    %v2019 = vadd.f32 %v1902, %v2011
    %v2020 = vadd.f32 %v1903, %v2014
    %v2021 = vld [vmem:[#allocation10 + $0x200] sm:$0xf]
    %v2022 = vld [vmem:[#allocation10 + $0x204] sm:$0xf]
    %v2023 = vld [vmem:[#allocation10 + $0x208] sm:$0xf]
    %v2024 = vld [vmem:[#allocation10 + $0x20c] sm:$0xf]
    %v2025 = vld [vmem:[#allocation10 + $0x210] sm:$0xf]
    %v2026 = vld [vmem:[#allocation10 + $0x214] sm:$0xf]
    %v2027 = vld [vmem:[#allocation10 + $0x218] sm:$0xf]
    %v2028 = vld [vmem:[#allocation10 + $0x21c] sm:$0xf]
    %v2029 = vld [vmem:[#allocation10 + $0x220] sm:$0xf]
    %v2030 = vld [vmem:[#allocation10 + $0x224] sm:$0xf]
    %v2031 = vld [vmem:[#allocation10 + $0x228] sm:$0xf]
    %v2032 = vld [vmem:[#allocation10 + $0x22c] sm:$0xf]
    %v2033 = vld [vmem:[#allocation10 + $0x230] sm:$0xf]
    %v2034 = vld [vmem:[#allocation10 + $0x234] sm:$0xf]
    %v2035 = vld [vmem:[#allocation10 + $0x238] sm:$0xf]
    %v2036 = vld [vmem:[#allocation10 + $0x23c] sm:$0xf]
    %v2053 = vunpack.c.l.b16 %v2021
    %v2054 = vunpack.c.l.b16 %v2022
    %v2055 = vunpack.c.l.b16 %v2023
    %v2056 = vunpack.c.l.b16 %v2024
    %v2057 = vunpack.c.l.b16 %v2025
    %v2058 = vunpack.c.l.b16 %v2026
    %v2059 = vunpack.c.l.b16 %v2027
    %v2060 = vunpack.c.l.b16 %v2028
    %v2061 = vunpack.c.l.b16 %v2029
    %v2062 = vunpack.c.l.b16 %v2030
    %v2063 = vunpack.c.l.b16 %v2031
    %v2064 = vunpack.c.l.b16 %v2032
    %v2065 = vunpack.c.l.b16 %v2033
    %v2066 = vunpack.c.l.b16 %v2034
    %v2067 = vunpack.c.l.b16 %v2035
    %v2068 = vunpack.c.l.b16 %v2036
    %v2069 = vpack.c.b16 %v2054, %v2053
    %v2070 = vpack.c.b16 %v2056, %v2055
    %v2071 = vpack.c.b16 %v2058, %v2057
    %v2072 = vpack.c.b16 %v2060, %v2059
    %v2073 = vpack.c.b16 %v2062, %v2061
    %v2074 = vpack.c.b16 %v2064, %v2063
    %v2075 = vpack.c.b16 %v2066, %v2065
    %v2076 = vpack.c.b16 %v2068, %v2067
    %2085 = vmatprep.subr.bf16.mxu0 0
    %2086 = vmatpush1.bf16.msra.mxu0 %v2076
    %2087 = vmatprep.subr.bf16.mxu0 0
    %2088 = vmatpush1.bf16.msra.mxu0 %v2075
    %2089 = vmatprep.subr.bf16.mxu0 0
    %2090 = vmatpush1.bf16.msra.mxu0 %v2074
    %2091 = vmatprep.subr.bf16.mxu0 0
    %2092 = vmatpush1.bf16.msra.mxu0 %v2073
    %2093 = vmatprep.subr.bf16.mxu0 0
    %2094 = vmatpush1.bf16.msra.mxu0 %v2072
    %2095 = vmatprep.subr.bf16.mxu0 0
    %2096 = vmatpush1.bf16.msra.mxu0 %v2071
    %2097 = vmatprep.subr.bf16.mxu0 0
    %2098 = vmatpush1.bf16.msra.mxu0 %v2070
    %2099 = vmatprep.subr.bf16.mxu0 0
    %2100 = vmatpush1.bf16.msra.mxu0 %v2069
    %2101 = vmatprep.subr.bf16.mxu0 0
    %2102 = vmatpush2.bf16.msra.mxu0 0
    %2103 = vmatprep.subr.bf16.mxu0 0
    %2104 = vmatpush2.bf16.msra.mxu0 0
    %2105 = vmatprep.subr.bf16.mxu0 0
    %2106 = vmatpush2.bf16.msra.mxu0 0
    %2107 = vmatprep.subr.bf16.mxu0 0
    %2108 = vmatpush2.bf16.msra.mxu0 0
    %2109 = vmatprep.subr.bf16.mxu0 0
    %2110 = vmatpush2.bf16.msra.mxu0 0
    %2111 = vmatprep.subr.bf16.mxu0 0
    %2112 = vmatpush2.bf16.msra.mxu0 0
    %2113 = vmatprep.subr.bf16.mxu0 0
    %2114 = vmatpush2.bf16.msra.mxu0 0
    %2115 = vmatprep.subr.bf16.mxu0 0
    %2116 = vmatpush2.bf16.msra.mxu0 0
    %2117 = vmatprep.mubr.bf16.mxu0 0
    %2118 = vmatmul.mubr.bf16.gmra.mxu0 %v1077
    %v2119 = vpop.f32.mrf.mxu0
    %v2120 = vadd.f32 0.0, %v2119
    %v2121 = vpop.f32.mrf.mxu0
    %v2122 = vpop.f32.mrf.mxu0
    %v2123 = vadd.f32 0.0, %v2122
    %v2124 = vpop.f32.mrf.mxu0
    %2125 = vmatprep.mubr.bf16.mxu0 0
    %2126 = vmatmul.mubr.bf16.gmra.mxu0 %v1078
    %v2127 = vpop.f32.mrf.mxu0
    %v2128 = vadd.f32 0.0, %v2127
    %v2129 = vpop.f32.mrf.mxu0
    %v2130 = vpop.f32.mrf.mxu0
    %v2131 = vadd.f32 0.0, %v2130
    %v2132 = vpop.f32.mrf.mxu0
    %2133 = vdwg.mxu0
    %v2134 = vadd.f32 %v2017, %v2120
    %v2135 = vadd.f32 %v2018, %v2123
    %v2136 = vadd.f32 %v2019, %v2128
    %v2137 = vadd.f32 %v2020, %v2131
    %v2138 = vld [vmem:[#allocation10 + $0x240] sm:$0xf]
    %v2139 = vld [vmem:[#allocation10 + $0x244] sm:$0xf]
    %v2140 = vld [vmem:[#allocation10 + $0x248] sm:$0xf]
    %v2141 = vld [vmem:[#allocation10 + $0x24c] sm:$0xf]
    %v2142 = vld [vmem:[#allocation10 + $0x250] sm:$0xf]
    %v2143 = vld [vmem:[#allocation10 + $0x254] sm:$0xf]
    %v2144 = vld [vmem:[#allocation10 + $0x258] sm:$0xf]
    %v2145 = vld [vmem:[#allocation10 + $0x25c] sm:$0xf]
    %v2146 = vld [vmem:[#allocation10 + $0x260] sm:$0xf]
    %v2147 = vld [vmem:[#allocation10 + $0x264] sm:$0xf]
    %v2148 = vld [vmem:[#allocation10 + $0x268] sm:$0xf]
    %v2149 = vld [vmem:[#allocation10 + $0x26c] sm:$0xf]
    %v2150 = vld [vmem:[#allocation10 + $0x270] sm:$0xf]
    %v2151 = vld [vmem:[#allocation10 + $0x274] sm:$0xf]
    %v2152 = vld [vmem:[#allocation10 + $0x278] sm:$0xf]
    %v2153 = vld [vmem:[#allocation10 + $0x27c] sm:$0xf]
    %v2170 = vunpack.c.l.b16 %v2138
    %v2171 = vunpack.c.l.b16 %v2139
    %v2172 = vunpack.c.l.b16 %v2140
    %v2173 = vunpack.c.l.b16 %v2141
    %v2174 = vunpack.c.l.b16 %v2142
    %v2175 = vunpack.c.l.b16 %v2143
    %v2176 = vunpack.c.l.b16 %v2144
    %v2177 = vunpack.c.l.b16 %v2145
    %v2178 = vunpack.c.l.b16 %v2146
    %v2179 = vunpack.c.l.b16 %v2147
    %v2180 = vunpack.c.l.b16 %v2148
    %v2181 = vunpack.c.l.b16 %v2149
    %v2182 = vunpack.c.l.b16 %v2150
    %v2183 = vunpack.c.l.b16 %v2151
    %v2184 = vunpack.c.l.b16 %v2152
    %v2185 = vunpack.c.l.b16 %v2153
    %v2186 = vpack.c.b16 %v2171, %v2170
    %v2187 = vpack.c.b16 %v2173, %v2172
    %v2188 = vpack.c.b16 %v2175, %v2174
    %v2189 = vpack.c.b16 %v2177, %v2176
    %v2190 = vpack.c.b16 %v2179, %v2178
    %v2191 = vpack.c.b16 %v2181, %v2180
    %v2192 = vpack.c.b16 %v2183, %v2182
    %v2193 = vpack.c.b16 %v2185, %v2184
    %2202 = vmatprep.subr.bf16.mxu0 0
    %2203 = vmatpush1.bf16.msra.mxu0 %v2193
    %2204 = vmatprep.subr.bf16.mxu0 0
    %2205 = vmatpush1.bf16.msra.mxu0 %v2192
    %2206 = vmatprep.subr.bf16.mxu0 0
    %2207 = vmatpush1.bf16.msra.mxu0 %v2191
    %2208 = vmatprep.subr.bf16.mxu0 0
    %2209 = vmatpush1.bf16.msra.mxu0 %v2190
    %2210 = vmatprep.subr.bf16.mxu0 0
    %2211 = vmatpush1.bf16.msra.mxu0 %v2189
    %2212 = vmatprep.subr.bf16.mxu0 0
    %2213 = vmatpush1.bf16.msra.mxu0 %v2188
    %2214 = vmatprep.subr.bf16.mxu0 0
    %2215 = vmatpush1.bf16.msra.mxu0 %v2187
    %2216 = vmatprep.subr.bf16.mxu0 0
    %2217 = vmatpush1.bf16.msra.mxu0 %v2186
    %2218 = vmatprep.subr.bf16.mxu0 0
    %2219 = vmatpush2.bf16.msra.mxu0 0
    %2220 = vmatprep.subr.bf16.mxu0 0
    %2221 = vmatpush2.bf16.msra.mxu0 0
    %2222 = vmatprep.subr.bf16.mxu0 0
    %2223 = vmatpush2.bf16.msra.mxu0 0
    %2224 = vmatprep.subr.bf16.mxu0 0
    %2225 = vmatpush2.bf16.msra.mxu0 0
    %2226 = vmatprep.subr.bf16.mxu0 0
    %2227 = vmatpush2.bf16.msra.mxu0 0
    %2228 = vmatprep.subr.bf16.mxu0 0
    %2229 = vmatpush2.bf16.msra.mxu0 0
    %2230 = vmatprep.subr.bf16.mxu0 0
    %2231 = vmatpush2.bf16.msra.mxu0 0
    %2232 = vmatprep.subr.bf16.mxu0 0
    %2233 = vmatpush2.bf16.msra.mxu0 0
    %2234 = vmatprep.mubr.bf16.mxu0 0
    %2235 = vmatmul.mubr.bf16.gmra.mxu0 %v1079
    %v2236 = vpop.f32.mrf.mxu0
    %v2237 = vadd.f32 0.0, %v2236
    %v2238 = vpop.f32.mrf.mxu0
    %v2239 = vpop.f32.mrf.mxu0
    %v2240 = vadd.f32 0.0, %v2239
    %v2241 = vpop.f32.mrf.mxu0
    %2242 = vmatprep.mubr.bf16.mxu0 0
    %2243 = vmatmul.mubr.bf16.gmra.mxu0 %v1080
    %v2244 = vpop.f32.mrf.mxu0
    %v2245 = vadd.f32 0.0, %v2244
    %v2246 = vpop.f32.mrf.mxu0
    %v2247 = vpop.f32.mrf.mxu0
    %v2248 = vadd.f32 0.0, %v2247
    %v2249 = vpop.f32.mrf.mxu0
    %2250 = vdwg.mxu0
    %v2251 = vadd.f32 %v2134, %v2237
    %v2252 = vadd.f32 %v2135, %v2240
    %v2253 = vadd.f32 %v2136, %v2245
    %v2254 = vadd.f32 %v2137, %v2248
    %v2255 = vld [vmem:[#allocation10 + $0x280] sm:$0xf]
    %v2256 = vld [vmem:[#allocation10 + $0x284] sm:$0xf]
    %v2257 = vld [vmem:[#allocation10 + $0x288] sm:$0xf]
    %v2258 = vld [vmem:[#allocation10 + $0x28c] sm:$0xf]
    %v2259 = vld [vmem:[#allocation10 + $0x290] sm:$0xf]
    %v2260 = vld [vmem:[#allocation10 + $0x294] sm:$0xf]
    %v2261 = vld [vmem:[#allocation10 + $0x298] sm:$0xf]
    %v2262 = vld [vmem:[#allocation10 + $0x29c] sm:$0xf]
    %v2263 = vld [vmem:[#allocation10 + $0x2a0] sm:$0xf]
    %v2264 = vld [vmem:[#allocation10 + $0x2a4] sm:$0xf]
    %v2265 = vld [vmem:[#allocation10 + $0x2a8] sm:$0xf]
    %v2266 = vld [vmem:[#allocation10 + $0x2ac] sm:$0xf]
    %v2267 = vld [vmem:[#allocation10 + $0x2b0] sm:$0xf]
    %v2268 = vld [vmem:[#allocation10 + $0x2b4] sm:$0xf]
    %v2269 = vld [vmem:[#allocation10 + $0x2b8] sm:$0xf]
    %v2270 = vld [vmem:[#allocation10 + $0x2bc] sm:$0xf]
    %v2287 = vunpack.c.l.b16 %v2255
    %v2288 = vunpack.c.l.b16 %v2256
    %v2289 = vunpack.c.l.b16 %v2257
    %v2290 = vunpack.c.l.b16 %v2258
    %v2291 = vunpack.c.l.b16 %v2259
    %v2292 = vunpack.c.l.b16 %v2260
    %v2293 = vunpack.c.l.b16 %v2261
    %v2294 = vunpack.c.l.b16 %v2262
    %v2295 = vunpack.c.l.b16 %v2263
    %v2296 = vunpack.c.l.b16 %v2264
    %v2297 = vunpack.c.l.b16 %v2265
    %v2298 = vunpack.c.l.b16 %v2266
    %v2299 = vunpack.c.l.b16 %v2267
    %v2300 = vunpack.c.l.b16 %v2268
    %v2301 = vunpack.c.l.b16 %v2269
    %v2302 = vunpack.c.l.b16 %v2270
    %v2303 = vpack.c.b16 %v2288, %v2287
    %v2304 = vpack.c.b16 %v2290, %v2289
    %v2305 = vpack.c.b16 %v2292, %v2291
    %v2306 = vpack.c.b16 %v2294, %v2293
    %v2307 = vpack.c.b16 %v2296, %v2295
    %v2308 = vpack.c.b16 %v2298, %v2297
    %v2309 = vpack.c.b16 %v2300, %v2299
    %v2310 = vpack.c.b16 %v2302, %v2301
    %2319 = vmatprep.subr.bf16.mxu0 0
    %2320 = vmatpush1.bf16.msra.mxu0 %v2310
    %2321 = vmatprep.subr.bf16.mxu0 0
    %2322 = vmatpush1.bf16.msra.mxu0 %v2309
    %2323 = vmatprep.subr.bf16.mxu0 0
    %2324 = vmatpush1.bf16.msra.mxu0 %v2308
    %2325 = vmatprep.subr.bf16.mxu0 0
    %2326 = vmatpush1.bf16.msra.mxu0 %v2307
    %2327 = vmatprep.subr.bf16.mxu0 0
    %2328 = vmatpush1.bf16.msra.mxu0 %v2306
    %2329 = vmatprep.subr.bf16.mxu0 0
    %2330 = vmatpush1.bf16.msra.mxu0 %v2305
    %2331 = vmatprep.subr.bf16.mxu0 0
    %2332 = vmatpush1.bf16.msra.mxu0 %v2304
    %2333 = vmatprep.subr.bf16.mxu0 0
    %2334 = vmatpush1.bf16.msra.mxu0 %v2303
    %2335 = vmatprep.subr.bf16.mxu0 0
    %2336 = vmatpush2.bf16.msra.mxu0 0
    %2337 = vmatprep.subr.bf16.mxu0 0
    %2338 = vmatpush2.bf16.msra.mxu0 0
    %2339 = vmatprep.subr.bf16.mxu0 0
    %2340 = vmatpush2.bf16.msra.mxu0 0
    %2341 = vmatprep.subr.bf16.mxu0 0
    %2342 = vmatpush2.bf16.msra.mxu0 0
    %2343 = vmatprep.subr.bf16.mxu0 0
    %2344 = vmatpush2.bf16.msra.mxu0 0
    %2345 = vmatprep.subr.bf16.mxu0 0
    %2346 = vmatpush2.bf16.msra.mxu0 0
    %2347 = vmatprep.subr.bf16.mxu0 0
    %2348 = vmatpush2.bf16.msra.mxu0 0
    %2349 = vmatprep.subr.bf16.mxu0 0
    %2350 = vmatpush2.bf16.msra.mxu0 0
    %2351 = vmatprep.mubr.bf16.mxu0 0
    %2352 = vmatmul.mubr.bf16.gmra.mxu0 %v1081
    %v2353 = vpop.f32.mrf.mxu0
    %v2354 = vadd.f32 0.0, %v2353
    %v2355 = vpop.f32.mrf.mxu0
    %v2356 = vpop.f32.mrf.mxu0
    %v2357 = vadd.f32 0.0, %v2356
    %v2358 = vpop.f32.mrf.mxu0
    %2359 = vmatprep.mubr.bf16.mxu0 0
    %2360 = vmatmul.mubr.bf16.gmra.mxu0 %v1082
    %v2361 = vpop.f32.mrf.mxu0
    %v2362 = vadd.f32 0.0, %v2361
    %v2363 = vpop.f32.mrf.mxu0
    %v2364 = vpop.f32.mrf.mxu0
    %v2365 = vadd.f32 0.0, %v2364
    %v2366 = vpop.f32.mrf.mxu0
    %2367 = vdwg.mxu0
    %v2368 = vadd.f32 %v2251, %v2354
    %v2369 = vadd.f32 %v2252, %v2357
    %v2370 = vadd.f32 %v2253, %v2362
    %v2371 = vadd.f32 %v2254, %v2365
    %v2372 = vld [vmem:[#allocation10 + $0x2c0] sm:$0xf]
    %v2373 = vld [vmem:[#allocation10 + $0x2c4] sm:$0xf]
    %v2374 = vld [vmem:[#allocation10 + $0x2c8] sm:$0xf]
    %v2375 = vld [vmem:[#allocation10 + $0x2cc] sm:$0xf]
    %v2376 = vld [vmem:[#allocation10 + $0x2d0] sm:$0xf]
    %v2377 = vld [vmem:[#allocation10 + $0x2d4] sm:$0xf]
    %v2378 = vld [vmem:[#allocation10 + $0x2d8] sm:$0xf]
    %v2379 = vld [vmem:[#allocation10 + $0x2dc] sm:$0xf]
    %v2380 = vld [vmem:[#allocation10 + $0x2e0] sm:$0xf]
    %v2381 = vld [vmem:[#allocation10 + $0x2e4] sm:$0xf]
    %v2382 = vld [vmem:[#allocation10 + $0x2e8] sm:$0xf]
    %v2383 = vld [vmem:[#allocation10 + $0x2ec] sm:$0xf]
    %v2384 = vld [vmem:[#allocation10 + $0x2f0] sm:$0xf]
    %v2385 = vld [vmem:[#allocation10 + $0x2f4] sm:$0xf]
    %v2386 = vld [vmem:[#allocation10 + $0x2f8] sm:$0xf]
    %v2387 = vld [vmem:[#allocation10 + $0x2fc] sm:$0xf]
    %v2404 = vunpack.c.l.b16 %v2372
    %v2405 = vunpack.c.l.b16 %v2373
    %v2406 = vunpack.c.l.b16 %v2374
    %v2407 = vunpack.c.l.b16 %v2375
    %v2408 = vunpack.c.l.b16 %v2376
    %v2409 = vunpack.c.l.b16 %v2377
    %v2410 = vunpack.c.l.b16 %v2378
    %v2411 = vunpack.c.l.b16 %v2379
    %v2412 = vunpack.c.l.b16 %v2380
    %v2413 = vunpack.c.l.b16 %v2381
    %v2414 = vunpack.c.l.b16 %v2382
    %v2415 = vunpack.c.l.b16 %v2383
    %v2416 = vunpack.c.l.b16 %v2384
    %v2417 = vunpack.c.l.b16 %v2385
    %v2418 = vunpack.c.l.b16 %v2386
    %v2419 = vunpack.c.l.b16 %v2387
    %v2420 = vpack.c.b16 %v2405, %v2404
    %v2421 = vpack.c.b16 %v2407, %v2406
    %v2422 = vpack.c.b16 %v2409, %v2408
    %v2423 = vpack.c.b16 %v2411, %v2410
    %v2424 = vpack.c.b16 %v2413, %v2412
    %v2425 = vpack.c.b16 %v2415, %v2414
    %v2426 = vpack.c.b16 %v2417, %v2416
    %v2427 = vpack.c.b16 %v2419, %v2418
    %2436 = vmatprep.subr.bf16.mxu0 0
    %2437 = vmatpush1.bf16.msra.mxu0 %v2427
    %2438 = vmatprep.subr.bf16.mxu0 0
    %2439 = vmatpush1.bf16.msra.mxu0 %v2426
    %2440 = vmatprep.subr.bf16.mxu0 0
    %2441 = vmatpush1.bf16.msra.mxu0 %v2425
    %2442 = vmatprep.subr.bf16.mxu0 0
    %2443 = vmatpush1.bf16.msra.mxu0 %v2424
    %2444 = vmatprep.subr.bf16.mxu0 0
    %2445 = vmatpush1.bf16.msra.mxu0 %v2423
    %2446 = vmatprep.subr.bf16.mxu0 0
    %2447 = vmatpush1.bf16.msra.mxu0 %v2422
    %2448 = vmatprep.subr.bf16.mxu0 0
    %2449 = vmatpush1.bf16.msra.mxu0 %v2421
    %2450 = vmatprep.subr.bf16.mxu0 0
    %2451 = vmatpush1.bf16.msra.mxu0 %v2420
    %2452 = vmatprep.subr.bf16.mxu0 0
    %2453 = vmatpush2.bf16.msra.mxu0 0
    %2454 = vmatprep.subr.bf16.mxu0 0
    %2455 = vmatpush2.bf16.msra.mxu0 0
    %2456 = vmatprep.subr.bf16.mxu0 0
    %2457 = vmatpush2.bf16.msra.mxu0 0
    %2458 = vmatprep.subr.bf16.mxu0 0
    %2459 = vmatpush2.bf16.msra.mxu0 0
    %2460 = vmatprep.subr.bf16.mxu0 0
    %2461 = vmatpush2.bf16.msra.mxu0 0
    %2462 = vmatprep.subr.bf16.mxu0 0
    %2463 = vmatpush2.bf16.msra.mxu0 0
    %2464 = vmatprep.subr.bf16.mxu0 0
    %2465 = vmatpush2.bf16.msra.mxu0 0
    %2466 = vmatprep.subr.bf16.mxu0 0
    %2467 = vmatpush2.bf16.msra.mxu0 0
    %2468 = vmatprep.mubr.bf16.mxu0 0
    %2469 = vmatmul.mubr.bf16.gmra.mxu0 %v1083
    %v2470 = vpop.f32.mrf.mxu0
    %v2471 = vadd.f32 0.0, %v2470
    %v2472 = vpop.f32.mrf.mxu0
    %v2473 = vpop.f32.mrf.mxu0
    %v2474 = vadd.f32 0.0, %v2473
    %v2475 = vpop.f32.mrf.mxu0
    %2476 = vmatprep.mubr.bf16.mxu0 0
    %2477 = vmatmul.mubr.bf16.gmra.mxu0 %v1084
    %v2478 = vpop.f32.mrf.mxu0
    %v2479 = vadd.f32 0.0, %v2478
    %v2480 = vpop.f32.mrf.mxu0
    %v2481 = vpop.f32.mrf.mxu0
    %v2482 = vadd.f32 0.0, %v2481
    %v2483 = vpop.f32.mrf.mxu0
    %2484 = vdwg.mxu0
    %v2485 = vadd.f32 %v2368, %v2471
    %v2486 = vadd.f32 %v2369, %v2474
    %v2487 = vadd.f32 %v2370, %v2479
    %v2488 = vadd.f32 %v2371, %v2482
    %v2489 = vld [vmem:[#allocation10 + $0x300] sm:$0xf]
    %v2490 = vld [vmem:[#allocation10 + $0x304] sm:$0xf]
    %v2491 = vld [vmem:[#allocation10 + $0x308] sm:$0xf]
    %v2492 = vld [vmem:[#allocation10 + $0x30c] sm:$0xf]
    %v2493 = vld [vmem:[#allocation10 + $0x310] sm:$0xf]
    %v2494 = vld [vmem:[#allocation10 + $0x314] sm:$0xf]
    %v2495 = vld [vmem:[#allocation10 + $0x318] sm:$0xf]
    %v2496 = vld [vmem:[#allocation10 + $0x31c] sm:$0xf]
    %v2497 = vld [vmem:[#allocation10 + $0x320] sm:$0xf]
    %v2498 = vld [vmem:[#allocation10 + $0x324] sm:$0xf]
    %v2499 = vld [vmem:[#allocation10 + $0x328] sm:$0xf]
    %v2500 = vld [vmem:[#allocation10 + $0x32c] sm:$0xf]
    %v2501 = vld [vmem:[#allocation10 + $0x330] sm:$0xf]
    %v2502 = vld [vmem:[#allocation10 + $0x334] sm:$0xf]
    %v2503 = vld [vmem:[#allocation10 + $0x338] sm:$0xf]
    %v2504 = vld [vmem:[#allocation10 + $0x33c] sm:$0xf]
    %v2521 = vunpack.c.l.b16 %v2489
    %v2522 = vunpack.c.l.b16 %v2490
    %v2523 = vunpack.c.l.b16 %v2491
    %v2524 = vunpack.c.l.b16 %v2492
    %v2525 = vunpack.c.l.b16 %v2493
    %v2526 = vunpack.c.l.b16 %v2494
    %v2527 = vunpack.c.l.b16 %v2495
    %v2528 = vunpack.c.l.b16 %v2496
    %v2529 = vunpack.c.l.b16 %v2497
    %v2530 = vunpack.c.l.b16 %v2498
    %v2531 = vunpack.c.l.b16 %v2499
    %v2532 = vunpack.c.l.b16 %v2500
    %v2533 = vunpack.c.l.b16 %v2501
    %v2534 = vunpack.c.l.b16 %v2502
    %v2535 = vunpack.c.l.b16 %v2503
    %v2536 = vunpack.c.l.b16 %v2504
    %v2537 = vpack.c.b16 %v2522, %v2521
    %v2538 = vpack.c.b16 %v2524, %v2523
    %v2539 = vpack.c.b16 %v2526, %v2525
    %v2540 = vpack.c.b16 %v2528, %v2527
    %v2541 = vpack.c.b16 %v2530, %v2529
    %v2542 = vpack.c.b16 %v2532, %v2531
    %v2543 = vpack.c.b16 %v2534, %v2533
    %v2544 = vpack.c.b16 %v2536, %v2535
    %2553 = vmatprep.subr.bf16.mxu0 0
    %2554 = vmatpush1.bf16.msra.mxu0 %v2544
    %2555 = vmatprep.subr.bf16.mxu0 0
    %2556 = vmatpush1.bf16.msra.mxu0 %v2543
    %2557 = vmatprep.subr.bf16.mxu0 0
    %2558 = vmatpush1.bf16.msra.mxu0 %v2542
    %2559 = vmatprep.subr.bf16.mxu0 0
    %2560 = vmatpush1.bf16.msra.mxu0 %v2541
    %2561 = vmatprep.subr.bf16.mxu0 0
    %2562 = vmatpush1.bf16.msra.mxu0 %v2540
    %2563 = vmatprep.subr.bf16.mxu0 0
    %2564 = vmatpush1.bf16.msra.mxu0 %v2539
    %2565 = vmatprep.subr.bf16.mxu0 0
    %2566 = vmatpush1.bf16.msra.mxu0 %v2538
    %2567 = vmatprep.subr.bf16.mxu0 0
    %2568 = vmatpush1.bf16.msra.mxu0 %v2537
    %2569 = vmatprep.subr.bf16.mxu0 0
    %2570 = vmatpush2.bf16.msra.mxu0 0
    %2571 = vmatprep.subr.bf16.mxu0 0
    %2572 = vmatpush2.bf16.msra.mxu0 0
    %2573 = vmatprep.subr.bf16.mxu0 0
    %2574 = vmatpush2.bf16.msra.mxu0 0
    %2575 = vmatprep.subr.bf16.mxu0 0
    %2576 = vmatpush2.bf16.msra.mxu0 0
    %2577 = vmatprep.subr.bf16.mxu0 0
    %2578 = vmatpush2.bf16.msra.mxu0 0
    %2579 = vmatprep.subr.bf16.mxu0 0
    %2580 = vmatpush2.bf16.msra.mxu0 0
    %2581 = vmatprep.subr.bf16.mxu0 0
    %2582 = vmatpush2.bf16.msra.mxu0 0
    %2583 = vmatprep.subr.bf16.mxu0 0
    %2584 = vmatpush2.bf16.msra.mxu0 0
    %2585 = vmatprep.mubr.bf16.mxu0 0
    %2586 = vmatmul.mubr.bf16.gmra.mxu0 %v1085
    %v2587 = vpop.f32.mrf.mxu0
    %v2588 = vadd.f32 0.0, %v2587
    %v2589 = vpop.f32.mrf.mxu0
    %v2590 = vpop.f32.mrf.mxu0
    %v2591 = vadd.f32 0.0, %v2590
    %v2592 = vpop.f32.mrf.mxu0
    %2593 = vmatprep.mubr.bf16.mxu0 0
    %2594 = vmatmul.mubr.bf16.gmra.mxu0 %v1086
    %v2595 = vpop.f32.mrf.mxu0
    %v2596 = vadd.f32 0.0, %v2595
    %v2597 = vpop.f32.mrf.mxu0
    %v2598 = vpop.f32.mrf.mxu0
    %v2599 = vadd.f32 0.0, %v2598
    %v2600 = vpop.f32.mrf.mxu0
    %2601 = vdwg.mxu0
    %v2602 = vadd.f32 %v2485, %v2588
    %v2603 = vadd.f32 %v2486, %v2591
    %v2604 = vadd.f32 %v2487, %v2596
    %v2605 = vadd.f32 %v2488, %v2599
    %v2606 = vld [vmem:[#allocation10 + $0x340] sm:$0xf]
    %v2607 = vld [vmem:[#allocation10 + $0x344] sm:$0xf]
    %v2608 = vld [vmem:[#allocation10 + $0x348] sm:$0xf]
    %v2609 = vld [vmem:[#allocation10 + $0x34c] sm:$0xf]
    %v2610 = vld [vmem:[#allocation10 + $0x350] sm:$0xf]
    %v2611 = vld [vmem:[#allocation10 + $0x354] sm:$0xf]
    %v2612 = vld [vmem:[#allocation10 + $0x358] sm:$0xf]
    %v2613 = vld [vmem:[#allocation10 + $0x35c] sm:$0xf]
    %v2614 = vld [vmem:[#allocation10 + $0x360] sm:$0xf]
    %v2615 = vld [vmem:[#allocation10 + $0x364] sm:$0xf]
    %v2616 = vld [vmem:[#allocation10 + $0x368] sm:$0xf]
    %v2617 = vld [vmem:[#allocation10 + $0x36c] sm:$0xf]
    %v2618 = vld [vmem:[#allocation10 + $0x370] sm:$0xf]
    %v2619 = vld [vmem:[#allocation10 + $0x374] sm:$0xf]
    %v2620 = vld [vmem:[#allocation10 + $0x378] sm:$0xf]
    %v2621 = vld [vmem:[#allocation10 + $0x37c] sm:$0xf]
    %v2638 = vunpack.c.l.b16 %v2606
    %v2639 = vunpack.c.l.b16 %v2607
    %v2640 = vunpack.c.l.b16 %v2608
    %v2641 = vunpack.c.l.b16 %v2609
    %v2642 = vunpack.c.l.b16 %v2610
    %v2643 = vunpack.c.l.b16 %v2611
    %v2644 = vunpack.c.l.b16 %v2612
    %v2645 = vunpack.c.l.b16 %v2613
    %v2646 = vunpack.c.l.b16 %v2614
    %v2647 = vunpack.c.l.b16 %v2615
    %v2648 = vunpack.c.l.b16 %v2616
    %v2649 = vunpack.c.l.b16 %v2617
    %v2650 = vunpack.c.l.b16 %v2618
    %v2651 = vunpack.c.l.b16 %v2619
    %v2652 = vunpack.c.l.b16 %v2620
    %v2653 = vunpack.c.l.b16 %v2621
    %v2654 = vpack.c.b16 %v2639, %v2638
    %v2655 = vpack.c.b16 %v2641, %v2640
    %v2656 = vpack.c.b16 %v2643, %v2642
    %v2657 = vpack.c.b16 %v2645, %v2644
    %v2658 = vpack.c.b16 %v2647, %v2646
    %v2659 = vpack.c.b16 %v2649, %v2648
    %v2660 = vpack.c.b16 %v2651, %v2650
    %v2661 = vpack.c.b16 %v2653, %v2652
    %2670 = vmatprep.subr.bf16.mxu0 0
    %2671 = vmatpush1.bf16.msra.mxu0 %v2661
    %2672 = vmatprep.subr.bf16.mxu0 0
    %2673 = vmatpush1.bf16.msra.mxu0 %v2660
    %2674 = vmatprep.subr.bf16.mxu0 0
    %2675 = vmatpush1.bf16.msra.mxu0 %v2659
    %2676 = vmatprep.subr.bf16.mxu0 0
    %2677 = vmatpush1.bf16.msra.mxu0 %v2658
    %2678 = vmatprep.subr.bf16.mxu0 0
    %2679 = vmatpush1.bf16.msra.mxu0 %v2657
    %2680 = vmatprep.subr.bf16.mxu0 0
    %2681 = vmatpush1.bf16.msra.mxu0 %v2656
    %2682 = vmatprep.subr.bf16.mxu0 0
    %2683 = vmatpush1.bf16.msra.mxu0 %v2655
    %2684 = vmatprep.subr.bf16.mxu0 0
    %2685 = vmatpush1.bf16.msra.mxu0 %v2654
    %2686 = vmatprep.subr.bf16.mxu0 0
    %2687 = vmatpush2.bf16.msra.mxu0 0
    %2688 = vmatprep.subr.bf16.mxu0 0
    %2689 = vmatpush2.bf16.msra.mxu0 0
    %2690 = vmatprep.subr.bf16.mxu0 0
    %2691 = vmatpush2.bf16.msra.mxu0 0
    %2692 = vmatprep.subr.bf16.mxu0 0
    %2693 = vmatpush2.bf16.msra.mxu0 0
    %2694 = vmatprep.subr.bf16.mxu0 0
    %2695 = vmatpush2.bf16.msra.mxu0 0
    %2696 = vmatprep.subr.bf16.mxu0 0
    %2697 = vmatpush2.bf16.msra.mxu0 0
    %2698 = vmatprep.subr.bf16.mxu0 0
    %2699 = vmatpush2.bf16.msra.mxu0 0
    %2700 = vmatprep.subr.bf16.mxu0 0
    %2701 = vmatpush2.bf16.msra.mxu0 0
    %2702 = vmatprep.mubr.bf16.mxu0 0
    %2703 = vmatmul.mubr.bf16.gmra.mxu0 %v1087
    %v2704 = vpop.f32.mrf.mxu0
    %v2705 = vadd.f32 0.0, %v2704
    %v2706 = vpop.f32.mrf.mxu0
    %v2707 = vpop.f32.mrf.mxu0
    %v2708 = vadd.f32 0.0, %v2707
    %v2709 = vpop.f32.mrf.mxu0
    %2710 = vmatprep.mubr.bf16.mxu0 0
    %2711 = vmatmul.mubr.bf16.gmra.mxu0 %v1088
    %v2712 = vpop.f32.mrf.mxu0
    %v2713 = vadd.f32 0.0, %v2712
    %v2714 = vpop.f32.mrf.mxu0
    %v2715 = vpop.f32.mrf.mxu0
    %v2716 = vadd.f32 0.0, %v2715
    %v2717 = vpop.f32.mrf.mxu0
    %2718 = vdwg.mxu0
    %v2719 = vadd.f32 %v2602, %v2705
    %v2720 = vadd.f32 %v2603, %v2708
    %v2721 = vadd.f32 %v2604, %v2713
    %v2722 = vadd.f32 %v2605, %v2716
    %v2723 = vld [vmem:[#allocation10 + $0x380] sm:$0xf]
    %v2724 = vld [vmem:[#allocation10 + $0x384] sm:$0xf]
    %v2725 = vld [vmem:[#allocation10 + $0x388] sm:$0xf]
    %v2726 = vld [vmem:[#allocation10 + $0x38c] sm:$0xf]
    %v2727 = vld [vmem:[#allocation10 + $0x390] sm:$0xf]
    %v2728 = vld [vmem:[#allocation10 + $0x394] sm:$0xf]
    %v2729 = vld [vmem:[#allocation10 + $0x398] sm:$0xf]
    %v2730 = vld [vmem:[#allocation10 + $0x39c] sm:$0xf]
    %v2731 = vld [vmem:[#allocation10 + $0x3a0] sm:$0xf]
    %v2732 = vld [vmem:[#allocation10 + $0x3a4] sm:$0xf]
    %v2733 = vld [vmem:[#allocation10 + $0x3a8] sm:$0xf]
    %v2734 = vld [vmem:[#allocation10 + $0x3ac] sm:$0xf]
    %v2735 = vld [vmem:[#allocation10 + $0x3b0] sm:$0xf]
    %v2736 = vld [vmem:[#allocation10 + $0x3b4] sm:$0xf]
    %v2737 = vld [vmem:[#allocation10 + $0x3b8] sm:$0xf]
    %v2738 = vld [vmem:[#allocation10 + $0x3bc] sm:$0xf]
    %v2755 = vunpack.c.l.b16 %v2723
    %v2756 = vunpack.c.l.b16 %v2724
    %v2757 = vunpack.c.l.b16 %v2725
    %v2758 = vunpack.c.l.b16 %v2726
    %v2759 = vunpack.c.l.b16 %v2727
    %v2760 = vunpack.c.l.b16 %v2728
    %v2761 = vunpack.c.l.b16 %v2729
    %v2762 = vunpack.c.l.b16 %v2730
    %v2763 = vunpack.c.l.b16 %v2731
    %v2764 = vunpack.c.l.b16 %v2732
    %v2765 = vunpack.c.l.b16 %v2733
    %v2766 = vunpack.c.l.b16 %v2734
    %v2767 = vunpack.c.l.b16 %v2735
    %v2768 = vunpack.c.l.b16 %v2736
    %v2769 = vunpack.c.l.b16 %v2737
    %v2770 = vunpack.c.l.b16 %v2738
    %v2771 = vpack.c.b16 %v2756, %v2755
    %v2772 = vpack.c.b16 %v2758, %v2757
    %v2773 = vpack.c.b16 %v2760, %v2759
    %v2774 = vpack.c.b16 %v2762, %v2761
    %v2775 = vpack.c.b16 %v2764, %v2763
    %v2776 = vpack.c.b16 %v2766, %v2765
    %v2777 = vpack.c.b16 %v2768, %v2767
    %v2778 = vpack.c.b16 %v2770, %v2769
    %2787 = vmatprep.subr.bf16.mxu0 0
    %2788 = vmatpush1.bf16.msra.mxu0 %v2778
    %2789 = vmatprep.subr.bf16.mxu0 0
    %2790 = vmatpush1.bf16.msra.mxu0 %v2777
    %2791 = vmatprep.subr.bf16.mxu0 0
    %2792 = vmatpush1.bf16.msra.mxu0 %v2776
    %2793 = vmatprep.subr.bf16.mxu0 0
    %2794 = vmatpush1.bf16.msra.mxu0 %v2775
    %2795 = vmatprep.subr.bf16.mxu0 0
    %2796 = vmatpush1.bf16.msra.mxu0 %v2774
    %2797 = vmatprep.subr.bf16.mxu0 0
    %2798 = vmatpush1.bf16.msra.mxu0 %v2773
    %2799 = vmatprep.subr.bf16.mxu0 0
    %2800 = vmatpush1.bf16.msra.mxu0 %v2772
    %2801 = vmatprep.subr.bf16.mxu0 0
    %2802 = vmatpush1.bf16.msra.mxu0 %v2771
    %2803 = vmatprep.subr.bf16.mxu0 0
    %2804 = vmatpush2.bf16.msra.mxu0 0
    %2805 = vmatprep.subr.bf16.mxu0 0
    %2806 = vmatpush2.bf16.msra.mxu0 0
    %2807 = vmatprep.subr.bf16.mxu0 0
    %2808 = vmatpush2.bf16.msra.mxu0 0
    %2809 = vmatprep.subr.bf16.mxu0 0
    %2810 = vmatpush2.bf16.msra.mxu0 0
    %2811 = vmatprep.subr.bf16.mxu0 0
    %2812 = vmatpush2.bf16.msra.mxu0 0
    %2813 = vmatprep.subr.bf16.mxu0 0
    %2814 = vmatpush2.bf16.msra.mxu0 0
    %2815 = vmatprep.subr.bf16.mxu0 0
    %2816 = vmatpush2.bf16.msra.mxu0 0
    %2817 = vmatprep.subr.bf16.mxu0 0
    %2818 = vmatpush2.bf16.msra.mxu0 0
    %2819 = vmatprep.mubr.bf16.mxu0 0
    %2820 = vmatmul.mubr.bf16.gmra.mxu0 %v1089
    %v2821 = vpop.f32.mrf.mxu0
    %v2822 = vadd.f32 0.0, %v2821
    %v2823 = vpop.f32.mrf.mxu0
    %v2824 = vpop.f32.mrf.mxu0
    %v2825 = vadd.f32 0.0, %v2824
    %v2826 = vpop.f32.mrf.mxu0
    %2827 = vmatprep.mubr.bf16.mxu0 0
    %2828 = vmatmul.mubr.bf16.gmra.mxu0 %v1090
    %v2829 = vpop.f32.mrf.mxu0
    %v2830 = vadd.f32 0.0, %v2829
    %v2831 = vpop.f32.mrf.mxu0
    %v2832 = vpop.f32.mrf.mxu0
    %v2833 = vadd.f32 0.0, %v2832
    %v2834 = vpop.f32.mrf.mxu0
    %2835 = vdwg.mxu0
    %v2836 = vadd.f32 %v2719, %v2822
    %v2837 = vadd.f32 %v2720, %v2825
    %v2838 = vadd.f32 %v2721, %v2830
    %v2839 = vadd.f32 %v2722, %v2833
    %v2840 = vld [vmem:[#allocation10 + $0x3c0] sm:$0xf]
    %v2841 = vld [vmem:[#allocation10 + $0x3c4] sm:$0xf]
    %v2842 = vld [vmem:[#allocation10 + $0x3c8] sm:$0xf]
    %v2843 = vld [vmem:[#allocation10 + $0x3cc] sm:$0xf]
    %v2844 = vld [vmem:[#allocation10 + $0x3d0] sm:$0xf]
    %v2845 = vld [vmem:[#allocation10 + $0x3d4] sm:$0xf]
    %v2846 = vld [vmem:[#allocation10 + $0x3d8] sm:$0xf]
    %v2847 = vld [vmem:[#allocation10 + $0x3dc] sm:$0xf]
    %v2848 = vld [vmem:[#allocation10 + $0x3e0] sm:$0xf]
    %v2849 = vld [vmem:[#allocation10 + $0x3e4] sm:$0xf]
    %v2850 = vld [vmem:[#allocation10 + $0x3e8] sm:$0xf]
    %v2851 = vld [vmem:[#allocation10 + $0x3ec] sm:$0xf]
    %v2852 = vld [vmem:[#allocation10 + $0x3f0] sm:$0xf]
    %v2853 = vld [vmem:[#allocation10 + $0x3f4] sm:$0xf]
    %v2854 = vld [vmem:[#allocation10 + $0x3f8] sm:$0xf]
    %v2855 = vld [vmem:[#allocation10 + $0x3fc] sm:$0xf]
    %v2872 = vunpack.c.l.b16 %v2840
    %v2873 = vunpack.c.l.b16 %v2841
    %v2874 = vunpack.c.l.b16 %v2842
    %v2875 = vunpack.c.l.b16 %v2843
    %v2876 = vunpack.c.l.b16 %v2844
    %v2877 = vunpack.c.l.b16 %v2845
    %v2878 = vunpack.c.l.b16 %v2846
    %v2879 = vunpack.c.l.b16 %v2847
    %v2880 = vunpack.c.l.b16 %v2848
    %v2881 = vunpack.c.l.b16 %v2849
    %v2882 = vunpack.c.l.b16 %v2850
    %v2883 = vunpack.c.l.b16 %v2851
    %v2884 = vunpack.c.l.b16 %v2852
    %v2885 = vunpack.c.l.b16 %v2853
    %v2886 = vunpack.c.l.b16 %v2854
    %v2887 = vunpack.c.l.b16 %v2855
    %v2888 = vpack.c.b16 %v2873, %v2872
    %v2889 = vpack.c.b16 %v2875, %v2874
    %v2890 = vpack.c.b16 %v2877, %v2876
    %v2891 = vpack.c.b16 %v2879, %v2878
    %v2892 = vpack.c.b16 %v2881, %v2880
    %v2893 = vpack.c.b16 %v2883, %v2882
    %v2894 = vpack.c.b16 %v2885, %v2884
    %v2895 = vpack.c.b16 %v2887, %v2886
    %2904 = vmatprep.subr.bf16.mxu0 0
    %2905 = vmatpush1.bf16.msra.mxu0 %v2895
    %2906 = vmatprep.subr.bf16.mxu0 0
    %2907 = vmatpush1.bf16.msra.mxu0 %v2894
    %2908 = vmatprep.subr.bf16.mxu0 0
    %2909 = vmatpush1.bf16.msra.mxu0 %v2893
    %2910 = vmatprep.subr.bf16.mxu0 0
    %2911 = vmatpush1.bf16.msra.mxu0 %v2892
    %2912 = vmatprep.subr.bf16.mxu0 0
    %2913 = vmatpush1.bf16.msra.mxu0 %v2891
    %2914 = vmatprep.subr.bf16.mxu0 0
    %2915 = vmatpush1.bf16.msra.mxu0 %v2890
    %2916 = vmatprep.subr.bf16.mxu0 0
    %2917 = vmatpush1.bf16.msra.mxu0 %v2889
    %2918 = vmatprep.subr.bf16.mxu0 0
    %2919 = vmatpush1.bf16.msra.mxu0 %v2888
    %2920 = vmatprep.subr.bf16.mxu0 0
    %2921 = vmatpush2.bf16.msra.mxu0 0
    %2922 = vmatprep.subr.bf16.mxu0 0
    %2923 = vmatpush2.bf16.msra.mxu0 0
    %2924 = vmatprep.subr.bf16.mxu0 0
    %2925 = vmatpush2.bf16.msra.mxu0 0
    %2926 = vmatprep.subr.bf16.mxu0 0
    %2927 = vmatpush2.bf16.msra.mxu0 0
    %2928 = vmatprep.subr.bf16.mxu0 0
    %2929 = vmatpush2.bf16.msra.mxu0 0
    %2930 = vmatprep.subr.bf16.mxu0 0
    %2931 = vmatpush2.bf16.msra.mxu0 0
    %2932 = vmatprep.subr.bf16.mxu0 0
    %2933 = vmatpush2.bf16.msra.mxu0 0
    %2934 = vmatprep.subr.bf16.mxu0 0
    %2935 = vmatpush2.bf16.msra.mxu0 0
    %2936 = vmatprep.mubr.bf16.mxu0 0
    %2937 = vmatmul.mubr.bf16.gmra.mxu0 %v1091
    %v2938 = vpop.f32.mrf.mxu0
    %v2939 = vadd.f32 0.0, %v2938
    %v2940 = vpop.f32.mrf.mxu0
    %v2941 = vpop.f32.mrf.mxu0
    %v2942 = vadd.f32 0.0, %v2941
    %v2943 = vpop.f32.mrf.mxu0
    %2944 = vmatprep.mubr.bf16.mxu0 0
    %2945 = vmatmul.mubr.bf16.gmra.mxu0 %v1092
    %v2946 = vpop.f32.mrf.mxu0
    %v2947 = vadd.f32 0.0, %v2946
    %v2948 = vpop.f32.mrf.mxu0
    %v2949 = vpop.f32.mrf.mxu0
    %v2950 = vadd.f32 0.0, %v2949
    %v2951 = vpop.f32.mrf.mxu0
    %2952 = vdwg.mxu0
    %v2953 = vadd.f32 %v2836, %v2939
    %v2954 = vadd.f32 %v2837, %v2942
    %v2955 = vadd.f32 %v2838, %v2947
    %v2956 = vadd.f32 %v2839, %v2950
    %v2957 = vld [vmem:[%s5] sm:$0x1]
    %v2958 = vld [vmem:[%s5 + $0x1] sm:$0x1]
    %v2959 = vadd.f32 %v2953, %v2954
    %v2960 = vadd.f32 %v2959, %v2955
    %v2961 = vadd.f32 %v2960, %v2956
    %v2962 = vrot.slane %v2961, 4
    %v2963 = vadd.f32 %v2961, %v2962
    %v2964 = vrot.slane %v2963, 2
    %v2965 = vadd.f32 %v2963, %v2964
    %v2966 = vrot.slane %v2965, 1
    %v2967 = vadd.f32 %v2965, %v2966
    %v2968 = vrcp.pop 32.0
    %v2969 = vmul.f32 %v2967, %v2968
    %v2970 = vmul.f32 %v2953, %v2953
    %v2971 = vmul.f32 %v2954, %v2954
    %v2972 = vmul.f32 %v2955, %v2955
    %v2973 = vmul.f32 %v2956, %v2956
    %v2974 = vadd.f32 %v2970, %v2971
    %v2975 = vadd.f32 %v2974, %v2972
    %v2976 = vadd.f32 %v2975, %v2973
    %v2977 = vrot.slane %v2976, 4
    %v2978 = vadd.f32 %v2976, %v2977
    %v2979 = vrot.slane %v2978, 2
    %v2980 = vadd.f32 %v2978, %v2979
    %v2981 = vrot.slane %v2980, 1
    %v2982 = vadd.f32 %v2980, %v2981
    %v2983 = vmul.f32 %v2982, %v2968
    %v2984 = vmul.f32 %v2969, %v2969
    %v2985 = vsub.f32 %v2983, %v2984
    %v2986 = vmax.f32 %v2985, 0.0
    %v2987 = vadd.f32 %v2986, 1e-05
    %v2988 = vrsqrt.pop %v2987
    %v2989 = vmul.f32 %v2957, %v2988
    %v2990 = vmul.f32 %v2969, %v2989
    %v2991 = vsub.f32 %v2958, %v2990
    %v2992 = vlaneseq
    %v2993 = vshrl.u32 %v2992, 7
    %v2994 = vsub.s32 0, %v2993
    %v2995 = vrot.slane %v2989, %v2994
    %v2996 = vmul.f32 %v2953, %v2995
    %v2997 = vmul.f32 %v2954, %v2995
    %v2998 = vmul.f32 %v2955, %v2995
    %v2999 = vmul.f32 %v2956, %v2995
    %v3000 = vlaneseq
    %v3001 = vshrl.u32 %v3000, 7
    %v3002 = vsub.s32 0, %v3001
    %v3003 = vrot.slane %v2991, %v3002
    %v3004 = vadd.f32 %v2996, %v3003
    %v3005 = vadd.f32 %v2997, %v3003
    %v3006 = vadd.f32 %v2998, %v3003
    %v3007 = vadd.f32 %v2999, %v3003
    %v3008 = vmul.f32 %v3004, 0.01
    %v3009 = vmul.f32 %v3005, 0.01
    %v3010 = vmul.f32 %v3006, 0.01
    %v3011 = vmul.f32 %v3007, 0.01
    %v3012 = vmax.f32 %v3004, %v3008
    %v3013 = vmax.f32 %v3005, %v3009
    %v3014 = vmax.f32 %v3006, %v3010
    %v3015 = vmax.f32 %v3007, %v3011
    %3016 = vst [vmem:[#allocation16] sm:$0xff] %v3012
    %3017 = vst [vmem:[#allocation16 + $0x8] sm:$0xff] %v3013
    %3018 = vst [vmem:[#allocation16 + $0x10] sm:$0xff] %v3014
    %3019 = vst [vmem:[#allocation16 + $0x18] sm:$0xff] %v3015
    %v3020 = vld [vmem:[#allocation11] sm:$0xff]
    %v3021 = vld [vmem:[#allocation11 + $0x8] sm:$0xff]
    %v3022 = vld [vmem:[#allocation11 + $0x10] sm:$0xff]
    %v3023 = vld [vmem:[#allocation11 + $0x18] sm:$0xff]
    %v3024 = vmul.f32 %v3012, %v3020
    %v3025 = vmul.f32 %v3013, %v3021
    %v3026 = vmul.f32 %v3014, %v3022
    %v3027 = vmul.f32 %v3015, %v3023
    %v3028 = vld [vmem:[#allocation13] sm:$0xff]
    %vm3029 = vcmask 261120
    %v3031 = vsel %vm3029, %v3028, 0
    %3033 = vmatprep.subr.mxu0 0.0
    %3034 = vmatpush1.msra.mxu0 0.0
    %3035 = vmatprep.subr.mxu0 0.0
    %3036 = vmatpush1.msra.mxu0 0.0
    %3037 = vmatprep.subr.mxu0 0.0
    %3038 = vmatpush1.msra.mxu0 0.0
    %3039 = vmatprep.subr.mxu0 0.0
    %3040 = vmatpush1.msra.mxu0 0.0
    %3041 = vmatprep.subr.mxu0 0.0
    %3042 = vmatpush1.msra.mxu0 0.0
    %3043 = vmatprep.subr.mxu0 0.0
    %3044 = vmatpush1.msra.mxu0 0.0
    %3045 = vmatprep.subr.mxu0 0.0
    %3046 = vmatpush1.msra.mxu0 0.0
    %3047 = vmatprep.subr.mxu0 0.0
    %3048 = vmatpush1.msra.mxu0 0.0
    %3049 = vmatprep.subr.mxu0 0.0
    %3050 = vmatpush1.msra.mxu0 0.0
    %3051 = vmatprep.subr.mxu0 0.0
    %3052 = vmatpush1.msra.mxu0 0.0
    %3053 = vmatprep.subr.mxu0 0.0
    %3054 = vmatpush1.msra.mxu0 0.0
    %3055 = vmatprep.subr.mxu0 0.0
    %3056 = vmatpush1.msra.mxu0 0.0
    %3057 = vmatprep.subr.mxu0 0.0
    %3058 = vmatpush1.msra.mxu0 %v3027
    %3059 = vmatprep.subr.mxu0 0.0
    %3060 = vmatpush1.msra.mxu0 %v3026
    %3061 = vmatprep.subr.mxu0 0.0
    %3062 = vmatpush1.msra.mxu0 %v3025
    %3063 = vmatprep.subr.mxu0 0.0
    %3064 = vmatpush1.msra.mxu0 %v3024
    %3065 = vmatprep.subr.mxu0 0.0
    %3066 = vmatpush2.msra.mxu0 0.0
    %3067 = vmatprep.subr.mxu0 0.0
    %3068 = vmatpush2.msra.mxu0 0.0
    %3069 = vmatprep.subr.mxu0 0.0
    %3070 = vmatpush2.msra.mxu0 0.0
    %3071 = vmatprep.subr.mxu0 0.0
    %3072 = vmatpush2.msra.mxu0 0.0
    %3073 = vmatprep.subr.mxu0 0.0
    %3074 = vmatpush2.msra.mxu0 0.0
    %3075 = vmatprep.subr.mxu0 0.0
    %3076 = vmatpush2.msra.mxu0 0.0
    %3077 = vmatprep.subr.mxu0 0.0
    %3078 = vmatpush2.msra.mxu0 0.0
    %3079 = vmatprep.subr.mxu0 0.0
    %3080 = vmatpush2.msra.mxu0 0.0
    %3081 = vmatprep.subr.mxu0 0.0
    %3082 = vmatpush2.msra.mxu0 0.0
    %3083 = vmatprep.subr.mxu0 0.0
    %3084 = vmatpush2.msra.mxu0 0.0
    %3085 = vmatprep.subr.mxu0 0.0
    %3086 = vmatpush2.msra.mxu0 0.0
    %3087 = vmatprep.subr.mxu0 0.0
    %3088 = vmatpush2.msra.mxu0 0.0
    %3089 = vmatprep.subr.mxu0 0.0
    %3090 = vmatpush2.msra.mxu0 0.0
    %3091 = vmatprep.subr.mxu0 0.0
    %3092 = vmatpush2.msra.mxu0 0.0
    %3093 = vmatprep.subr.mxu0 0.0
    %3094 = vmatpush2.msra.mxu0 0.0
    %3095 = vmatprep.subr.mxu0 0.0
    %3096 = vmatpush2.msra.mxu0 0.0
    %3097 = vmatprep.mubr.f32.mxu0 0.0
    %3098 = vmatmul.mubr.f32.gmra.mxu0 %v3031
    %v3099 = vpop.f32.mrf.mxu0
    %v3100 = vadd.f32 0.0, %v3099
    %v3101 = vpop.f32.mrf.mxu0
    %3102 = vdwg.mxu0
    %3103 = vadd.xlane.f32.xlu0 %v3100
    %v3104 = vpop.xlane.xlu0 %3103
    %v3105 = vld [vmem:[#allocation14] sm:$0xff]
    %v3106 = vadd.f32 %v3104, %v3105
    %3107 = vst [vmem:[#allocation17] sm:$0xff] %v3106
    // Predicated region
    $region70: #{tpu_custom_call.1} parent=1 // pred_check
      _
    $region71: #{tpu_custom_call.1} parent=1 // pred_check_branch
      %3109 = sbr.rel (0) target = $region73
    $region72: #{tpu_custom_call.1} parent=1 // pred_region
      %s3111 = ssub.s32 512, 512
      %3112 = vsyncadd [#allocation4], %s3111
      %s3113 = sshll.u32 [#allocation16], 4
      %s3114 = int_to_ptr.vmem [resolvable:$true] %s3113
      %3119 = dma.vmem_to_hbm [thread:$0]  %s3114, 512, %s9, [#allocation4], 128, 128, 8
    $region73: #{tpu_custom_call.1} parent=1 // pred_fallthru
      _
    // Predicated region
    $region74: #{tpu_custom_call.1} parent=1 // pred_check
      _
    $region75: #{tpu_custom_call.1} parent=1 // pred_check_branch
      %3121 = sbr.rel (0) target = $region77
    $region76: #{tpu_custom_call.1} parent=1 // pred_region
      %s3123 = ssub.s32 128, 128
      %3124 = vsyncadd [#allocation18], %s3123
      %s3126 = sshll.u32 [#allocation17], 4
      %s3127 = int_to_ptr.vmem [resolvable:$true] %s3126
      %3129 = dma.vmem_to_hbm [thread:$0]  %s3127, 128, %s10, [#allocation18]
    $region77: #{tpu_custom_call.1} parent=1 // pred_fallthru
      _
    // Predicated region
    $region78: #{tpu_custom_call.1} parent=1 // pred_check
      _
    $region79: #{tpu_custom_call.1} parent=1 // pred_check_branch
      %3131 = sbr.rel (0) target = $region81
    $region80: #{tpu_custom_call.1} parent=1 // pred_region
      %3132 = dma.done [#allocation4], 512
    $region81: #{tpu_custom_call.1} parent=1 // pred_fallthru
      _
    // Predicated region
    $region82: #{tpu_custom_call.1} parent=1 // pred_check
      _
    $region83: #{tpu_custom_call.1} parent=1 // pred_check_branch
      %3134 = sbr.rel (0) target = $region85
    $region84: #{tpu_custom_call.1} parent=1 // pred_region
      %3135 = dma.done [#allocation18], 128
    $region85: #{tpu_custom_call.1} parent=1 // pred_fallthru
      _
    %3136 = vsyncpa [#allocation3], 1
    %3137 = vsyncpa [#allocation6], 1
    %3138 = vsyncpa [#allocation9], 1
    %3139 = vsyncpa [#allocation12], 1
    %3140 = vsyncpa [#allocation15], 1
    %3141 = vsyncpa [#allocation4], 1
    %3142 = vsyncpa [#allocation18], 1

</llo_original>
